<compile_context>
chip_gen: v7x
topology: tpu7x:2x2x1
jax: 0.10.0
libtpu: 0.0.40
codegen_flags: <defaults>
</compile_context>

<pallas_src>
import math

import jax
import jax.numpy as jnp
from jax.experimental import pallas as pl
from jax.experimental.pallas import tpu as pltpu


# ------------------------------- static config -------------------------------

ENT_NUM = 32
N_UNITS = (32, 32, 32)              # args.hidden_units = "32,32,32"
ATTR_DIM = IMG_DIM = CHAR_DIM = 32
IMG_FEAT = 64
CHAR_FEAT = 64
OCR_FEAT = 64
MODALTYPE_FEAT = 64
MODAL_NUM = 8                       # args.inner_view_num

# 7 nn.Linear modalities (gph handled by the GCN), stacked in this order:
LINEAR_MODALITIES = ("img", "att", "rel", "name", "char", "ocr", "modaltype")
LINEAR_FINS = (IMG_FEAT, 1000, 1000, 300, CHAR_FEAT, OCR_FEAT, MODALTYPE_FEAT)
LINEAR_KPADS = (64, 1024, 1024, 384, 64, 64, 64)    # only rel/att/name need K padding
LINEAR_FOUTS = (IMG_DIM, ATTR_DIM, ATTR_DIM, CHAR_DIM, CHAR_DIM, 100, 100)

FPAD = 128                          # every Fout (32 / 100) padded to one lane-aligned slot

# MultiModalFusion order: [img, att, rel, gph, name, char, ocr, modaltype]
FUSION_SRC = (0, 1, 2, None, 3, 4, 5, 6)        # index into the linear stack; None = gph
FUSION_FOUTS = (IMG_DIM, ATTR_DIM, ATTR_DIM, N_UNITS[2], CHAR_DIM, CHAR_DIM, 100, 100)
JOINT_DIM = sum(FUSION_FOUTS)       # 6*32 + 2*100 = 392


# ------------------- fused kernel: 7 Linears + GCN + fusion -------------------

def _fused_encoder_kernel(wsm_ref,                               # (8,)  f32  SMEM
                          x_ref, adj_ref,                        # (N,32) (N,N) f32
                          w1_ref, b1_ref, w2_ref, b2_ref,        # GCN params  f32
                          f_img, f_att, f_rel, f_name, f_char, f_ocr, f_mt,   # bf16
                          w_img, w_att, w_rel, w_name, w_char, w_ocr, w_mt,   # bf16
                          bias_ref,                              # (7,1,128) f32
                          emb_ref, gph_ref, ns_ref):             # outputs
    f32 = jnp.float32
    n = x_ref.shape[0]

    # ---- 7 modality Linears (unrolled; independent MXU work, bf16 operands,
    #      f32 accumulation).  Fout-padded columns of W / b are exactly zero, so
    #      padded output lanes are exactly zero (required by the L2 norm below). ----
    feat_refs = (f_img, f_att, f_rel, f_name, f_char, f_ocr, f_mt)
    wt_refs = (w_img, w_att, w_rel, w_name, w_char, w_ocr, w_mt)
    embs = []
    for m in range(len(feat_refs)):
        y = jnp.dot(feat_refs[m][...], wt_refs[m][...], preferred_element_type=f32)
        y = y + bias_ref[m]                     # (1,128) bias broadcast, f32
        emb_ref[m] = y                          # lane-dense unmasked 128-wide store
        embs.append(y)

    # ---- 2-layer Kipf GCN (eval mode: dropout = identity); tiny (32,32) matmuls
    #      kept fully f32 for accuracy, adj loaded once. ----
    adj = adj_ref[...]
    s1 = jnp.dot(x_ref[...], w1_ref[...], preferred_element_type=f32)
    h = jnp.maximum(jnp.dot(adj, s1, preferred_element_type=f32) + b1_ref[...], 0.0)
    s2 = jnp.dot(h, w2_ref[...], preferred_element_type=f32)
    gph = jnp.dot(adj, s2, preferred_element_type=f32) + b2_ref[...]
    gph_ref[...] = gph

    # ---- MultiModalFusion epilogue: weight[m] * F.normalize(emb, p=2, dim=1).
    #      gph is padded to 128 lanes in-register so EVERY slot is a full-width
    #      unmasked store (no slab zeroing, no vst.msk partial stores). ----
    gph_pad = jnp.concatenate(
        [gph, jnp.zeros((n, ns_ref.shape[-1] - gph.shape[-1]), f32)], axis=-1)
    for widx, src in enumerate(FUSION_SRC):
        e = gph_pad if src is None else embs[src]             # (N,128) f32, pad lanes == 0
        ss = jnp.sum(e * e, axis=-1, keepdims=True)
        # w / max(||e||, 1e-12) == w * rsqrt(max(||e||^2, 1e-24)); EUP rsqrt, no divide.
        scale = wsm_ref[widx] * jax.lax.rsqrt(jnp.maximum(ss, 1e-24))
        ns_ref[widx] = e * scale


def fused_encoder_pallas(wsm, x_ent, adj, gc1_w, gc1_b, gc2_w, gc2_b,
                         feats, lin_ws, lin_b_stack):
    n = x_ent.shape[0]
    nm_lin = len(feats)
    fpad = lin_b_stack.shape[-1]
    d_out = gc2_w.shape[1]

    def vmem_spec(a):
        nd = a.ndim
        return pl.BlockSpec(a.shape, lambda i, _nd=nd: (0,) * _nd)

    dense_inputs = (x_ent, adj, gc1_w, gc1_b, gc2_w, gc2_b,
                    *feats, *lin_ws, lin_b_stack)
    in_specs = ([pl.BlockSpec(memory_space=pltpu.MemorySpace.SMEM)]      # softmaxed weights
                + [vmem_spec(a) for a in dense_inputs])

    out_shape = (
        jax.ShapeDtypeStruct((nm_lin, n, fpad), jnp.float32),      # raw linear embs (padded)
        jax.ShapeDtypeStruct((n, d_out), jnp.float32),             # raw gph_emb
        jax.ShapeDtypeStruct((MODAL_NUM, n, fpad), jnp.float32),   # normalized+weighted slots
    )
    out_specs = (
        pl.BlockSpec((nm_lin, n, fpad), lambda i: (0, 0, 0)),
        pl.BlockSpec((n, d_out), lambda i: (0, 0)),
        pl.BlockSpec((MODAL_NUM, n, fpad), lambda i: (0, 0, 0)),
    )
    # Working set ~2 MiB; fits the scoped-VMEM default (16/32/32 MiB) on every generation,
    # so vmem_limit_bytes is left at its default (see TODO about realistic ENT_NUM).
    return pl.pallas_call(
        _fused_encoder_kernel,
        out_shape=out_shape,
        grid=(1,),
        in_specs=in_specs,
        out_specs=out_specs,
        compiler_params=pltpu.CompilerParams(
            dimension_semantics=("arbitrary",)),
    )(wsm, *dense_inputs)


# --------------------------- parameter construction --------------------------

def init_params(key):
    keys = jax.random.split(key, 10)

    def lin(k, fin, fout):
        # deterministic stand-in for nn.Linear's default init
        k1, k2 = jax.random.split(k)
        bound = 1.0 / math.sqrt(fin)
        w = jax.random.uniform(k1, (fin, fout), jnp.float32, -bound, bound)
        b = jax.random.uniform(k2, (fout,), jnp.float32, -bound, bound)
        return w, b

    params = {}
    # nn.Embedding(ent_num, input_dim), normal_ std = 1/sqrt(ent_num)
    params["entity_emb"] = (jax.random.normal(keys[0], (ENT_NUM, N_UNITS[0]), jnp.float32)
                            / math.sqrt(ENT_NUM))

    # 7 modality Linears: each weight zero-padded once (at init) to its own
    # (Kpad, 128) bf16 slab; the fin=64 modalities keep their natural K.
    lin_ws = []
    b_stack = jnp.zeros((len(LINEAR_MODALITIES), 1, FPAD), jnp.float32)
    for m, (fin, kpad, fout) in enumerate(zip(LINEAR_FINS, LINEAR_KPADS, LINEAR_FOUTS)):
        w, b = lin(keys[1 + m], fin, fout)
        wp = jnp.zeros((kpad, FPAD), jnp.float32).at[:fin, :fout].set(w)
        lin_ws.append(wp.astype(jnp.bfloat16))          # bf16 MXU operand
        b_stack = b_stack.at[m, 0, :fout].set(b)         # bias stays f32
    params["lin_w"] = tuple(lin_ws)
    params["lin_b_stack"] = b_stack

    # GCN weights (kept f32 — the (32,32) matmuls are free, and f32 keeps gph accurate)
    w1, b1 = lin(keys[8], N_UNITS[0], N_UNITS[1])
    w2, b2 = lin(keys[9], N_UNITS[1], N_UNITS[2])
    params["gc1_w"] = w1
    params["gc1_b"] = b1.reshape(1, -1)
    params["gc2_w"] = w2
    params["gc2_b"] = b2.reshape(1, -1)

    params["fusion_weight"] = jnp.ones((MODAL_NUM, 1), jnp.float32)  # MultiModalFusion.weight
    return params


# ---------------------------------- forward ----------------------------------

@jax.jit
def all_multimodal_encoder_forward(params, input_idx, adj, img_features,
                                   rel_features, att_features, name_features,
                                   char_features, ocr_features,
                                   modaltype_features):
    bf16 = jnp.bfloat16

    # features in LINEAR_MODALITIES order; only rel/att/name need K padding.
    feats_raw = (img_features, att_features, rel_features, name_features,
                 char_features, ocr_features, modaltype_features)

    def prep(f, kpad):
        fin = f.shape[1]
        if fin != kpad:
            f = jnp.pad(f, ((0, 0), (0, kpad - fin)))
        return f.astype(bf16)

    feats = tuple(prep(f, kpad) for f, kpad in zip(feats_raw, LINEAR_KPADS))

    # softmaxed modal weights (8 scalars) live in SMEM; entity-embedding lookup is glue.
    wsm = jax.nn.softmax(params["fusion_weight"], axis=0).reshape(-1)     # (8,) f32
    x_ent = params["entity_emb"][input_idx]                               # (N,32) f32

    emb_out, gph_emb, ns_out = fused_encoder_pallas(
        wsm, x_ent, adj.astype(jnp.float32),
        params["gc1_w"], params["gc1_b"], params["gc2_w"], params["gc2_b"],
        feats, params["lin_w"], params["lin_b_stack"])

    # packed joint concat (XLA glue over lane-aligned 128-wide normalized slots)
    joint_emb = jnp.concatenate(
        [ns_out[i, :, :FUSION_FOUTS[i]] for i in range(MODAL_NUM)], axis=1)

    # raw per-modality embeddings (slices of the 128-padded output stack)
    img_emb = emb_out[0, :, :LINEAR_FOUTS[0]]
    att_emb = emb_out[1, :, :LINEAR_FOUTS[1]]
    rel_emb = emb_out[2, :, :LINEAR_FOUTS[2]]
    name_emb = emb_out[3, :, :LINEAR_FOUTS[3]]
    char_emb = emb_out[4, :, :LINEAR_FOUTS[4]]
    ocr_emb = emb_out[5, :, :LINEAR_FOUTS[5]]
    modaltype_emb = emb_out[6, :, :LINEAR_FOUTS[6]]

    return (gph_emb, img_emb, rel_emb, att_emb, name_emb, char_emb,
            joint_emb, ocr_emb, modaltype_emb)


# ----------------------------- pure-JAX reference -----------------------------

def reference_forward(params, input_idx, adj, feats_linear_order):
    """Same precision pipeline as the kernel (bf16 linears / f32 GCN), pure XLA."""
    f32, bf16 = jnp.float32, jnp.bfloat16
    embs = []
    for m, fout in enumerate(LINEAR_FOUTS):
        fin = LINEAR_FINS[m]
        w = params["lin_w"][m][:fin, :fout]                      # bf16, zero-padding removed
        y = jnp.dot(feats_linear_order[m].astype(bf16), w, preferred_element_type=f32)
        embs.append(y + params["lin_b_stack"][m, 0, :fout])
    x = params["entity_emb"][input_idx]
    h = jnp.maximum(adj @ (x @ params["gc1_w"]) + params["gc1_b"], 0.0)
    gph = adj @ (h @ params["gc2_w"]) + params["gc2_b"]
    wsm = jax.nn.softmax(params["fusion_weight"], axis=0).reshape(-1)
    order = [embs[0], embs[1], embs[2], gph, embs[3], embs[4], embs[5], embs[6]]
    normed = [wsm[i] * e / jnp.maximum(jnp.linalg.norm(e, axis=1, keepdims=True), 1e-12)
              for i, e in enumerate(order)]
    return embs, gph, jnp.concatenate(normed, axis=1)


# ------------------------------------ main ------------------------------------

if __name__ == "__main__":
    key = jax.random.PRNGKey(0)
    pkey, dkey = jax.random.split(key)
    params = init_params(pkey)

    dkeys = jax.random.split(dkey, 8)
    input_idx = jnp.arange(ENT_NUM, dtype=jnp.int32)
    adj_raw = jax.random.uniform(dkeys[0], (ENT_NUM, ENT_NUM), jnp.float32)
    adj = (adj_raw + adj_raw.T) / 2.0 + jnp.eye(ENT_NUM, dtype=jnp.float32)
    adj = adj / jnp.sum(adj, axis=1, keepdims=True)   # row-normalized dense adjacency
    img_features = jax.random.normal(dkeys[1], (ENT_NUM, IMG_FEAT), jnp.float32)
    rel_features = jax.random.normal(dkeys[2], (ENT_NUM, 1000), jnp.float32)
    att_features = jax.random.normal(dkeys[3], (ENT_NUM, 1000), jnp.float32)
    name_features = jax.random.normal(dkeys[4], (ENT_NUM, 300), jnp.float32)
    char_features = jax.random.normal(dkeys[5], (ENT_NUM, CHAR_FEAT), jnp.float32)
    ocr_features = jax.random.normal(dkeys[6], (ENT_NUM, OCR_FEAT), jnp.float32)
    modaltype_features = jax.random.normal(dkeys[7], (ENT_NUM, MODALTYPE_FEAT), jnp.float32)

    outs = all_multimodal_encoder_forward(
        params, input_idx, adj, img_features, rel_features, att_features,
        name_features, char_features, ocr_features, modaltype_features)
    outs = jax.block_until_ready(outs)
    (gph_emb, img_emb, rel_emb, att_emb, name_emb, char_emb,
     joint_emb, ocr_emb, modaltype_emb) = outs

    # ---- shape sanity ----
    assert gph_emb.shape == (ENT_NUM, N_UNITS[2])
    assert img_emb.shape == (ENT_NUM, IMG_DIM) and rel_emb.shape == (ENT_NUM, ATTR_DIM)
    assert att_emb.shape == (ENT_NUM, ATTR_DIM) and name_emb.shape == (ENT_NUM, CHAR_DIM)
    assert char_emb.shape == (ENT_NUM, CHAR_DIM)
    assert ocr_emb.shape == (ENT_NUM, 100) and modaltype_emb.shape == (ENT_NUM, 100)
    assert joint_emb.shape == (ENT_NUM, JOINT_DIM)

    # ---- numeric sanity vs. a pure-JAX reference with the same precision pipeline ----
    feats_lin = (img_features, att_features, rel_features, name_features,
                 char_features, ocr_features, modaltype_features)
    embs_ref, gph_ref, joint_ref = reference_forward(params, input_idx, adj, feats_lin)
    pairs = ((img_emb, embs_ref[0]), (att_emb, embs_ref[1]), (rel_emb, embs_ref[2]),
             (name_emb, embs_ref[3]), (char_emb, embs_ref[4]), (ocr_emb, embs_ref[5]),
             (modaltype_emb, embs_ref[6]))
    for got, ref in pairs:
        assert bool(jnp.allclose(got, ref, atol=2e-2, rtol=2e-2))
    assert bool(jnp.allclose(gph_emb, gph_ref, atol=1e-2, rtol=1e-2))
    assert bool(jnp.allclose(joint_emb, joint_ref, atol=2e-2, rtol=2e-2))

    # every normalized+scaled block has row L2 norm == softmax weight (1/8) exactly
    img_block = joint_emb[:, :IMG_DIM]
    gph_block = joint_emb[:, 3 * 32:4 * 32]
    for blk in (img_block, gph_block):
        row_norm = jnp.sqrt(jnp.sum(blk * blk, axis=1))
        assert bool(jnp.allclose(row_norm, 1.0 / MODAL_NUM, atol=1e-3))
    assert bool(jnp.all(jnp.isfinite(joint_emb)))

    print("KERNEL_OK")
</pallas_src>

<mosaic_0001>
module attributes {stable_mosaic.version = 11 : i64} {
  func.func @_fused_encoder_kernel(%arg0: i32, %arg1: memref<8xf32, #tpu.memory_space<smem>>, %arg2: memref<32x32xf32, #tpu.memory_space<vmem>>, %arg3: memref<32x32xf32, #tpu.memory_space<vmem>>, %arg4: memref<32x32xf32, #tpu.memory_space<vmem>>, %arg5: memref<1x32xf32, #tpu.memory_space<vmem>>, %arg6: memref<32x32xf32, #tpu.memory_space<vmem>>, %arg7: memref<1x32xf32, #tpu.memory_space<vmem>>, %arg8: memref<32x64xbf16, #tpu.memory_space<vmem>>, %arg9: memref<32x1024xbf16, #tpu.memory_space<vmem>>, %arg10: memref<32x1024xbf16, #tpu.memory_space<vmem>>, %arg11: memref<32x384xbf16, #tpu.memory_space<vmem>>, %arg12: memref<32x64xbf16, #tpu.memory_space<vmem>>, %arg13: memref<32x64xbf16, #tpu.memory_space<vmem>>, %arg14: memref<32x64xbf16, #tpu.memory_space<vmem>>, %arg15: memref<64x128xbf16, #tpu.memory_space<vmem>>, %arg16: memref<1024x128xbf16, #tpu.memory_space<vmem>>, %arg17: memref<1024x128xbf16, #tpu.memory_space<vmem>>, %arg18: memref<384x128xbf16, #tpu.memory_space<vmem>>, %arg19: memref<64x128xbf16, #tpu.memory_space<vmem>>, %arg20: memref<64x128xbf16, #tpu.memory_space<vmem>>, %arg21: memref<64x128xbf16, #tpu.memory_space<vmem>>, %arg22: memref<7x1x128xf32, #tpu.memory_space<vmem>>, %arg23: memref<7x32x128xf32, #tpu.memory_space<vmem>>, %arg24: memref<32x32xf32, #tpu.memory_space<vmem>>, %arg25: memref<8x32x128xf32, #tpu.memory_space<vmem>>) attributes {dimension_semantics = [#tpu.dimension_semantics<arbitrary>], iteration_bounds = array<i64: 1>, scalar_prefetch = 0 : i64, scratch_operands = 0 : i64, tpu.core_type = #tpu.core_type<tc>, window_params = [{transform_indices = @transform_0, window_bounds = array<i64: 8>}, {pipeline_mode = #tpu.pipeline_mode<synchronous>, transform_indices = @transform_1, window_bounds = array<i64: 32, 32>}, {pipeline_mode = #tpu.pipeline_mode<synchronous>, transform_indices = @transform_2, window_bounds = array<i64: 32, 32>}, {pipeline_mode = #tpu.pipeline_mode<synchronous>, transform_indices = @transform_3, window_bounds = array<i64: 32, 32>}, {pipeline_mode = #tpu.pipeline_mode<synchronous>, transform_indices = @transform_4, window_bounds = array<i64: 1, 32>}, {pipeline_mode = #tpu.pipeline_mode<synchronous>, transform_indices = @transform_5, window_bounds = array<i64: 32, 32>}, {pipeline_mode = #tpu.pipeline_mode<synchronous>, transform_indices = @transform_6, window_bounds = array<i64: 1, 32>}, {pipeline_mode = #tpu.pipeline_mode<synchronous>, transform_indices = @transform_7, window_bounds = array<i64: 32, 64>}, {pipeline_mode = #tpu.pipeline_mode<synchronous>, transform_indices = @transform_8, window_bounds = array<i64: 32, 1024>}, {pipeline_mode = #tpu.pipeline_mode<synchronous>, transform_indices = @transform_9, window_bounds = array<i64: 32, 1024>}, {pipeline_mode = #tpu.pipeline_mode<synchronous>, transform_indices = @transform_10, window_bounds = array<i64: 32, 384>}, {pipeline_mode = #tpu.pipeline_mode<synchronous>, transform_indices = @transform_11, window_bounds = array<i64: 32, 64>}, {pipeline_mode = #tpu.pipeline_mode<synchronous>, transform_indices = @transform_12, window_bounds = array<i64: 32, 64>}, {pipeline_mode = #tpu.pipeline_mode<synchronous>, transform_indices = @transform_13, window_bounds = array<i64: 32, 64>}, {pipeline_mode = #tpu.pipeline_mode<synchronous>, transform_indices = @transform_14, window_bounds = array<i64: 64, 128>}, {pipeline_mode = #tpu.pipeline_mode<synchronous>, transform_indices = @transform_15, window_bounds = array<i64: 1024, 128>}, {pipeline_mode = #tpu.pipeline_mode<synchronous>, transform_indices = @transform_16, window_bounds = array<i64: 1024, 128>}, {pipeline_mode = #tpu.pipeline_mode<synchronous>, transform_indices = @transform_17, window_bounds = array<i64: 384, 128>}, {pipeline_mode = #tpu.pipeline_mode<synchronous>, transform_indices = @transform_18, window_bounds = array<i64: 64, 128>}, {pipeline_mode = #tpu.pipeline_mode<synchronous>, transform_indices = @transform_19, window_bounds = array<i64: 64, 128>}, {pipeline_mode = #tpu.pipeline_mode<synchronous>, transform_indices = @transform_20, window_bounds = array<i64: 64, 128>}, {pipeline_mode = #tpu.pipeline_mode<synchronous>, transform_indices = @transform_21, window_bounds = array<i64: 7, 1, 128>}, {pipeline_mode = #tpu.pipeline_mode<synchronous>, transform_indices = @transform_22, window_bounds = array<i64: 7, 32, 128>}, {pipeline_mode = #tpu.pipeline_mode<synchronous>, transform_indices = @transform_23, window_bounds = array<i64: 32, 32>}, {pipeline_mode = #tpu.pipeline_mode<synchronous>, transform_indices = @transform_24, window_bounds = array<i64: 8, 32, 128>}]} {
    %c0 = arith.constant 0 : index
    %c0_0 = arith.constant 0 : index
    %0 = vector.load %arg8[%c0, %c0_0] : memref<32x64xbf16, #tpu.memory_space<vmem>>, vector<32x64xbf16>
    %c0_1 = arith.constant 0 : index
    %c0_2 = arith.constant 0 : index
    %1 = vector.load %arg15[%c0_1, %c0_2] : memref<64x128xbf16, #tpu.memory_space<vmem>>, vector<64x128xbf16>
    %cst = arith.constant dense<0.000000e+00> : vector<32x128xf32>
    %2 = tpu.matmul %0, %1, %cst {dimension_numbers = #tpu.dot_dimension_numbers<[1], [0], [0], [1], [0, 0, 1, 1], [], []>} : vector<32x64xbf16>, vector<64x128xbf16>, vector<32x128xf32> -> vector<32x128xf32>
    %c0_3 = arith.constant 0 : index
    %c0_4 = arith.constant 0 : index
    %c0_5 = arith.constant 0 : index
    %3 = vector.load %arg22[%c0_3, %c0_4, %c0_5] : memref<7x1x128xf32, #tpu.memory_space<vmem>>, vector<1x1x128xf32>
    %4 = vector.shape_cast %3 : vector<1x1x128xf32> to vector<1x128xf32>
    %5 = vector.broadcast %4 : vector<1x128xf32> to vector<32x128xf32>
    %6 = arith.addf %2, %5 : vector<32x128xf32>
    %c0_6 = arith.constant 0 : index
    %c0_7 = arith.constant 0 : index
    %c0_8 = arith.constant 0 : index
    %7 = vector.load %arg23[%c0_6, %c0_7, %c0_8] : memref<7x32x128xf32, #tpu.memory_space<vmem>>, vector<1x32x128xf32>
    %8 = vector.shape_cast %7 : vector<1x32x128xf32> to vector<32x128xf32>
    %9 = vector.shape_cast %6 : vector<32x128xf32> to vector<1x32x128xf32>
    tpu.vector_store %arg23[%c0_6, %c0_7, %c0_8], %9 {strides = array<i32>} : memref<7x32x128xf32, #tpu.memory_space<vmem>>, vector<1x32x128xf32>,
    %c0_9 = arith.constant 0 : index
    %c0_10 = arith.constant 0 : index
    %10 = vector.load %arg9[%c0_9, %c0_10] : memref<32x1024xbf16, #tpu.memory_space<vmem>>, vector<32x1024xbf16>
    %c0_11 = arith.constant 0 : index
    %c0_12 = arith.constant 0 : index
    %11 = vector.load %arg16[%c0_11, %c0_12] : memref<1024x128xbf16, #tpu.memory_space<vmem>>, vector<1024x128xbf16>
    %cst_13 = arith.constant dense<0.000000e+00> : vector<32x128xf32>
    %12 = tpu.matmul %10, %11, %cst_13 {dimension_numbers = #tpu.dot_dimension_numbers<[1], [0], [0], [1], [0, 0, 1, 1], [], []>} : vector<32x1024xbf16>, vector<1024x128xbf16>, vector<32x128xf32> -> vector<32x128xf32>
    %c1 = arith.constant 1 : index
    %c0_14 = arith.constant 0 : index
    %c0_15 = arith.constant 0 : index
    %13 = vector.load %arg22[%c1, %c0_14, %c0_15] : memref<7x1x128xf32, #tpu.memory_space<vmem>>, vector<1x1x128xf32>
    %14 = vector.shape_cast %13 : vector<1x1x128xf32> to vector<1x128xf32>
    %15 = vector.broadcast %14 : vector<1x128xf32> to vector<32x128xf32>
    %16 = arith.addf %12, %15 : vector<32x128xf32>
    %c1_16 = arith.constant 1 : index
    %c0_17 = arith.constant 0 : index
    %c0_18 = arith.constant 0 : index
    %17 = vector.load %arg23[%c1_16, %c0_17, %c0_18] : memref<7x32x128xf32, #tpu.memory_space<vmem>>, vector<1x32x128xf32>
    %18 = vector.shape_cast %17 : vector<1x32x128xf32> to vector<32x128xf32>
    %19 = vector.shape_cast %16 : vector<32x128xf32> to vector<1x32x128xf32>
    tpu.vector_store %arg23[%c1_16, %c0_17, %c0_18], %19 {strides = array<i32>} : memref<7x32x128xf32, #tpu.memory_space<vmem>>, vector<1x32x128xf32>,
    %c0_19 = arith.constant 0 : index
    %c0_20 = arith.constant 0 : index
    %20 = vector.load %arg10[%c0_19, %c0_20] : memref<32x1024xbf16, #tpu.memory_space<vmem>>, vector<32x1024xbf16>
    %c0_21 = arith.constant 0 : index
    %c0_22 = arith.constant 0 : index
    %21 = vector.load %arg17[%c0_21, %c0_22] : memref<1024x128xbf16, #tpu.memory_space<vmem>>, vector<1024x128xbf16>
    %cst_23 = arith.constant dense<0.000000e+00> : vector<32x128xf32>
    %22 = tpu.matmul %20, %21, %cst_23 {dimension_numbers = #tpu.dot_dimension_numbers<[1], [0], [0], [1], [0, 0, 1, 1], [], []>} : vector<32x1024xbf16>, vector<1024x128xbf16>, vector<32x128xf32> -> vector<32x128xf32>
    %c2 = arith.constant 2 : index
    %c0_24 = arith.constant 0 : index
    %c0_25 = arith.constant 0 : index
    %23 = vector.load %arg22[%c2, %c0_24, %c0_25] : memref<7x1x128xf32, #tpu.memory_space<vmem>>, vector<1x1x128xf32>
    %24 = vector.shape_cast %23 : vector<1x1x128xf32> to vector<1x128xf32>
    %25 = vector.broadcast %24 : vector<1x128xf32> to vector<32x128xf32>
    %26 = arith.addf %22, %25 : vector<32x128xf32>
    %c2_26 = arith.constant 2 : index
    %c0_27 = arith.constant 0 : index
    %c0_28 = arith.constant 0 : index
    %27 = vector.load %arg23[%c2_26, %c0_27, %c0_28] : memref<7x32x128xf32, #tpu.memory_space<vmem>>, vector<1x32x128xf32>
    %28 = vector.shape_cast %27 : vector<1x32x128xf32> to vector<32x128xf32>
    %29 = vector.shape_cast %26 : vector<32x128xf32> to vector<1x32x128xf32>
    tpu.vector_store %arg23[%c2_26, %c0_27, %c0_28], %29 {strides = array<i32>} : memref<7x32x128xf32, #tpu.memory_space<vmem>>, vector<1x32x128xf32>,
    %c0_29 = arith.constant 0 : index
    %c0_30 = arith.constant 0 : index
    %30 = vector.load %arg11[%c0_29, %c0_30] : memref<32x384xbf16, #tpu.memory_space<vmem>>, vector<32x384xbf16>
    %c0_31 = arith.constant 0 : index
    %c0_32 = arith.constant 0 : index
    %31 = vector.load %arg18[%c0_31, %c0_32] : memref<384x128xbf16, #tpu.memory_space<vmem>>, vector<384x128xbf16>
    %cst_33 = arith.constant dense<0.000000e+00> : vector<32x128xf32>
    %32 = tpu.matmul %30, %31, %cst_33 {dimension_numbers = #tpu.dot_dimension_numbers<[1], [0], [0], [1], [0, 0, 1, 1], [], []>} : vector<32x384xbf16>, vector<384x128xbf16>, vector<32x128xf32> -> vector<32x128xf32>
    %c3 = arith.constant 3 : index
    %c0_34 = arith.constant 0 : index
    %c0_35 = arith.constant 0 : index
    %33 = vector.load %arg22[%c3, %c0_34, %c0_35] : memref<7x1x128xf32, #tpu.memory_space<vmem>>, vector<1x1x128xf32>
    %34 = vector.shape_cast %33 : vector<1x1x128xf32> to vector<1x128xf32>
    %35 = vector.broadcast %34 : vector<1x128xf32> to vector<32x128xf32>
    %36 = arith.addf %32, %35 : vector<32x128xf32>
    %c3_36 = arith.constant 3 : index
    %c0_37 = arith.constant 0 : index
    %c0_38 = arith.constant 0 : index
    %37 = vector.load %arg23[%c3_36, %c0_37, %c0_38] : memref<7x32x128xf32, #tpu.memory_space<vmem>>, vector<1x32x128xf32>
    %38 = vector.shape_cast %37 : vector<1x32x128xf32> to vector<32x128xf32>
    %39 = vector.shape_cast %36 : vector<32x128xf32> to vector<1x32x128xf32>
    tpu.vector_store %arg23[%c3_36, %c0_37, %c0_38], %39 {strides = array<i32>} : memref<7x32x128xf32, #tpu.memory_space<vmem>>, vector<1x32x128xf32>,
    %c0_39 = arith.constant 0 : index
    %c0_40 = arith.constant 0 : index
    %40 = vector.load %arg12[%c0_39, %c0_40] : memref<32x64xbf16, #tpu.memory_space<vmem>>, vector<32x64xbf16>
    %c0_41 = arith.constant 0 : index
    %c0_42 = arith.constant 0 : index
    %41 = vector.load %arg19[%c0_41, %c0_42] : memref<64x128xbf16, #tpu.memory_space<vmem>>, vector<64x128xbf16>
    %cst_43 = arith.constant dense<0.000000e+00> : vector<32x128xf32>
    %42 = tpu.matmul %40, %41, %cst_43 {dimension_numbers = #tpu.dot_dimension_numbers<[1], [0], [0], [1], [0, 0, 1, 1], [], []>} : vector<32x64xbf16>, vector<64x128xbf16>, vector<32x128xf32> -> vector<32x128xf32>
    %c4 = arith.constant 4 : index
    %c0_44 = arith.constant 0 : index
    %c0_45 = arith.constant 0 : index
    %43 = vector.load %arg22[%c4, %c0_44, %c0_45] : memref<7x1x128xf32, #tpu.memory_space<vmem>>, vector<1x1x128xf32>
    %44 = vector.shape_cast %43 : vector<1x1x128xf32> to vector<1x128xf32>
    %45 = vector.broadcast %44 : vector<1x128xf32> to vector<32x128xf32>
    %46 = arith.addf %42, %45 : vector<32x128xf32>
    %c4_46 = arith.constant 4 : index
    %c0_47 = arith.constant 0 : index
    %c0_48 = arith.constant 0 : index
    %47 = vector.load %arg23[%c4_46, %c0_47, %c0_48] : memref<7x32x128xf32, #tpu.memory_space<vmem>>, vector<1x32x128xf32>
    %48 = vector.shape_cast %47 : vector<1x32x128xf32> to vector<32x128xf32>
    %49 = vector.shape_cast %46 : vector<32x128xf32> to vector<1x32x128xf32>
    tpu.vector_store %arg23[%c4_46, %c0_47, %c0_48], %49 {strides = array<i32>} : memref<7x32x128xf32, #tpu.memory_space<vmem>>, vector<1x32x128xf32>,
    %c0_49 = arith.constant 0 : index
    %c0_50 = arith.constant 0 : index
    %50 = vector.load %arg13[%c0_49, %c0_50] : memref<32x64xbf16, #tpu.memory_space<vmem>>, vector<32x64xbf16>
    %c0_51 = arith.constant 0 : index
    %c0_52 = arith.constant 0 : index
    %51 = vector.load %arg20[%c0_51, %c0_52] : memref<64x128xbf16, #tpu.memory_space<vmem>>, vector<64x128xbf16>
    %cst_53 = arith.constant dense<0.000000e+00> : vector<32x128xf32>
    %52 = tpu.matmul %50, %51, %cst_53 {dimension_numbers = #tpu.dot_dimension_numbers<[1], [0], [0], [1], [0, 0, 1, 1], [], []>} : vector<32x64xbf16>, vector<64x128xbf16>, vector<32x128xf32> -> vector<32x128xf32>
    %c5 = arith.constant 5 : index
    %c0_54 = arith.constant 0 : index
    %c0_55 = arith.constant 0 : index
    %53 = vector.load %arg22[%c5, %c0_54, %c0_55] : memref<7x1x128xf32, #tpu.memory_space<vmem>>, vector<1x1x128xf32>
    %54 = vector.shape_cast %53 : vector<1x1x128xf32> to vector<1x128xf32>
    %55 = vector.broadcast %54 : vector<1x128xf32> to vector<32x128xf32>
    %56 = arith.addf %52, %55 : vector<32x128xf32>
    %c5_56 = arith.constant 5 : index
    %c0_57 = arith.constant 0 : index
    %c0_58 = arith.constant 0 : index
    %57 = vector.load %arg23[%c5_56, %c0_57, %c0_58] : memref<7x32x128xf32, #tpu.memory_space<vmem>>, vector<1x32x128xf32>
    %58 = vector.shape_cast %57 : vector<1x32x128xf32> to vector<32x128xf32>
    %59 = vector.shape_cast %56 : vector<32x128xf32> to vector<1x32x128xf32>
    tpu.vector_store %arg23[%c5_56, %c0_57, %c0_58], %59 {strides = array<i32>} : memref<7x32x128xf32, #tpu.memory_space<vmem>>, vector<1x32x128xf32>,
    %c0_59 = arith.constant 0 : index
    %c0_60 = arith.constant 0 : index
    %60 = vector.load %arg14[%c0_59, %c0_60] : memref<32x64xbf16, #tpu.memory_space<vmem>>, vector<32x64xbf16>
    %c0_61 = arith.constant 0 : index
    %c0_62 = arith.constant 0 : index
    %61 = vector.load %arg21[%c0_61, %c0_62] : memref<64x128xbf16, #tpu.memory_space<vmem>>, vector<64x128xbf16>
    %cst_63 = arith.constant dense<0.000000e+00> : vector<32x128xf32>
    %62 = tpu.matmul %60, %61, %cst_63 {dimension_numbers = #tpu.dot_dimension_numbers<[1], [0], [0], [1], [0, 0, 1, 1], [], []>} : vector<32x64xbf16>, vector<64x128xbf16>, vector<32x128xf32> -> vector<32x128xf32>
    %c6 = arith.constant 6 : index
    %c0_64 = arith.constant 0 : index
    %c0_65 = arith.constant 0 : index
    %63 = vector.load %arg22[%c6, %c0_64, %c0_65] : memref<7x1x128xf32, #tpu.memory_space<vmem>>, vector<1x1x128xf32>
    %64 = vector.shape_cast %63 : vector<1x1x128xf32> to vector<1x128xf32>
    %65 = vector.broadcast %64 : vector<1x128xf32> to vector<32x128xf32>
    %66 = arith.addf %62, %65 : vector<32x128xf32>
    %c6_66 = arith.constant 6 : index
    %c0_67 = arith.constant 0 : index
    %c0_68 = arith.constant 0 : index
    %67 = vector.load %arg23[%c6_66, %c0_67, %c0_68] : memref<7x32x128xf32, #tpu.memory_space<vmem>>, vector<1x32x128xf32>
    %68 = vector.shape_cast %67 : vector<1x32x128xf32> to vector<32x128xf32>
    %69 = vector.shape_cast %66 : vector<32x128xf32> to vector<1x32x128xf32>
    tpu.vector_store %arg23[%c6_66, %c0_67, %c0_68], %69 {strides = array<i32>} : memref<7x32x128xf32, #tpu.memory_space<vmem>>, vector<1x32x128xf32>,
    %c0_69 = arith.constant 0 : index
    %c0_70 = arith.constant 0 : index
    %70 = vector.load %arg3[%c0_69, %c0_70] : memref<32x32xf32, #tpu.memory_space<vmem>>, vector<32x32xf32>
    %c0_71 = arith.constant 0 : index
    %c0_72 = arith.constant 0 : index
    %71 = vector.load %arg2[%c0_71, %c0_72] : memref<32x32xf32, #tpu.memory_space<vmem>>, vector<32x32xf32>
    %c0_73 = arith.constant 0 : index
    %c0_74 = arith.constant 0 : index
    %72 = vector.load %arg4[%c0_73, %c0_74] : memref<32x32xf32, #tpu.memory_space<vmem>>, vector<32x32xf32>
    %cst_75 = arith.constant dense<0.000000e+00> : vector<32x32xf32>
    %73 = tpu.matmul %71, %72, %cst_75 {dimension_numbers = #tpu.dot_dimension_numbers<[1], [0], [0], [1], [0, 0, 1, 1], [], []>} : vector<32x32xf32>, vector<32x32xf32>, vector<32x32xf32> -> vector<32x32xf32>
    %cst_76 = arith.constant dense<0.000000e+00> : vector<32x32xf32>
    %74 = tpu.matmul %70, %73, %cst_76 {dimension_numbers = #tpu.dot_dimension_numbers<[1], [0], [0], [1], [0, 0, 1, 1], [], []>} : vector<32x32xf32>, vector<32x32xf32>, vector<32x32xf32> -> vector<32x32xf32>
    %c0_77 = arith.constant 0 : index
    %c0_78 = arith.constant 0 : index
    %75 = vector.load %arg5[%c0_77, %c0_78] : memref<1x32xf32, #tpu.memory_space<vmem>>, vector<1x32xf32>
    %76 = vector.broadcast %75 : vector<1x32xf32> to vector<32x32xf32>
    %77 = arith.addf %74, %76 : vector<32x32xf32>
    %cst_79 = arith.constant 0.000000e+00 : f32
    %78 = vector.broadcast %cst_79 : f32 to vector<32x32xf32>
    %79 = arith.maximumf %77, %78 : vector<32x32xf32>
    %c0_80 = arith.constant 0 : index
    %c0_81 = arith.constant 0 : index
    %80 = vector.load %arg6[%c0_80, %c0_81] : memref<32x32xf32, #tpu.memory_space<vmem>>, vector<32x32xf32>
    %cst_82 = arith.constant dense<0.000000e+00> : vector<32x32xf32>
    %81 = tpu.matmul %79, %80, %cst_82 {dimension_numbers = #tpu.dot_dimension_numbers<[1], [0], [0], [1], [0, 0, 1, 1], [], []>} : vector<32x32xf32>, vector<32x32xf32>, vector<32x32xf32> -> vector<32x32xf32>
    %cst_83 = arith.constant dense<0.000000e+00> : vector<32x32xf32>
    %82 = tpu.matmul %70, %81, %cst_83 {dimension_numbers = #tpu.dot_dimension_numbers<[1], [0], [0], [1], [0, 0, 1, 1], [], []>} : vector<32x32xf32>, vector<32x32xf32>, vector<32x32xf32> -> vector<32x32xf32>
    %c0_84 = arith.constant 0 : index
    %c0_85 = arith.constant 0 : index
    %83 = vector.load %arg7[%c0_84, %c0_85] : memref<1x32xf32, #tpu.memory_space<vmem>>, vector<1x32xf32>
    %84 = vector.broadcast %83 : vector<1x32xf32> to vector<32x32xf32>
    %85 = arith.addf %82, %84 : vector<32x32xf32>
    %c0_86 = arith.constant 0 : index
    %c0_87 = arith.constant 0 : index
    %86 = vector.load %arg24[%c0_86, %c0_87] : memref<32x32xf32, #tpu.memory_space<vmem>>, vector<32x32xf32>
    tpu.vector_store %arg24[%c0_86, %c0_87], %85 {strides = array<i32>} : memref<32x32xf32, #tpu.memory_space<vmem>>, vector<32x32xf32>,
    %cst_88 = arith.constant 0.000000e+00 : f32
    %87 = vector.broadcast %cst_88 : f32 to vector<32x96xf32>
    %88 = tpu.concatenate %85, %87 in 1 : vector<32x32xf32>, vector<32x96xf32> -> vector<32x128xf32>
    %89 = arith.mulf %6, %6 : vector<32x128xf32>
    %cst_89 = arith.constant dense<0.000000e+00> : vector<32xf32>
    %90 = vector.multi_reduction <add>, %89, %cst_89 [1] : vector<32x128xf32> to vector<32xf32>
    %91 = vector.shape_cast %90 : vector<32xf32> to vector<32x1xf32>
    %c0_90 = arith.constant 0 : index
    %92 = memref.load %arg1[%c0_90] : memref<8xf32, #tpu.memory_space<smem>>
    %cst_91 = arith.constant 1.000000e-24 : f32
    %93 = vector.broadcast %cst_91 : f32 to vector<32x1xf32>
    %94 = arith.maximumf %91, %93 : vector<32x1xf32>
    %95 = math.rsqrt %94 : vector<32x1xf32>
    %96 = vector.broadcast %92 : f32 to vector<32x1xf32>
    %97 = arith.mulf %96, %95 : vector<32x1xf32>
    %98 = vector.broadcast %97 : vector<32x1xf32> to vector<32x128xf32>
    %99 = arith.mulf %6, %98 : vector<32x128xf32>
    %c0_92 = arith.constant 0 : index
    %c0_93 = arith.constant 0 : index
    %c0_94 = arith.constant 0 : index
    %100 = vector.load %arg25[%c0_92, %c0_93, %c0_94] : memref<8x32x128xf32, #tpu.memory_space<vmem>>, vector<1x32x128xf32>
    %101 = vector.shape_cast %100 : vector<1x32x128xf32> to vector<32x128xf32>
    %102 = vector.shape_cast %99 : vector<32x128xf32> to vector<1x32x128xf32>
    tpu.vector_store %arg25[%c0_92, %c0_93, %c0_94], %102 {strides = array<i32>} : memref<8x32x128xf32, #tpu.memory_space<vmem>>, vector<1x32x128xf32>,
    %103 = arith.mulf %16, %16 : vector<32x128xf32>
    %cst_95 = arith.constant dense<0.000000e+00> : vector<32xf32>
    %104 = vector.multi_reduction <add>, %103, %cst_95 [1] : vector<32x128xf32> to vector<32xf32>
    %105 = vector.shape_cast %104 : vector<32xf32> to vector<32x1xf32>
    %c1_96 = arith.constant 1 : index
    %106 = memref.load %arg1[%c1_96] : memref<8xf32, #tpu.memory_space<smem>>
    %cst_97 = arith.constant 1.000000e-24 : f32
    %107 = vector.broadcast %cst_97 : f32 to vector<32x1xf32>
    %108 = arith.maximumf %105, %107 : vector<32x1xf32>
    %109 = math.rsqrt %108 : vector<32x1xf32>
    %110 = vector.broadcast %106 : f32 to vector<32x1xf32>
    %111 = arith.mulf %110, %109 : vector<32x1xf32>
    %112 = vector.broadcast %111 : vector<32x1xf32> to vector<32x128xf32>
    %113 = arith.mulf %16, %112 : vector<32x128xf32>
    %c1_98 = arith.constant 1 : index
    %c0_99 = arith.constant 0 : index
    %c0_100 = arith.constant 0 : index
    %114 = vector.load %arg25[%c1_98, %c0_99, %c0_100] : memref<8x32x128xf32, #tpu.memory_space<vmem>>, vector<1x32x128xf32>
    %115 = vector.shape_cast %114 : vector<1x32x128xf32> to vector<32x128xf32>
    %116 = vector.shape_cast %113 : vector<32x128xf32> to vector<1x32x128xf32>
    tpu.vector_store %arg25[%c1_98, %c0_99, %c0_100], %116 {strides = array<i32>} : memref<8x32x128xf32, #tpu.memory_space<vmem>>, vector<1x32x128xf32>,
    %117 = arith.mulf %26, %26 : vector<32x128xf32>
    %cst_101 = arith.constant dense<0.000000e+00> : vector<32xf32>
    %118 = vector.multi_reduction <add>, %117, %cst_101 [1] : vector<32x128xf32> to vector<32xf32>
    %119 = vector.shape_cast %118 : vector<32xf32> to vector<32x1xf32>
    %c2_102 = arith.constant 2 : index
    %120 = memref.load %arg1[%c2_102] : memref<8xf32, #tpu.memory_space<smem>>
    %cst_103 = arith.constant 1.000000e-24 : f32
    %121 = vector.broadcast %cst_103 : f32 to vector<32x1xf32>
    %122 = arith.maximumf %119, %121 : vector<32x1xf32>
    %123 = math.rsqrt %122 : vector<32x1xf32>
    %124 = vector.broadcast %120 : f32 to vector<32x1xf32>
    %125 = arith.mulf %124, %123 : vector<32x1xf32>
    %126 = vector.broadcast %125 : vector<32x1xf32> to vector<32x128xf32>
    %127 = arith.mulf %26, %126 : vector<32x128xf32>
    %c2_104 = arith.constant 2 : index
    %c0_105 = arith.constant 0 : index
    %c0_106 = arith.constant 0 : index
    %128 = vector.load %arg25[%c2_104, %c0_105, %c0_106] : memref<8x32x128xf32, #tpu.memory_space<vmem>>, vector<1x32x128xf32>
    %129 = vector.shape_cast %128 : vector<1x32x128xf32> to vector<32x128xf32>
    %130 = vector.shape_cast %127 : vector<32x128xf32> to vector<1x32x128xf32>
    tpu.vector_store %arg25[%c2_104, %c0_105, %c0_106], %130 {strides = array<i32>} : memref<8x32x128xf32, #tpu.memory_space<vmem>>, vector<1x32x128xf32>,
    %131 = arith.mulf %88, %88 : vector<32x128xf32>
    %cst_107 = arith.constant dense<0.000000e+00> : vector<32xf32>
    %132 = vector.multi_reduction <add>, %131, %cst_107 [1] : vector<32x128xf32> to vector<32xf32>
    %133 = vector.shape_cast %132 : vector<32xf32> to vector<32x1xf32>
    %c3_108 = arith.constant 3 : index
    %134 = memref.load %arg1[%c3_108] : memref<8xf32, #tpu.memory_space<smem>>
    %cst_109 = arith.constant 1.000000e-24 : f32
    %135 = vector.broadcast %cst_109 : f32 to vector<32x1xf32>
    %136 = arith.maximumf %133, %135 : vector<32x1xf32>
    %137 = math.rsqrt %136 : vector<32x1xf32>
    %138 = vector.broadcast %134 : f32 to vector<32x1xf32>
    %139 = arith.mulf %138, %137 : vector<32x1xf32>
    %140 = vector.broadcast %139 : vector<32x1xf32> to vector<32x128xf32>
    %141 = arith.mulf %88, %140 : vector<32x128xf32>
    %c3_110 = arith.constant 3 : index
    %c0_111 = arith.constant 0 : index
    %c0_112 = arith.constant 0 : index
    %142 = vector.load %arg25[%c3_110, %c0_111, %c0_112] : memref<8x32x128xf32, #tpu.memory_space<vmem>>, vector<1x32x128xf32>
    %143 = vector.shape_cast %142 : vector<1x32x128xf32> to vector<32x128xf32>
    %144 = vector.shape_cast %141 : vector<32x128xf32> to vector<1x32x128xf32>
    tpu.vector_store %arg25[%c3_110, %c0_111, %c0_112], %144 {strides = array<i32>} : memref<8x32x128xf32, #tpu.memory_space<vmem>>, vector<1x32x128xf32>,
    %145 = arith.mulf %36, %36 : vector<32x128xf32>
    %cst_113 = arith.constant dense<0.000000e+00> : vector<32xf32>
    %146 = vector.multi_reduction <add>, %145, %cst_113 [1] : vector<32x128xf32> to vector<32xf32>
    %147 = vector.shape_cast %146 : vector<32xf32> to vector<32x1xf32>
    %c4_114 = arith.constant 4 : index
    %148 = memref.load %arg1[%c4_114] : memref<8xf32, #tpu.memory_space<smem>>
    %cst_115 = arith.constant 1.000000e-24 : f32
    %149 = vector.broadcast %cst_115 : f32 to vector<32x1xf32>
    %150 = arith.maximumf %147, %149 : vector<32x1xf32>
    %151 = math.rsqrt %150 : vector<32x1xf32>
    %152 = vector.broadcast %148 : f32 to vector<32x1xf32>
    %153 = arith.mulf %152, %151 : vector<32x1xf32>
    %154 = vector.broadcast %153 : vector<32x1xf32> to vector<32x128xf32>
    %155 = arith.mulf %36, %154 : vector<32x128xf32>
    %c4_116 = arith.constant 4 : index
    %c0_117 = arith.constant 0 : index
    %c0_118 = arith.constant 0 : index
    %156 = vector.load %arg25[%c4_116, %c0_117, %c0_118] : memref<8x32x128xf32, #tpu.memory_space<vmem>>, vector<1x32x128xf32>
    %157 = vector.shape_cast %156 : vector<1x32x128xf32> to vector<32x128xf32>
    %158 = vector.shape_cast %155 : vector<32x128xf32> to vector<1x32x128xf32>
    tpu.vector_store %arg25[%c4_116, %c0_117, %c0_118], %158 {strides = array<i32>} : memref<8x32x128xf32, #tpu.memory_space<vmem>>, vector<1x32x128xf32>,
    %159 = arith.mulf %46, %46 : vector<32x128xf32>
    %cst_119 = arith.constant dense<0.000000e+00> : vector<32xf32>
    %160 = vector.multi_reduction <add>, %159, %cst_119 [1] : vector<32x128xf32> to vector<32xf32>
    %161 = vector.shape_cast %160 : vector<32xf32> to vector<32x1xf32>
    %c5_120 = arith.constant 5 : index
    %162 = memref.load %arg1[%c5_120] : memref<8xf32, #tpu.memory_space<smem>>
    %cst_121 = arith.constant 1.000000e-24 : f32
    %163 = vector.broadcast %cst_121 : f32 to vector<32x1xf32>
    %164 = arith.maximumf %161, %163 : vector<32x1xf32>
    %165 = math.rsqrt %164 : vector<32x1xf32>
    %166 = vector.broadcast %162 : f32 to vector<32x1xf32>
    %167 = arith.mulf %166, %165 : vector<32x1xf32>
    %168 = vector.broadcast %167 : vector<32x1xf32> to vector<32x128xf32>
    %169 = arith.mulf %46, %168 : vector<32x128xf32>
    %c5_122 = arith.constant 5 : index
    %c0_123 = arith.constant 0 : index
    %c0_124 = arith.constant 0 : index
    %170 = vector.load %arg25[%c5_122, %c0_123, %c0_124] : memref<8x32x128xf32, #tpu.memory_space<vmem>>, vector<1x32x128xf32>
    %171 = vector.shape_cast %170 : vector<1x32x128xf32> to vector<32x128xf32>
    %172 = vector.shape_cast %169 : vector<32x128xf32> to vector<1x32x128xf32>
    tpu.vector_store %arg25[%c5_122, %c0_123, %c0_124], %172 {strides = array<i32>} : memref<8x32x128xf32, #tpu.memory_space<vmem>>, vector<1x32x128xf32>,
    %173 = arith.mulf %56, %56 : vector<32x128xf32>
    %cst_125 = arith.constant dense<0.000000e+00> : vector<32xf32>
    %174 = vector.multi_reduction <add>, %173, %cst_125 [1] : vector<32x128xf32> to vector<32xf32>
    %175 = vector.shape_cast %174 : vector<32xf32> to vector<32x1xf32>
    %c6_126 = arith.constant 6 : index
    %176 = memref.load %arg1[%c6_126] : memref<8xf32, #tpu.memory_space<smem>>
    %cst_127 = arith.constant 1.000000e-24 : f32
    %177 = vector.broadcast %cst_127 : f32 to vector<32x1xf32>
    %178 = arith.maximumf %175, %177 : vector<32x1xf32>
    %179 = math.rsqrt %178 : vector<32x1xf32>
    %180 = vector.broadcast %176 : f32 to vector<32x1xf32>
    %181 = arith.mulf %180, %179 : vector<32x1xf32>
    %182 = vector.broadcast %181 : vector<32x1xf32> to vector<32x128xf32>
    %183 = arith.mulf %56, %182 : vector<32x128xf32>
    %c6_128 = arith.constant 6 : index
    %c0_129 = arith.constant 0 : index
    %c0_130 = arith.constant 0 : index
    %184 = vector.load %arg25[%c6_128, %c0_129, %c0_130] : memref<8x32x128xf32, #tpu.memory_space<vmem>>, vector<1x32x128xf32>
    %185 = vector.shape_cast %184 : vector<1x32x128xf32> to vector<32x128xf32>
    %186 = vector.shape_cast %183 : vector<32x128xf32> to vector<1x32x128xf32>
    tpu.vector_store %arg25[%c6_128, %c0_129, %c0_130], %186 {strides = array<i32>} : memref<8x32x128xf32, #tpu.memory_space<vmem>>, vector<1x32x128xf32>,
    %187 = arith.mulf %66, %66 : vector<32x128xf32>
    %cst_131 = arith.constant dense<0.000000e+00> : vector<32xf32>
    %188 = vector.multi_reduction <add>, %187, %cst_131 [1] : vector<32x128xf32> to vector<32xf32>
    %189 = vector.shape_cast %188 : vector<32xf32> to vector<32x1xf32>
    %c7 = arith.constant 7 : index
    %190 = memref.load %arg1[%c7] : memref<8xf32, #tpu.memory_space<smem>>
    %cst_132 = arith.constant 1.000000e-24 : f32
    %191 = vector.broadcast %cst_132 : f32 to vector<32x1xf32>
    %192 = arith.maximumf %189, %191 : vector<32x1xf32>
    %193 = math.rsqrt %192 : vector<32x1xf32>
    %194 = vector.broadcast %190 : f32 to vector<32x1xf32>
    %195 = arith.mulf %194, %193 : vector<32x1xf32>
    %196 = vector.broadcast %195 : vector<32x1xf32> to vector<32x128xf32>
    %197 = arith.mulf %66, %196 : vector<32x128xf32>
    %c7_133 = arith.constant 7 : index
    %c0_134 = arith.constant 0 : index
    %c0_135 = arith.constant 0 : index
    %198 = vector.load %arg25[%c7_133, %c0_134, %c0_135] : memref<8x32x128xf32, #tpu.memory_space<vmem>>, vector<1x32x128xf32>
    %199 = vector.shape_cast %198 : vector<1x32x128xf32> to vector<32x128xf32>
    %200 = vector.shape_cast %197 : vector<32x128xf32> to vector<1x32x128xf32>
    tpu.vector_store %arg25[%c7_133, %c0_134, %c0_135], %200 {strides = array<i32>} : memref<8x32x128xf32, #tpu.memory_space<vmem>>, vector<1x32x128xf32>,
    return
  }
  func.func @transform_0(%arg0: i32) -> i32 {
    %c0_i32 = arith.constant 0 : i32
    %c0_i32_0 = arith.constant 0 : i32
    return %c0_i32 : i32
  }
  func.func @transform_1(%arg0: i32) -> (i32, i32) {
    %c0_i32 = arith.constant 0 : i32
    %c0_i32_0 = arith.constant 0 : i32
    %c0_i32_1 = arith.constant 0 : i32
    return %c0_i32, %c0_i32_0 : i32, i32
  }
  func.func @transform_2(%arg0: i32) -> (i32, i32) {
    %c0_i32 = arith.constant 0 : i32
    %c0_i32_0 = arith.constant 0 : i32
    %c0_i32_1 = arith.constant 0 : i32
    return %c0_i32, %c0_i32_0 : i32, i32
  }
  func.func @transform_3(%arg0: i32) -> (i32, i32) {
    %c0_i32 = arith.constant 0 : i32
    %c0_i32_0 = arith.constant 0 : i32
    %c0_i32_1 = arith.constant 0 : i32
    return %c0_i32, %c0_i32_0 : i32, i32
  }
  func.func @transform_4(%arg0: i32) -> (i32, i32) {
    %c0_i32 = arith.constant 0 : i32
    %c0_i32_0 = arith.constant 0 : i32
    %c0_i32_1 = arith.constant 0 : i32
    return %c0_i32, %c0_i32_0 : i32, i32
  }
  func.func @transform_5(%arg0: i32) -> (i32, i32) {
    %c0_i32 = arith.constant 0 : i32
    %c0_i32_0 = arith.constant 0 : i32
    %c0_i32_1 = arith.constant 0 : i32
    return %c0_i32, %c0_i32_0 : i32, i32
  }
  func.func @transform_6(%arg0: i32) -> (i32, i32) {
    %c0_i32 = arith.constant 0 : i32
    %c0_i32_0 = arith.constant 0 : i32
    %c0_i32_1 = arith.constant 0 : i32
    return %c0_i32, %c0_i32_0 : i32, i32
  }
  func.func @transform_7(%arg0: i32) -> (i32, i32) {
    %c0_i32 = arith.constant 0 : i32
    %c0_i32_0 = arith.constant 0 : i32
    %c0_i32_1 = arith.constant 0 : i32
    return %c0_i32, %c0_i32_0 : i32, i32
  }
  func.func @transform_8(%arg0: i32) -> (i32, i32) {
    %c0_i32 = arith.constant 0 : i32
    %c0_i32_0 = arith.constant 0 : i32
    %c0_i32_1 = arith.constant 0 : i32
    return %c0_i32, %c0_i32_0 : i32, i32
  }
  func.func @transform_9(%arg0: i32) -> (i32, i32) {
    %c0_i32 = arith.constant 0 : i32
    %c0_i32_0 = arith.constant 0 : i32
    %c0_i32_1 = arith.constant 0 : i32
    return %c0_i32, %c0_i32_0 : i32, i32
  }
  func.func @transform_10(%arg0: i32) -> (i32, i32) {
    %c0_i32 = arith.constant 0 : i32
    %c0_i32_0 = arith.constant 0 : i32
    %c0_i32_1 = arith.constant 0 : i32
    return %c0_i32, %c0_i32_0 : i32, i32
  }
  func.func @transform_11(%arg0: i32) -> (i32, i32) {
    %c0_i32 = arith.constant 0 : i32
    %c0_i32_0 = arith.constant 0 : i32
    %c0_i32_1 = arith.constant 0 : i32
    return %c0_i32, %c0_i32_0 : i32, i32
  }
  func.func @transform_12(%arg0: i32) -> (i32, i32) {
    %c0_i32 = arith.constant 0 : i32
    %c0_i32_0 = arith.constant 0 : i32
    %c0_i32_1 = arith.constant 0 : i32
    return %c0_i32, %c0_i32_0 : i32, i32
  }
  func.func @transform_13(%arg0: i32) -> (i32, i32) {
    %c0_i32 = arith.constant 0 : i32
    %c0_i32_0 = arith.constant 0 : i32
    %c0_i32_1 = arith.constant 0 : i32
    return %c0_i32, %c0_i32_0 : i32, i32
  }
  func.func @transform_14(%arg0: i32) -> (i32, i32) {
    %c0_i32 = arith.constant 0 : i32
    %c0_i32_0 = arith.constant 0 : i32
    %c0_i32_1 = arith.constant 0 : i32
    return %c0_i32, %c0_i32_0 : i32, i32
  }
  func.func @transform_15(%arg0: i32) -> (i32, i32) {
    %c0_i32 = arith.constant 0 : i32
    %c0_i32_0 = arith.constant 0 : i32
    %c0_i32_1 = arith.constant 0 : i32
    return %c0_i32, %c0_i32_0 : i32, i32
  }
  func.func @transform_16(%arg0: i32) -> (i32, i32) {
    %c0_i32 = arith.constant 0 : i32
    %c0_i32_0 = arith.constant 0 : i32
    %c0_i32_1 = arith.constant 0 : i32
    return %c0_i32, %c0_i32_0 : i32, i32
  }
  func.func @transform_17(%arg0: i32) -> (i32, i32) {
    %c0_i32 = arith.constant 0 : i32
    %c0_i32_0 = arith.constant 0 : i32
    %c0_i32_1 = arith.constant 0 : i32
    return %c0_i32, %c0_i32_0 : i32, i32
  }
  func.func @transform_18(%arg0: i32) -> (i32, i32) {
    %c0_i32 = arith.constant 0 : i32
    %c0_i32_0 = arith.constant 0 : i32
    %c0_i32_1 = arith.constant 0 : i32
    return %c0_i32, %c0_i32_0 : i32, i32
  }
  func.func @transform_19(%arg0: i32) -> (i32, i32) {
    %c0_i32 = arith.constant 0 : i32
    %c0_i32_0 = arith.constant 0 : i32
    %c0_i32_1 = arith.constant 0 : i32
    return %c0_i32, %c0_i32_0 : i32, i32
  }
  func.func @transform_20(%arg0: i32) -> (i32, i32) {
    %c0_i32 = arith.constant 0 : i32
    %c0_i32_0 = arith.constant 0 : i32
    %c0_i32_1 = arith.constant 0 : i32
    return %c0_i32, %c0_i32_0 : i32, i32
  }
  func.func @transform_21(%arg0: i32) -> (i32, i32, i32) {
    %c0_i32 = arith.constant 0 : i32
    %c0_i32_0 = arith.constant 0 : i32
    %c0_i32_1 = arith.constant 0 : i32
    %c0_i32_2 = arith.constant 0 : i32
    return %c0_i32, %c0_i32_0, %c0_i32_1 : i32, i32, i32
  }
  func.func @transform_22(%arg0: i32) -> (i32, i32, i32) {
    %c0_i32 = arith.constant 0 : i32
    %c0_i32_0 = arith.constant 0 : i32
    %c0_i32_1 = arith.constant 0 : i32
    %c0_i32_2 = arith.constant 0 : i32
    return %c0_i32, %c0_i32_0, %c0_i32_1 : i32, i32, i32
  }
  func.func @transform_23(%arg0: i32) -> (i32, i32) {
    %c0_i32 = arith.constant 0 : i32
    %c0_i32_0 = arith.constant 0 : i32
    %c0_i32_1 = arith.constant 0 : i32
    return %c0_i32, %c0_i32_0 : i32, i32
  }
  func.func @transform_24(%arg0: i32) -> (i32, i32, i32) {
    %c0_i32 = arith.constant 0 : i32
    %c0_i32_0 = arith.constant 0 : i32
    %c0_i32_1 = arith.constant 0 : i32
    %c0_i32_2 = arith.constant 0 : i32
    return %c0_i32, %c0_i32_0, %c0_i32_1 : i32, i32, i32
  }
}

</mosaic_0001>

<llo_original>
// kernel: all_multimodal_encoder_forward.1
$region0: #{all_multimodal_encoder_forward.1}
  #allocation0 [shape = 'u32[]', space=smem, size = 0x4, offset = 0x4, fixed_abs, tag = 'smem constant byte address 0x4 - core index']
  #allocation1 [shape = 'u32[144,128]{1,0:T(1,128)}', space=vmem, size = 0x12000, scoped, tag = 'internal scratch']
  %s0 = inlined_call_operand.vmem [shape: f32[8], index: 0, kind: input, shape index: {}]
  %s1 = inlined_call_operand.vmem [shape: f32[32,32], index: 1, kind: input, shape index: {}]
  %s2 = inlined_call_operand.vmem [shape: f32[32,32], index: 2, kind: input, shape index: {}]
  %s3 = inlined_call_operand.vmem [shape: f32[32,32], index: 3, kind: input, shape index: {}]
  %s4 = inlined_call_operand.vmem [shape: f32[1,32], index: 4, kind: input, shape index: {}]
  %s5 = inlined_call_operand.vmem [shape: f32[32,32], index: 5, kind: input, shape index: {}]
  %s6 = inlined_call_operand.hbm [shape: f32[1,32], index: 6, kind: input, shape index: {}]
  %s7 = inlined_call_operand.vmem [shape: bf16[32,64], index: 7, kind: input, shape index: {}]
  %s8 = inlined_call_operand.vmem [shape: bf16[32,1024], index: 8, kind: input, shape index: {}]
  %s9 = inlined_call_operand.vmem [shape: bf16[32,1024], index: 9, kind: input, shape index: {}]
  %s10 = inlined_call_operand.vmem [shape: bf16[32,384], index: 10, kind: input, shape index: {}]
  %s11 = inlined_call_operand.vmem [shape: bf16[32,64], index: 11, kind: input, shape index: {}]
  %s12 = inlined_call_operand.vmem [shape: bf16[32,64], index: 12, kind: input, shape index: {}]
  %s13 = inlined_call_operand.vmem [shape: bf16[32,64], index: 13, kind: input, shape index: {}]
  %s14 = inlined_call_operand.vmem [shape: bf16[64,128], index: 14, kind: input, shape index: {}]
  %s15 = inlined_call_operand.vmem [shape: bf16[1024,128], index: 15, kind: input, shape index: {}]
  %s16 = inlined_call_operand.vmem [shape: bf16[1024,128], index: 16, kind: input, shape index: {}]
  %s17 = inlined_call_operand.vmem [shape: bf16[384,128], index: 17, kind: input, shape index: {}]
  %s18 = inlined_call_operand.vmem [shape: bf16[64,128], index: 18, kind: input, shape index: {}]
  %s19 = inlined_call_operand.vmem [shape: bf16[64,128], index: 19, kind: input, shape index: {}]
  %s20 = inlined_call_operand.vmem [shape: bf16[64,128], index: 20, kind: input, shape index: {}]
  %s21 = inlined_call_operand.hbm [shape: f32[7,1,128], index: 21, kind: input, shape index: {}]
  %s22 = inlined_call_operand.vmem [shape: f32[7,32,128], index: 22, kind: output, shape index: {0}]
  %s23 = inlined_call_operand.hbm [shape: f32[32,32], index: 23, kind: output, shape index: {1}]
  %s24 = inlined_call_operand.vmem [shape: f32[8,32,128], index: 24, kind: output, shape index: {2}]
  %25 = xla_tuple %s22, %s23, %s24
  %s26 = sld [smem:[#allocation0]]
  $region126: #{all_multimodal_encoder_forward.1} parent=0
    _
  %s28 = ssub.s32 1, %s26
  %s29 = scalar_select 0, %s28, %s26
  $region1: #{all_multimodal_encoder_forward.1} parent=0
    #allocation2 [shape = 'u8[512]{0}', space=smem, size = 0x200, scoped, tag = 'input window, operand 0, single buffered']
    #allocation3 [shape = 's32[1]{0}', space=sflag, size = 0x4, scoped, tag = 'scoped memory for all_multimodal_encoder_forward.1']
    #allocation4 [shape = 's32[1]{0}', space=sflag, size = 0x4, scoped, tag = 'scoped memory for all_multimodal_encoder_forward.1']
    #allocation5 [shape = 's32[1]{0}', space=sflag, size = 0x4, scoped, tag = 'scoped memory for all_multimodal_encoder_forward.1']
    #allocation6 [shape = 'u8[512]{0}', space=vmem, size = 0x400, scoped, tag = 'input window, operand 6, single buffered']
    #allocation7 [shape = 'u8[3584]{0}', space=vmem, size = 0x1000, scoped, tag = 'input window, operand 21, single buffered']
    #allocation8 [shape = 's32[1]{0}', space=sflag, size = 0x4, scoped, tag = 'scoped memory for all_multimodal_encoder_forward.1']
    #allocation9 [shape = 'u8[16384]{0}', space=vmem, size = 0x4000, scoped, tag = 'output window, operand 1, single buffered']
    %30 = vsyncpa [#allocation5], 0
    %31 = vsyncpa [#allocation3], 0
    %32 = vsyncpa [#allocation8], 0
    %33 = vsyncpa [#allocation4], 0
    // Predicated region
    $region2: #{all_multimodal_encoder_forward.1} parent=1 // pred_check
      _
    $region3: #{all_multimodal_encoder_forward.1} parent=1 // pred_check_branch
      %35 = sbr.rel (0) target = $region5
    $region4: #{all_multimodal_encoder_forward.1} parent=1 // pred_region
      %s37 = ssub.s32 16, 16
      %38 = vsyncadd [#allocation5], %s37
      %s40 = sshll.u32 %s0, 4
      %s41 = int_to_ptr.vmem [resolvable:$true] %s40
      %43 = dma.vmem_to_smem %s41, 16, [#allocation2], [#allocation5]
    $region5: #{all_multimodal_encoder_forward.1} parent=1 // pred_fallthru
      _
    // Predicated region
    $region6: #{all_multimodal_encoder_forward.1} parent=1 // pred_check
      _
    $region7: #{all_multimodal_encoder_forward.1} parent=1 // pred_check_branch
      %45 = sbr.rel (0) target = $region9
    $region8: #{all_multimodal_encoder_forward.1} parent=1 // pred_region
      _
    $region9: #{all_multimodal_encoder_forward.1} parent=1 // pred_fallthru
      _
    // Predicated region
    $region10: #{all_multimodal_encoder_forward.1} parent=1 // pred_check
      _
    $region11: #{all_multimodal_encoder_forward.1} parent=1 // pred_check_branch
      %47 = sbr.rel (0) target = $region13
    $region12: #{all_multimodal_encoder_forward.1} parent=1 // pred_region
      _
    $region13: #{all_multimodal_encoder_forward.1} parent=1 // pred_fallthru
      _
    // Predicated region
    $region14: #{all_multimodal_encoder_forward.1} parent=1 // pred_check
      _
    $region15: #{all_multimodal_encoder_forward.1} parent=1 // pred_check_branch
      %49 = sbr.rel (0) target = $region17
    $region16: #{all_multimodal_encoder_forward.1} parent=1 // pred_region
      _
    $region17: #{all_multimodal_encoder_forward.1} parent=1 // pred_fallthru
      _
    // Predicated region
    $region18: #{all_multimodal_encoder_forward.1} parent=1 // pred_check
      _
    $region19: #{all_multimodal_encoder_forward.1} parent=1 // pred_check_branch
      %51 = sbr.rel (0) target = $region21
    $region20: #{all_multimodal_encoder_forward.1} parent=1 // pred_region
      _
    $region21: #{all_multimodal_encoder_forward.1} parent=1 // pred_fallthru
      _
    // Predicated region
    $region22: #{all_multimodal_encoder_forward.1} parent=1 // pred_check
      _
    $region23: #{all_multimodal_encoder_forward.1} parent=1 // pred_check_branch
      %53 = sbr.rel (0) target = $region25
    $region24: #{all_multimodal_encoder_forward.1} parent=1 // pred_region
      _
    $region25: #{all_multimodal_encoder_forward.1} parent=1 // pred_fallthru
      _
    // Predicated region
    $region26: #{all_multimodal_encoder_forward.1} parent=1 // pred_check
      _
    $region27: #{all_multimodal_encoder_forward.1} parent=1 // pred_check_branch
      %55 = sbr.rel (0) target = $region29
    $region28: #{all_multimodal_encoder_forward.1} parent=1 // pred_region
      %s57 = ssub.s32 16, 16
      %58 = vsyncadd [#allocation3], %s57
      %s60 = sshll.u32 [#allocation6], 4
      %s61 = int_to_ptr.vmem [resolvable:$true] %s60
      %63 = dma.hbm_to_vmem [thread:$0]  %s6, 16, %s61, [#allocation3]
    $region29: #{all_multimodal_encoder_forward.1} parent=1 // pred_fallthru
      _
    // Predicated region
    $region30: #{all_multimodal_encoder_forward.1} parent=1 // pred_check
      _
    $region31: #{all_multimodal_encoder_forward.1} parent=1 // pred_check_branch
      %65 = sbr.rel (0) target = $region33
    $region32: #{all_multimodal_encoder_forward.1} parent=1 // pred_region
      _
    $region33: #{all_multimodal_encoder_forward.1} parent=1 // pred_fallthru
      _
    // Predicated region
    $region34: #{all_multimodal_encoder_forward.1} parent=1 // pred_check
      _
    $region35: #{all_multimodal_encoder_forward.1} parent=1 // pred_check_branch
      %67 = sbr.rel (0) target = $region37
    $region36: #{all_multimodal_encoder_forward.1} parent=1 // pred_region
      _
    $region37: #{all_multimodal_encoder_forward.1} parent=1 // pred_fallthru
      _
    // Predicated region
    $region38: #{all_multimodal_encoder_forward.1} parent=1 // pred_check
      _
    $region39: #{all_multimodal_encoder_forward.1} parent=1 // pred_check_branch
      %69 = sbr.rel (0) target = $region41
    $region40: #{all_multimodal_encoder_forward.1} parent=1 // pred_region
      _
    $region41: #{all_multimodal_encoder_forward.1} parent=1 // pred_fallthru
      _
    // Predicated region
    $region42: #{all_multimodal_encoder_forward.1} parent=1 // pred_check
      _
    $region43: #{all_multimodal_encoder_forward.1} parent=1 // pred_check_branch
      %71 = sbr.rel (0) target = $region45
    $region44: #{all_multimodal_encoder_forward.1} parent=1 // pred_region
      _
    $region45: #{all_multimodal_encoder_forward.1} parent=1 // pred_fallthru
      _
    // Predicated region
    $region46: #{all_multimodal_encoder_forward.1} parent=1 // pred_check
      _
    $region47: #{all_multimodal_encoder_forward.1} parent=1 // pred_check_branch
      %73 = sbr.rel (0) target = $region49
    $region48: #{all_multimodal_encoder_forward.1} parent=1 // pred_region
      _
    $region49: #{all_multimodal_encoder_forward.1} parent=1 // pred_fallthru
      _
    // Predicated region
    $region50: #{all_multimodal_encoder_forward.1} parent=1 // pred_check
      _
    $region51: #{all_multimodal_encoder_forward.1} parent=1 // pred_check_branch
      %75 = sbr.rel (0) target = $region53
    $region52: #{all_multimodal_encoder_forward.1} parent=1 // pred_region
      _
    $region53: #{all_multimodal_encoder_forward.1} parent=1 // pred_fallthru
      _
    // Predicated region
    $region54: #{all_multimodal_encoder_forward.1} parent=1 // pred_check
      _
    $region55: #{all_multimodal_encoder_forward.1} parent=1 // pred_check_branch
      %77 = sbr.rel (0) target = $region57
    $region56: #{all_multimodal_encoder_forward.1} parent=1 // pred_region
      _
    $region57: #{all_multimodal_encoder_forward.1} parent=1 // pred_fallthru
      _
    // Predicated region
    $region58: #{all_multimodal_encoder_forward.1} parent=1 // pred_check
      _
    $region59: #{all_multimodal_encoder_forward.1} parent=1 // pred_check_branch
      %79 = sbr.rel (0) target = $region61
    $region60: #{all_multimodal_encoder_forward.1} parent=1 // pred_region
      _
    $region61: #{all_multimodal_encoder_forward.1} parent=1 // pred_fallthru
      _
    // Predicated region
    $region62: #{all_multimodal_encoder_forward.1} parent=1 // pred_check
      _
    $region63: #{all_multimodal_encoder_forward.1} parent=1 // pred_check_branch
      %81 = sbr.rel (0) target = $region65
    $region64: #{all_multimodal_encoder_forward.1} parent=1 // pred_region
      _
    $region65: #{all_multimodal_encoder_forward.1} parent=1 // pred_fallthru
      _
    // Predicated region
    $region66: #{all_multimodal_encoder_forward.1} parent=1 // pred_check
      _
    $region67: #{all_multimodal_encoder_forward.1} parent=1 // pred_check_branch
      %83 = sbr.rel (0) target = $region69
    $region68: #{all_multimodal_encoder_forward.1} parent=1 // pred_region
      _
    $region69: #{all_multimodal_encoder_forward.1} parent=1 // pred_fallthru
      _
    // Predicated region
    $region70: #{all_multimodal_encoder_forward.1} parent=1 // pred_check
      _
    $region71: #{all_multimodal_encoder_forward.1} parent=1 // pred_check_branch
      %85 = sbr.rel (0) target = $region73
    $region72: #{all_multimodal_encoder_forward.1} parent=1 // pred_region
      _
    $region73: #{all_multimodal_encoder_forward.1} parent=1 // pred_fallthru
      _
    // Predicated region
    $region74: #{all_multimodal_encoder_forward.1} parent=1 // pred_check
      _
    $region75: #{all_multimodal_encoder_forward.1} parent=1 // pred_check_branch
      %87 = sbr.rel (0) target = $region77
    $region76: #{all_multimodal_encoder_forward.1} parent=1 // pred_region
      _
    $region77: #{all_multimodal_encoder_forward.1} parent=1 // pred_fallthru
      _
    // Predicated region
    $region78: #{all_multimodal_encoder_forward.1} parent=1 // pred_check
      _
    $region79: #{all_multimodal_encoder_forward.1} parent=1 // pred_check_branch
      %89 = sbr.rel (0) target = $region81
    $region80: #{all_multimodal_encoder_forward.1} parent=1 // pred_region
      _
    $region81: #{all_multimodal_encoder_forward.1} parent=1 // pred_fallthru
      _
    // Predicated region
    $region82: #{all_multimodal_encoder_forward.1} parent=1 // pred_check
      _
    $region83: #{all_multimodal_encoder_forward.1} parent=1 // pred_check_branch
      %91 = sbr.rel (0) target = $region85
    $region84: #{all_multimodal_encoder_forward.1} parent=1 // pred_region
      _
    $region85: #{all_multimodal_encoder_forward.1} parent=1 // pred_fallthru
      _
    // Predicated region
    $region86: #{all_multimodal_encoder_forward.1} parent=1 // pred_check
      _
    $region87: #{all_multimodal_encoder_forward.1} parent=1 // pred_check_branch
      %93 = sbr.rel (0) target = $region89
    $region88: #{all_multimodal_encoder_forward.1} parent=1 // pred_region
      %s95 = ssub.s32 112, 112
      %96 = vsyncadd [#allocation8], %s95
      %s97 = sshll.u32 [#allocation7], 4
      %s98 = int_to_ptr.vmem [resolvable:$true] %s97
      %103 = dma.hbm_to_vmem [thread:$0]  %s21, 112, %s98, [#allocation8], 16, 16, 1
    $region89: #{all_multimodal_encoder_forward.1} parent=1 // pred_fallthru
      _
    // Predicated region
    $region90: #{all_multimodal_encoder_forward.1} parent=1 // pred_check
      _
    $region91: #{all_multimodal_encoder_forward.1} parent=1 // pred_check_branch
      %105 = sbr.rel (0) target = $region93
    $region92: #{all_multimodal_encoder_forward.1} parent=1 // pred_region
      %106 = dma.done [#allocation5], 16
    $region93: #{all_multimodal_encoder_forward.1} parent=1 // pred_fallthru
      _
    // Predicated region
    $region94: #{all_multimodal_encoder_forward.1} parent=1 // pred_check
      _
    $region95: #{all_multimodal_encoder_forward.1} parent=1 // pred_check_branch
      %108 = sbr.rel (0) target = $region97
    $region96: #{all_multimodal_encoder_forward.1} parent=1 // pred_region
      %109 = dma.done [#allocation3], 16
    $region97: #{all_multimodal_encoder_forward.1} parent=1 // pred_fallthru
      _
    // Predicated region
    $region98: #{all_multimodal_encoder_forward.1} parent=1 // pred_check
      _
    $region99: #{all_multimodal_encoder_forward.1} parent=1 // pred_check_branch
      %111 = sbr.rel (0) target = $region101
    $region100: #{all_multimodal_encoder_forward.1} parent=1 // pred_region
      %112 = dma.done [#allocation8], 112
    $region101: #{all_multimodal_encoder_forward.1} parent=1 // pred_fallthru
      _
    %113 = sfence
    %v115 = vld [vmem:[%s7] sm:$0xf]
    %v116 = vld [vmem:[%s7 + $0x4] sm:$0xf]
    %v117 = vld [vmem:[%s7 + $0x8] sm:$0xf]
    %v118 = vld [vmem:[%s7 + $0xc] sm:$0xf]
    %v119 = vld [vmem:[%s14] sm:$0xf]
    %v120 = vld [vmem:[%s14 + $0x4] sm:$0xf]
    %v121 = vld [vmem:[%s14 + $0x8] sm:$0xf]
    %v122 = vld [vmem:[%s14 + $0xc] sm:$0xf]
    %v123 = vld [vmem:[%s14 + $0x10] sm:$0xf]
    %v124 = vld [vmem:[%s14 + $0x14] sm:$0xf]
    %v125 = vld [vmem:[%s14 + $0x18] sm:$0xf]
    %v126 = vld [vmem:[%s14 + $0x1c] sm:$0xf]
    %v127 = vld [vmem:[#allocation7] sm:$0x1]
    %v129 = vlaneseq
    %v130 = vshrl.u32 %v129, 7
    %v131 = vsub.s32 0, %v130
    %v132 = vrot.slane %v127, %v131
    %v138 = vunpack.c.l.b16 %v115
    %v139 = vunpack.c.l.b16 %v116
    %v140 = vunpack.c.l.b16 %v117
    %v141 = vunpack.c.l.b16 %v118
    %v142 = vpack.c.b16 %v139, %v138
    %v143 = vpack.c.b16 %v141, %v140
    %v152 = vunpack.c.l.b16 %v119
    %v153 = vunpack.c.l.b16 %v120
    %v154 = vunpack.c.l.b16 %v121
    %v155 = vunpack.c.l.b16 %v122
    %v156 = vunpack.c.l.b16 %v123
    %v157 = vunpack.c.l.b16 %v124
    %v158 = vunpack.c.l.b16 %v125
    %v159 = vunpack.c.l.b16 %v126
    %v160 = vpack.c.b16 %v153, %v152
    %v161 = vpack.c.b16 %v155, %v154
    %v162 = vpack.c.b16 %v157, %v156
    %v163 = vpack.c.b16 %v159, %v158
    %vm168 = vcmask 523264
    %v170 = vsel %vm168, %v142, 0
    %v173 = vsel %vm168, %v143, 0
    %175 = vmatprep.subr.bf16.mxu0 0
    %176 = vmatpush1.bf16.msra.mxu0 %v160
    %177 = vmatprep.subr.bf16.mxu0 0
    %178 = vmatpush1.bf16.msra.mxu0 %v161
    %179 = vmatprep.subr.bf16.mxu0 0
    %180 = vmatpush1.bf16.msra.mxu0 %v162
    %181 = vmatprep.subr.bf16.mxu0 0
    %182 = vmatpush1.bf16.msra.mxu0 %v163
    %183 = vmatprep.subr.bf16.mxu0 0
    %184 = vmatpush1.bf16.msra.mxu0 0
    %185 = vmatprep.subr.bf16.mxu0 0
    %186 = vmatpush1.bf16.msra.mxu0 0
    %187 = vmatprep.subr.bf16.mxu0 0
    %188 = vmatpush1.bf16.msra.mxu0 0
    %189 = vmatprep.subr.bf16.mxu0 0
    %190 = vmatpush1.bf16.msra.mxu0 0
    %191 = vmatprep.subr.bf16.mxu0 0
    %192 = vmatpush1.bf16.msra.mxu0 0
    %193 = vmatprep.subr.bf16.mxu0 0
    %194 = vmatpush1.bf16.msra.mxu0 0
    %195 = vmatprep.subr.bf16.mxu0 0
    %196 = vmatpush1.bf16.msra.mxu0 0
    %197 = vmatprep.subr.bf16.mxu0 0
    %198 = vmatpush1.bf16.msra.mxu0 0
    %199 = vmatprep.subr.bf16.mxu0 0
    %200 = vmatpush1.bf16.msra.mxu0 0
    %201 = vmatprep.subr.bf16.mxu0 0
    %202 = vmatpush1.bf16.msra.mxu0 0
    %203 = vmatprep.subr.bf16.mxu0 0
    %204 = vmatpush1.bf16.msra.mxu0 0
    %205 = vmatprep.subr.bf16.mxu0 0
    %206 = vmatpush1.bf16.msra.mxu0 0
    %207 = vmatprep.mubr.bf16.mxu0 0
    %208 = vmatmul.mubr.bf16.gmra.mrb[0].mxu0 %v170
    %v209 = vpop.f32.mrb[0].mxu0
    %v210 = vadd.f32 %v132, %v209
    %v211 = vpop.f32.mrb[0].mxu0
    %v212 = vpop.f32.mrb[0].mxu0
    %v213 = vadd.f32 %v132, %v212
    %v214 = vpop.f32.mrb[0].mxu0
    %215 = vmatprep.mubr.bf16.mxu0 0
    %216 = vmatmul.mubr.bf16.gmra.mrb[0].mxu0 %v173
    %v217 = vpop.f32.mrb[0].mxu0
    %v218 = vadd.f32 %v132, %v217
    %v219 = vpop.f32.mrb[0].mxu0
    %v220 = vpop.f32.mrb[0].mxu0
    %v221 = vadd.f32 %v132, %v220
    %v222 = vpop.f32.mrb[0].mxu0
    %223 = vdwg.mxu0
    %224 = vst [vmem:[%s22] sm:$0xff] %v210
    %225 = vst [vmem:[%s22 + $0x8] sm:$0xff] %v213
    %226 = vst [vmem:[%s22 + $0x10] sm:$0xff] %v218
    %227 = vst [vmem:[%s22 + $0x18] sm:$0xff] %v221
    %v228 = vld [vmem:[%s8] sm:$0xff]
    %v229 = vld [vmem:[%s8 + $0x8] sm:$0xff]
    %v230 = vld [vmem:[%s8 + $0x10] sm:$0xff]
    %v231 = vld [vmem:[%s8 + $0x18] sm:$0xff]
    %v232 = vld [vmem:[%s8 + $0x20] sm:$0xff]
    %v233 = vld [vmem:[%s8 + $0x28] sm:$0xff]
    %v234 = vld [vmem:[%s8 + $0x30] sm:$0xff]
    %v235 = vld [vmem:[%s8 + $0x38] sm:$0xff]
    %v236 = vld [vmem:[%s8 + $0x40] sm:$0xff]
    %v237 = vld [vmem:[%s8 + $0x48] sm:$0xff]
    %v238 = vld [vmem:[%s8 + $0x50] sm:$0xff]
    %v239 = vld [vmem:[%s8 + $0x58] sm:$0xff]
    %v240 = vld [vmem:[%s8 + $0x60] sm:$0xff]
    %v241 = vld [vmem:[%s8 + $0x68] sm:$0xff]
    %v242 = vld [vmem:[%s8 + $0x70] sm:$0xff]
    %v243 = vld [vmem:[%s8 + $0x78] sm:$0xff]
    %v244 = vld [vmem:[%s15] sm:$0xf]
    %v245 = vld [vmem:[%s15 + $0x4] sm:$0xf]
    %v246 = vld [vmem:[%s15 + $0x8] sm:$0xf]
    %v247 = vld [vmem:[%s15 + $0xc] sm:$0xf]
    %v248 = vld [vmem:[%s15 + $0x10] sm:$0xf]
    %v249 = vld [vmem:[%s15 + $0x14] sm:$0xf]
    %v250 = vld [vmem:[%s15 + $0x18] sm:$0xf]
    %v251 = vld [vmem:[%s15 + $0x1c] sm:$0xf]
    %v252 = vld [vmem:[%s15 + $0x20] sm:$0xf]
    %v253 = vld [vmem:[%s15 + $0x24] sm:$0xf]
    %v254 = vld [vmem:[%s15 + $0x28] sm:$0xf]
    %v255 = vld [vmem:[%s15 + $0x2c] sm:$0xf]
    %v256 = vld [vmem:[%s15 + $0x30] sm:$0xf]
    %v257 = vld [vmem:[%s15 + $0x34] sm:$0xf]
    %v258 = vld [vmem:[%s15 + $0x38] sm:$0xf]
    %v259 = vld [vmem:[%s15 + $0x3c] sm:$0xf]
    %v260 = vld [vmem:[%s15 + $0x40] sm:$0xf]
    %v261 = vld [vmem:[%s15 + $0x44] sm:$0xf]
    %v262 = vld [vmem:[%s15 + $0x48] sm:$0xf]
    %v263 = vld [vmem:[%s15 + $0x4c] sm:$0xf]
    %v264 = vld [vmem:[%s15 + $0x50] sm:$0xf]
    %v265 = vld [vmem:[%s15 + $0x54] sm:$0xf]
    %v266 = vld [vmem:[%s15 + $0x58] sm:$0xf]
    %v267 = vld [vmem:[%s15 + $0x5c] sm:$0xf]
    %v268 = vld [vmem:[%s15 + $0x60] sm:$0xf]
    %v269 = vld [vmem:[%s15 + $0x64] sm:$0xf]
    %v270 = vld [vmem:[%s15 + $0x68] sm:$0xf]
    %v271 = vld [vmem:[%s15 + $0x6c] sm:$0xf]
    %v272 = vld [vmem:[%s15 + $0x70] sm:$0xf]
    %v273 = vld [vmem:[%s15 + $0x74] sm:$0xf]
    %v274 = vld [vmem:[%s15 + $0x78] sm:$0xf]
    %v275 = vld [vmem:[%s15 + $0x7c] sm:$0xf]
    %v276 = vld [vmem:[%s15 + $0x80] sm:$0xf]
    %v277 = vld [vmem:[%s15 + $0x84] sm:$0xf]
    %v278 = vld [vmem:[%s15 + $0x88] sm:$0xf]
    %v279 = vld [vmem:[%s15 + $0x8c] sm:$0xf]
    %v280 = vld [vmem:[%s15 + $0x90] sm:$0xf]
    %v281 = vld [vmem:[%s15 + $0x94] sm:$0xf]
    %v282 = vld [vmem:[%s15 + $0x98] sm:$0xf]
    %v283 = vld [vmem:[%s15 + $0x9c] sm:$0xf]
    %v284 = vld [vmem:[%s15 + $0xa0] sm:$0xf]
    %v285 = vld [vmem:[%s15 + $0xa4] sm:$0xf]
    %v286 = vld [vmem:[%s15 + $0xa8] sm:$0xf]
    %v287 = vld [vmem:[%s15 + $0xac] sm:$0xf]
    %v288 = vld [vmem:[%s15 + $0xb0] sm:$0xf]
    %v289 = vld [vmem:[%s15 + $0xb4] sm:$0xf]
    %v290 = vld [vmem:[%s15 + $0xb8] sm:$0xf]
    %v291 = vld [vmem:[%s15 + $0xbc] sm:$0xf]
    %v292 = vld [vmem:[%s15 + $0xc0] sm:$0xf]
    %v293 = vld [vmem:[%s15 + $0xc4] sm:$0xf]
    %v294 = vld [vmem:[%s15 + $0xc8] sm:$0xf]
    %v295 = vld [vmem:[%s15 + $0xcc] sm:$0xf]
    %v296 = vld [vmem:[%s15 + $0xd0] sm:$0xf]
    %v297 = vld [vmem:[%s15 + $0xd4] sm:$0xf]
    %v298 = vld [vmem:[%s15 + $0xd8] sm:$0xf]
    %v299 = vld [vmem:[%s15 + $0xdc] sm:$0xf]
    %v300 = vld [vmem:[%s15 + $0xe0] sm:$0xf]
    %v301 = vld [vmem:[%s15 + $0xe4] sm:$0xf]
    %v302 = vld [vmem:[%s15 + $0xe8] sm:$0xf]
    %v303 = vld [vmem:[%s15 + $0xec] sm:$0xf]
    %v304 = vld [vmem:[%s15 + $0xf0] sm:$0xf]
    %v305 = vld [vmem:[%s15 + $0xf4] sm:$0xf]
    %v306 = vld [vmem:[%s15 + $0xf8] sm:$0xf]
    %v307 = vld [vmem:[%s15 + $0xfc] sm:$0xf]
    %v308 = vld [vmem:[%s15 + $0x100] sm:$0xf]
    %v309 = vld [vmem:[%s15 + $0x104] sm:$0xf]
    %v310 = vld [vmem:[%s15 + $0x108] sm:$0xf]
    %v311 = vld [vmem:[%s15 + $0x10c] sm:$0xf]
    %v312 = vld [vmem:[%s15 + $0x110] sm:$0xf]
    %v313 = vld [vmem:[%s15 + $0x114] sm:$0xf]
    %v314 = vld [vmem:[%s15 + $0x118] sm:$0xf]
    %v315 = vld [vmem:[%s15 + $0x11c] sm:$0xf]
    %v316 = vld [vmem:[%s15 + $0x120] sm:$0xf]
    %v317 = vld [vmem:[%s15 + $0x124] sm:$0xf]
    %v318 = vld [vmem:[%s15 + $0x128] sm:$0xf]
    %v319 = vld [vmem:[%s15 + $0x12c] sm:$0xf]
    %v320 = vld [vmem:[%s15 + $0x130] sm:$0xf]
    %v321 = vld [vmem:[%s15 + $0x134] sm:$0xf]
    %v322 = vld [vmem:[%s15 + $0x138] sm:$0xf]
    %v323 = vld [vmem:[%s15 + $0x13c] sm:$0xf]
    %v324 = vld [vmem:[%s15 + $0x140] sm:$0xf]
    %v325 = vld [vmem:[%s15 + $0x144] sm:$0xf]
    %v326 = vld [vmem:[%s15 + $0x148] sm:$0xf]
    %v327 = vld [vmem:[%s15 + $0x14c] sm:$0xf]
    %v328 = vld [vmem:[%s15 + $0x150] sm:$0xf]
    %v329 = vld [vmem:[%s15 + $0x154] sm:$0xf]
    %v330 = vld [vmem:[%s15 + $0x158] sm:$0xf]
    %v331 = vld [vmem:[%s15 + $0x15c] sm:$0xf]
    %v332 = vld [vmem:[%s15 + $0x160] sm:$0xf]
    %v333 = vld [vmem:[%s15 + $0x164] sm:$0xf]
    %v334 = vld [vmem:[%s15 + $0x168] sm:$0xf]
    %v335 = vld [vmem:[%s15 + $0x16c] sm:$0xf]
    %v336 = vld [vmem:[%s15 + $0x170] sm:$0xf]
    %v337 = vld [vmem:[%s15 + $0x174] sm:$0xf]
    %v338 = vld [vmem:[%s15 + $0x178] sm:$0xf]
    %v339 = vld [vmem:[%s15 + $0x17c] sm:$0xf]
    %v340 = vld [vmem:[%s15 + $0x180] sm:$0xf]
    %v341 = vld [vmem:[%s15 + $0x184] sm:$0xf]
    %v342 = vld [vmem:[%s15 + $0x188] sm:$0xf]
    %v343 = vld [vmem:[%s15 + $0x18c] sm:$0xf]
    %v344 = vld [vmem:[%s15 + $0x190] sm:$0xf]
    %v345 = vld [vmem:[%s15 + $0x194] sm:$0xf]
    %v346 = vld [vmem:[%s15 + $0x198] sm:$0xf]
    %v347 = vld [vmem:[%s15 + $0x19c] sm:$0xf]
    %v348 = vld [vmem:[%s15 + $0x1a0] sm:$0xf]
    %v349 = vld [vmem:[%s15 + $0x1a4] sm:$0xf]
    %v350 = vld [vmem:[%s15 + $0x1a8] sm:$0xf]
    %v351 = vld [vmem:[%s15 + $0x1ac] sm:$0xf]
    %v352 = vld [vmem:[%s15 + $0x1b0] sm:$0xf]
    %v353 = vld [vmem:[%s15 + $0x1b4] sm:$0xf]
    %v354 = vld [vmem:[%s15 + $0x1b8] sm:$0xf]
    %v355 = vld [vmem:[%s15 + $0x1bc] sm:$0xf]
    %v356 = vld [vmem:[%s15 + $0x1c0] sm:$0xf]
    %v357 = vld [vmem:[%s15 + $0x1c4] sm:$0xf]
    %v358 = vld [vmem:[%s15 + $0x1c8] sm:$0xf]
    %v359 = vld [vmem:[%s15 + $0x1cc] sm:$0xf]
    %v360 = vld [vmem:[%s15 + $0x1d0] sm:$0xf]
    %v361 = vld [vmem:[%s15 + $0x1d4] sm:$0xf]
    %v362 = vld [vmem:[%s15 + $0x1d8] sm:$0xf]
    %v363 = vld [vmem:[%s15 + $0x1dc] sm:$0xf]
    %v364 = vld [vmem:[%s15 + $0x1e0] sm:$0xf]
    %v365 = vld [vmem:[%s15 + $0x1e4] sm:$0xf]
    %v366 = vld [vmem:[%s15 + $0x1e8] sm:$0xf]
    %v367 = vld [vmem:[%s15 + $0x1ec] sm:$0xf]
    %v368 = vld [vmem:[%s15 + $0x1f0] sm:$0xf]
    %v369 = vld [vmem:[%s15 + $0x1f4] sm:$0xf]
    %v370 = vld [vmem:[%s15 + $0x1f8] sm:$0xf]
    %v371 = vld [vmem:[%s15 + $0x1fc] sm:$0xf]
    %s372 = scalar_lea.vmem [#allocation7], 1
    %v373 = vld [vmem:[%s372] sm:$0x1]
    %v375 = vlaneseq
    %v376 = vshrl.u32 %v375, 7
    %v377 = vsub.s32 0, %v376
    %v378 = vrot.slane %v373, %v377
    %v396 = vunpack.c.l.b16 %v228
    %v397 = vunpack.c.h.b16 %v228
    %v398 = vunpack.c.l.b16 %v229
    %v399 = vunpack.c.h.b16 %v229
    %v400 = vunpack.c.l.b16 %v230
    %v401 = vunpack.c.h.b16 %v230
    %v402 = vunpack.c.l.b16 %v231
    %v403 = vunpack.c.h.b16 %v231
    %v404 = vunpack.c.l.b16 %v232
    %v405 = vunpack.c.h.b16 %v232
    %v406 = vunpack.c.l.b16 %v233
    %v407 = vunpack.c.h.b16 %v233
    %v408 = vunpack.c.l.b16 %v234
    %v409 = vunpack.c.h.b16 %v234
    %v410 = vunpack.c.l.b16 %v235
    %v411 = vunpack.c.h.b16 %v235
    %v412 = vunpack.c.l.b16 %v236
    %v413 = vunpack.c.h.b16 %v236
    %v414 = vunpack.c.l.b16 %v237
    %v415 = vunpack.c.h.b16 %v237
    %v416 = vunpack.c.l.b16 %v238
    %v417 = vunpack.c.h.b16 %v238
    %v418 = vunpack.c.l.b16 %v239
    %v419 = vunpack.c.h.b16 %v239
    %v420 = vunpack.c.l.b16 %v240
    %v421 = vunpack.c.h.b16 %v240
    %v422 = vunpack.c.l.b16 %v241
    %v423 = vunpack.c.h.b16 %v241
    %v424 = vunpack.c.l.b16 %v242
    %v425 = vunpack.c.h.b16 %v242
    %v426 = vunpack.c.l.b16 %v243
    %v427 = vunpack.c.h.b16 %v243
    %v428 = vpack.c.b16 %v404, %v396
    %v429 = vpack.c.b16 %v405, %v397
    %v430 = vpack.c.b16 %v406, %v398
    %v431 = vpack.c.b16 %v407, %v399
    %v432 = vpack.c.b16 %v408, %v400
    %v433 = vpack.c.b16 %v409, %v401
    %v434 = vpack.c.b16 %v410, %v402
    %v435 = vpack.c.b16 %v411, %v403
    %v436 = vpack.c.b16 %v420, %v412
    %v437 = vpack.c.b16 %v421, %v413
    %v438 = vpack.c.b16 %v422, %v414
    %v439 = vpack.c.b16 %v423, %v415
    %v440 = vpack.c.b16 %v424, %v416
    %v441 = vpack.c.b16 %v425, %v417
    %v442 = vpack.c.b16 %v426, %v418
    %v443 = vpack.c.b16 %v427, %v419
    %v588 = vunpack.c.l.b16 %v244
    %v589 = vunpack.c.l.b16 %v245
    %v590 = vunpack.c.l.b16 %v246
    %v591 = vunpack.c.l.b16 %v247
    %v592 = vunpack.c.l.b16 %v248
    %v593 = vunpack.c.l.b16 %v249
    %v594 = vunpack.c.l.b16 %v250
    %v595 = vunpack.c.l.b16 %v251
    %v596 = vunpack.c.l.b16 %v252
    %v597 = vunpack.c.l.b16 %v253
    %v598 = vunpack.c.l.b16 %v254
    %v599 = vunpack.c.l.b16 %v255
    %v600 = vunpack.c.l.b16 %v256
    %v601 = vunpack.c.l.b16 %v257
    %v602 = vunpack.c.l.b16 %v258
    %v603 = vunpack.c.l.b16 %v259
    %v604 = vunpack.c.l.b16 %v260
    %v605 = vunpack.c.l.b16 %v261
    %v606 = vunpack.c.l.b16 %v262
    %v607 = vunpack.c.l.b16 %v263
    %v608 = vunpack.c.l.b16 %v264
    %v609 = vunpack.c.l.b16 %v265
    %v610 = vunpack.c.l.b16 %v266
    %v611 = vunpack.c.l.b16 %v267
    %v612 = vunpack.c.l.b16 %v268
    %v613 = vunpack.c.l.b16 %v269
    %v614 = vunpack.c.l.b16 %v270
    %v615 = vunpack.c.l.b16 %v271
    %v616 = vunpack.c.l.b16 %v272
    %v617 = vunpack.c.l.b16 %v273
    %v618 = vunpack.c.l.b16 %v274
    %v619 = vunpack.c.l.b16 %v275
    %v620 = vunpack.c.l.b16 %v276
    %v621 = vunpack.c.l.b16 %v277
    %v622 = vunpack.c.l.b16 %v278
    %v623 = vunpack.c.l.b16 %v279
    %v624 = vunpack.c.l.b16 %v280
    %v625 = vunpack.c.l.b16 %v281
    %v626 = vunpack.c.l.b16 %v282
    %v627 = vunpack.c.l.b16 %v283
    %v628 = vunpack.c.l.b16 %v284
    %v629 = vunpack.c.l.b16 %v285
    %v630 = vunpack.c.l.b16 %v286
    %v631 = vunpack.c.l.b16 %v287
    %v632 = vunpack.c.l.b16 %v288
    %v633 = vunpack.c.l.b16 %v289
    %v634 = vunpack.c.l.b16 %v290
    %v635 = vunpack.c.l.b16 %v291
    %v636 = vunpack.c.l.b16 %v292
    %v637 = vunpack.c.l.b16 %v293
    %v638 = vunpack.c.l.b16 %v294
    %v639 = vunpack.c.l.b16 %v295
    %v640 = vunpack.c.l.b16 %v296
    %v641 = vunpack.c.l.b16 %v297
    %v642 = vunpack.c.l.b16 %v298
    %v643 = vunpack.c.l.b16 %v299
    %v644 = vunpack.c.l.b16 %v300
    %v645 = vunpack.c.l.b16 %v301
    %v646 = vunpack.c.l.b16 %v302
    %v647 = vunpack.c.l.b16 %v303
    %v648 = vunpack.c.l.b16 %v304
    %v649 = vunpack.c.l.b16 %v305
    %v650 = vunpack.c.l.b16 %v306
    %v651 = vunpack.c.l.b16 %v307
    %v652 = vunpack.c.l.b16 %v308
    %v653 = vunpack.c.l.b16 %v309
    %v654 = vunpack.c.l.b16 %v310
    %v655 = vunpack.c.l.b16 %v311
    %v656 = vunpack.c.l.b16 %v312
    %v657 = vunpack.c.l.b16 %v313
    %v658 = vunpack.c.l.b16 %v314
    %v659 = vunpack.c.l.b16 %v315
    %v660 = vunpack.c.l.b16 %v316
    %v661 = vunpack.c.l.b16 %v317
    %v662 = vunpack.c.l.b16 %v318
    %v663 = vunpack.c.l.b16 %v319
    %v664 = vunpack.c.l.b16 %v320
    %v665 = vunpack.c.l.b16 %v321
    %v666 = vunpack.c.l.b16 %v322
    %v667 = vunpack.c.l.b16 %v323
    %v668 = vunpack.c.l.b16 %v324
    %v669 = vunpack.c.l.b16 %v325
    %v670 = vunpack.c.l.b16 %v326
    %v671 = vunpack.c.l.b16 %v327
    %v672 = vunpack.c.l.b16 %v328
    %v673 = vunpack.c.l.b16 %v329
    %v674 = vunpack.c.l.b16 %v330
    %v675 = vunpack.c.l.b16 %v331
    %v676 = vunpack.c.l.b16 %v332
    %v677 = vunpack.c.l.b16 %v333
    %v678 = vunpack.c.l.b16 %v334
    %v679 = vunpack.c.l.b16 %v335
    %v680 = vunpack.c.l.b16 %v336
    %v681 = vunpack.c.l.b16 %v337
    %v682 = vunpack.c.l.b16 %v338
    %v683 = vunpack.c.l.b16 %v339
    %v684 = vunpack.c.l.b16 %v340
    %v685 = vunpack.c.l.b16 %v341
    %v686 = vunpack.c.l.b16 %v342
    %v687 = vunpack.c.l.b16 %v343
    %v688 = vunpack.c.l.b16 %v344
    %v689 = vunpack.c.l.b16 %v345
    %v690 = vunpack.c.l.b16 %v346
    %v691 = vunpack.c.l.b16 %v347
    %v692 = vunpack.c.l.b16 %v348
    %v693 = vunpack.c.l.b16 %v349
    %v694 = vunpack.c.l.b16 %v350
    %v695 = vunpack.c.l.b16 %v351
    %v696 = vunpack.c.l.b16 %v352
    %v697 = vunpack.c.l.b16 %v353
    %v698 = vunpack.c.l.b16 %v354
    %v699 = vunpack.c.l.b16 %v355
    %v700 = vunpack.c.l.b16 %v356
    %v701 = vunpack.c.l.b16 %v357
    %v702 = vunpack.c.l.b16 %v358
    %v703 = vunpack.c.l.b16 %v359
    %v704 = vunpack.c.l.b16 %v360
    %v705 = vunpack.c.l.b16 %v361
    %v706 = vunpack.c.l.b16 %v362
    %v707 = vunpack.c.l.b16 %v363
    %v708 = vunpack.c.l.b16 %v364
    %v709 = vunpack.c.l.b16 %v365
    %v710 = vunpack.c.l.b16 %v366
    %v711 = vunpack.c.l.b16 %v367
    %v712 = vunpack.c.l.b16 %v368
    %v713 = vunpack.c.l.b16 %v369
    %v714 = vunpack.c.l.b16 %v370
    %v715 = vunpack.c.l.b16 %v371
    %v716 = vpack.c.b16 %v589, %v588
    %v717 = vpack.c.b16 %v591, %v590
    %v718 = vpack.c.b16 %v593, %v592
    %v719 = vpack.c.b16 %v595, %v594
    %v720 = vpack.c.b16 %v597, %v596
    %v721 = vpack.c.b16 %v599, %v598
    %v722 = vpack.c.b16 %v601, %v600
    %v723 = vpack.c.b16 %v603, %v602
    %v724 = vpack.c.b16 %v605, %v604
    %v725 = vpack.c.b16 %v607, %v606
    %v726 = vpack.c.b16 %v609, %v608
    %v727 = vpack.c.b16 %v611, %v610
    %v728 = vpack.c.b16 %v613, %v612
    %v729 = vpack.c.b16 %v615, %v614
    %v730 = vpack.c.b16 %v617, %v616
    %v731 = vpack.c.b16 %v619, %v618
    %v732 = vpack.c.b16 %v621, %v620
    %v733 = vpack.c.b16 %v623, %v622
    %v734 = vpack.c.b16 %v625, %v624
    %v735 = vpack.c.b16 %v627, %v626
    %v736 = vpack.c.b16 %v629, %v628
    %v737 = vpack.c.b16 %v631, %v630
    %v738 = vpack.c.b16 %v633, %v632
    %v739 = vpack.c.b16 %v635, %v634
    %v740 = vpack.c.b16 %v637, %v636
    %v741 = vpack.c.b16 %v639, %v638
    %v742 = vpack.c.b16 %v641, %v640
    %v743 = vpack.c.b16 %v643, %v642
    %v744 = vpack.c.b16 %v645, %v644
    %v745 = vpack.c.b16 %v647, %v646
    %v746 = vpack.c.b16 %v649, %v648
    %v747 = vpack.c.b16 %v651, %v650
    %v748 = vpack.c.b16 %v653, %v652
    %v749 = vpack.c.b16 %v655, %v654
    %v750 = vpack.c.b16 %v657, %v656
    %v751 = vpack.c.b16 %v659, %v658
    %v752 = vpack.c.b16 %v661, %v660
    %v753 = vpack.c.b16 %v663, %v662
    %v754 = vpack.c.b16 %v665, %v664
    %v755 = vpack.c.b16 %v667, %v666
    %v756 = vpack.c.b16 %v669, %v668
    %v757 = vpack.c.b16 %v671, %v670
    %v758 = vpack.c.b16 %v673, %v672
    %v759 = vpack.c.b16 %v675, %v674
    %v760 = vpack.c.b16 %v677, %v676
    %v761 = vpack.c.b16 %v679, %v678
    %v762 = vpack.c.b16 %v681, %v680
    %v763 = vpack.c.b16 %v683, %v682
    %v764 = vpack.c.b16 %v685, %v684
    %v765 = vpack.c.b16 %v687, %v686
    %v766 = vpack.c.b16 %v689, %v688
    %v767 = vpack.c.b16 %v691, %v690
    %v768 = vpack.c.b16 %v693, %v692
    %v769 = vpack.c.b16 %v695, %v694
    %v770 = vpack.c.b16 %v697, %v696
    %v771 = vpack.c.b16 %v699, %v698
    %v772 = vpack.c.b16 %v701, %v700
    %v773 = vpack.c.b16 %v703, %v702
    %v774 = vpack.c.b16 %v705, %v704
    %v775 = vpack.c.b16 %v707, %v706
    %v776 = vpack.c.b16 %v709, %v708
    %v777 = vpack.c.b16 %v711, %v710
    %v778 = vpack.c.b16 %v713, %v712
    %v779 = vpack.c.b16 %v715, %v714
    %844 = vmatprep.subr.bf16.mxu0 0
    %845 = vmatpush1.bf16.msra.mxu0 %v716
    %846 = vmatprep.subr.bf16.mxu0 0
    %847 = vmatpush1.bf16.msra.mxu0 %v717
    %848 = vmatprep.subr.bf16.mxu0 0
    %849 = vmatpush1.bf16.msra.mxu0 %v718
    %850 = vmatprep.subr.bf16.mxu0 0
    %851 = vmatpush1.bf16.msra.mxu0 %v719
    %852 = vmatprep.subr.bf16.mxu0 0
    %853 = vmatpush1.bf16.msra.mxu0 %v720
    %854 = vmatprep.subr.bf16.mxu0 0
    %855 = vmatpush1.bf16.msra.mxu0 %v721
    %856 = vmatprep.subr.bf16.mxu0 0
    %857 = vmatpush1.bf16.msra.mxu0 %v722
    %858 = vmatprep.subr.bf16.mxu0 0
    %859 = vmatpush1.bf16.msra.mxu0 %v723
    %860 = vmatprep.subr.bf16.mxu0 0
    %861 = vmatpush1.bf16.msra.mxu0 %v724
    %862 = vmatprep.subr.bf16.mxu0 0
    %863 = vmatpush1.bf16.msra.mxu0 %v725
    %864 = vmatprep.subr.bf16.mxu0 0
    %865 = vmatpush1.bf16.msra.mxu0 %v726
    %866 = vmatprep.subr.bf16.mxu0 0
    %867 = vmatpush1.bf16.msra.mxu0 %v727
    %868 = vmatprep.subr.bf16.mxu0 0
    %869 = vmatpush1.bf16.msra.mxu0 %v728
    %870 = vmatprep.subr.bf16.mxu0 0
    %871 = vmatpush1.bf16.msra.mxu0 %v729
    %872 = vmatprep.subr.bf16.mxu0 0
    %873 = vmatpush1.bf16.msra.mxu0 %v730
    %874 = vmatprep.subr.bf16.mxu0 0
    %875 = vmatpush1.bf16.msra.mxu0 %v731
    %876 = vmatprep.mubr.bf16.mxu0 %v429
    %877 = vmatmul.mubr.bf16.gmra.mrb[0].mxu0 %v428
    %v878 = vpop.f32.mrb[0].mxu0
    %v879 = vadd.f32 %v378, %v878
    %v880 = vpop.f32.mrb[0].mxu0
    %v881 = vpop.f32.mrb[0].mxu0
    %v882 = vadd.f32 %v378, %v881
    %v883 = vpop.f32.mrb[0].mxu0
    %884 = vmatprep.mubr.bf16.mxu0 %v437
    %885 = vmatmul.mubr.bf16.gmra.mrb[0].mxu0 %v436
    %v886 = vpop.f32.mrb[0].mxu0
    %v887 = vadd.f32 %v378, %v886
    %v888 = vpop.f32.mrb[0].mxu0
    %v889 = vpop.f32.mrb[0].mxu0
    %v890 = vadd.f32 %v378, %v889
    %v891 = vpop.f32.mrb[0].mxu0
    %892 = vdwg.mxu0
    %893 = vmatprep.subr.bf16.mxu0 0
    %894 = vmatpush1.bf16.msra.mxu0 %v732
    %895 = vmatprep.subr.bf16.mxu0 0
    %896 = vmatpush1.bf16.msra.mxu0 %v733
    %897 = vmatprep.subr.bf16.mxu0 0
    %898 = vmatpush1.bf16.msra.mxu0 %v734
    %899 = vmatprep.subr.bf16.mxu0 0
    %900 = vmatpush1.bf16.msra.mxu0 %v735
    %901 = vmatprep.subr.bf16.mxu0 0
    %902 = vmatpush1.bf16.msra.mxu0 %v736
    %903 = vmatprep.subr.bf16.mxu0 0
    %904 = vmatpush1.bf16.msra.mxu0 %v737
    %905 = vmatprep.subr.bf16.mxu0 0
    %906 = vmatpush1.bf16.msra.mxu0 %v738
    %907 = vmatprep.subr.bf16.mxu0 0
    %908 = vmatpush1.bf16.msra.mxu0 %v739
    %909 = vmatprep.subr.bf16.mxu0 0
    %910 = vmatpush1.bf16.msra.mxu0 %v740
    %911 = vmatprep.subr.bf16.mxu0 0
    %912 = vmatpush1.bf16.msra.mxu0 %v741
    %913 = vmatprep.subr.bf16.mxu0 0
    %914 = vmatpush1.bf16.msra.mxu0 %v742
    %915 = vmatprep.subr.bf16.mxu0 0
    %916 = vmatpush1.bf16.msra.mxu0 %v743
    %917 = vmatprep.subr.bf16.mxu0 0
    %918 = vmatpush1.bf16.msra.mxu0 %v744
    %919 = vmatprep.subr.bf16.mxu0 0
    %920 = vmatpush1.bf16.msra.mxu0 %v745
    %921 = vmatprep.subr.bf16.mxu0 0
    %922 = vmatpush1.bf16.msra.mxu0 %v746
    %923 = vmatprep.subr.bf16.mxu0 0
    %924 = vmatpush1.bf16.msra.mxu0 %v747
    %925 = vmatprep.mubr.bf16.mxu0 %v431
    %926 = vmatmul.mubr.bf16.gmra.mrb[0].mxu0 %v430
    %v927 = vpop.f32.mrb[0].mxu0
    %v928 = vadd.f32 %v879, %v927
    %v929 = vpop.f32.mrb[0].mxu0
    %v930 = vpop.f32.mrb[0].mxu0
    %v931 = vadd.f32 %v882, %v930
    %v932 = vpop.f32.mrb[0].mxu0
    %933 = vmatprep.mubr.bf16.mxu0 %v439
    %934 = vmatmul.mubr.bf16.gmra.mrb[0].mxu0 %v438
    %v935 = vpop.f32.mrb[0].mxu0
    %v936 = vadd.f32 %v887, %v935
    %v937 = vpop.f32.mrb[0].mxu0
    %v938 = vpop.f32.mrb[0].mxu0
    %v939 = vadd.f32 %v890, %v938
    %v940 = vpop.f32.mrb[0].mxu0
    %941 = vdwg.mxu0
    %942 = vmatprep.subr.bf16.mxu0 0
    %943 = vmatpush1.bf16.msra.mxu0 %v748
    %944 = vmatprep.subr.bf16.mxu0 0
    %945 = vmatpush1.bf16.msra.mxu0 %v749
    %946 = vmatprep.subr.bf16.mxu0 0
    %947 = vmatpush1.bf16.msra.mxu0 %v750
    %948 = vmatprep.subr.bf16.mxu0 0
    %949 = vmatpush1.bf16.msra.mxu0 %v751
    %950 = vmatprep.subr.bf16.mxu0 0
    %951 = vmatpush1.bf16.msra.mxu0 %v752
    %952 = vmatprep.subr.bf16.mxu0 0
    %953 = vmatpush1.bf16.msra.mxu0 %v753
    %954 = vmatprep.subr.bf16.mxu0 0
    %955 = vmatpush1.bf16.msra.mxu0 %v754
    %956 = vmatprep.subr.bf16.mxu0 0
    %957 = vmatpush1.bf16.msra.mxu0 %v755
    %958 = vmatprep.subr.bf16.mxu0 0
    %959 = vmatpush1.bf16.msra.mxu0 %v756
    %960 = vmatprep.subr.bf16.mxu0 0
    %961 = vmatpush1.bf16.msra.mxu0 %v757
    %962 = vmatprep.subr.bf16.mxu0 0
    %963 = vmatpush1.bf16.msra.mxu0 %v758
    %964 = vmatprep.subr.bf16.mxu0 0
    %965 = vmatpush1.bf16.msra.mxu0 %v759
    %966 = vmatprep.subr.bf16.mxu0 0
    %967 = vmatpush1.bf16.msra.mxu0 %v760
    %968 = vmatprep.subr.bf16.mxu0 0
    %969 = vmatpush1.bf16.msra.mxu0 %v761
    %970 = vmatprep.subr.bf16.mxu0 0
    %971 = vmatpush1.bf16.msra.mxu0 %v762
    %972 = vmatprep.subr.bf16.mxu0 0
    %973 = vmatpush1.bf16.msra.mxu0 %v763
    %974 = vmatprep.mubr.bf16.mxu0 %v433
    %975 = vmatmul.mubr.bf16.gmra.mrb[0].mxu0 %v432
    %v976 = vpop.f32.mrb[0].mxu0
    %v977 = vadd.f32 %v928, %v976
    %v978 = vpop.f32.mrb[0].mxu0
    %v979 = vpop.f32.mrb[0].mxu0
    %v980 = vadd.f32 %v931, %v979
    %v981 = vpop.f32.mrb[0].mxu0
    %982 = vmatprep.mubr.bf16.mxu0 %v441
    %983 = vmatmul.mubr.bf16.gmra.mrb[0].mxu0 %v440
    %v984 = vpop.f32.mrb[0].mxu0
    %v985 = vadd.f32 %v936, %v984
    %v986 = vpop.f32.mrb[0].mxu0
    %v987 = vpop.f32.mrb[0].mxu0
    %v988 = vadd.f32 %v939, %v987
    %v989 = vpop.f32.mrb[0].mxu0
    %990 = vdwg.mxu0
    %991 = vmatprep.subr.bf16.mxu0 0
    %992 = vmatpush1.bf16.msra.mxu0 %v764
    %993 = vmatprep.subr.bf16.mxu0 0
    %994 = vmatpush1.bf16.msra.mxu0 %v765
    %995 = vmatprep.subr.bf16.mxu0 0
    %996 = vmatpush1.bf16.msra.mxu0 %v766
    %997 = vmatprep.subr.bf16.mxu0 0
    %998 = vmatpush1.bf16.msra.mxu0 %v767
    %999 = vmatprep.subr.bf16.mxu0 0
    %1000 = vmatpush1.bf16.msra.mxu0 %v768
    %1001 = vmatprep.subr.bf16.mxu0 0
    %1002 = vmatpush1.bf16.msra.mxu0 %v769
    %1003 = vmatprep.subr.bf16.mxu0 0
    %1004 = vmatpush1.bf16.msra.mxu0 %v770
    %1005 = vmatprep.subr.bf16.mxu0 0
    %1006 = vmatpush1.bf16.msra.mxu0 %v771
    %1007 = vmatprep.subr.bf16.mxu0 0
    %1008 = vmatpush1.bf16.msra.mxu0 %v772
    %1009 = vmatprep.subr.bf16.mxu0 0
    %1010 = vmatpush1.bf16.msra.mxu0 %v773
    %1011 = vmatprep.subr.bf16.mxu0 0
    %1012 = vmatpush1.bf16.msra.mxu0 %v774
    %1013 = vmatprep.subr.bf16.mxu0 0
    %1014 = vmatpush1.bf16.msra.mxu0 %v775
    %1015 = vmatprep.subr.bf16.mxu0 0
    %1016 = vmatpush1.bf16.msra.mxu0 %v776
    %1017 = vmatprep.subr.bf16.mxu0 0
    %1018 = vmatpush1.bf16.msra.mxu0 %v777
    %1019 = vmatprep.subr.bf16.mxu0 0
    %1020 = vmatpush1.bf16.msra.mxu0 %v778
    %1021 = vmatprep.subr.bf16.mxu0 0
    %1022 = vmatpush1.bf16.msra.mxu0 %v779
    %1023 = vmatprep.mubr.bf16.mxu0 %v435
    %1024 = vmatmul.mubr.bf16.gmra.mrb[0].mxu0 %v434
    %v1025 = vpop.f32.mrb[0].mxu0
    %v1026 = vadd.f32 %v977, %v1025
    %v1027 = vpop.f32.mrb[0].mxu0
    %v1028 = vpop.f32.mrb[0].mxu0
    %v1029 = vadd.f32 %v980, %v1028
    %v1030 = vpop.f32.mrb[0].mxu0
    %1031 = vmatprep.mubr.bf16.mxu0 %v443
    %1032 = vmatmul.mubr.bf16.gmra.mrb[0].mxu0 %v442
    %v1033 = vpop.f32.mrb[0].mxu0
    %v1034 = vadd.f32 %v985, %v1033
    %v1035 = vpop.f32.mrb[0].mxu0
    %v1036 = vpop.f32.mrb[0].mxu0
    %v1037 = vadd.f32 %v988, %v1036
    %v1038 = vpop.f32.mrb[0].mxu0
    %1039 = vdwg.mxu0
    %s1040 = scalar_lea.vmem %s22, 32
    %1041 = vst [vmem:[%s1040] sm:$0xff] %v1026
    %1042 = vst [vmem:[%s1040 + $0x8] sm:$0xff] %v1029
    %1043 = vst [vmem:[%s1040 + $0x10] sm:$0xff] %v1034
    %1044 = vst [vmem:[%s1040 + $0x18] sm:$0xff] %v1037
    %v1045 = vld [vmem:[%s9] sm:$0xff]
    %v1046 = vld [vmem:[%s9 + $0x8] sm:$0xff]
    %v1047 = vld [vmem:[%s9 + $0x10] sm:$0xff]
    %v1048 = vld [vmem:[%s9 + $0x18] sm:$0xff]
    %v1049 = vld [vmem:[%s9 + $0x20] sm:$0xff]
    %v1050 = vld [vmem:[%s9 + $0x28] sm:$0xff]
    %v1051 = vld [vmem:[%s9 + $0x30] sm:$0xff]
    %v1052 = vld [vmem:[%s9 + $0x38] sm:$0xff]
    %v1053 = vld [vmem:[%s9 + $0x40] sm:$0xff]
    %v1054 = vld [vmem:[%s9 + $0x48] sm:$0xff]
    %v1055 = vld [vmem:[%s9 + $0x50] sm:$0xff]
    %v1056 = vld [vmem:[%s9 + $0x58] sm:$0xff]
    %v1057 = vld [vmem:[%s9 + $0x60] sm:$0xff]
    %v1058 = vld [vmem:[%s9 + $0x68] sm:$0xff]
    %v1059 = vld [vmem:[%s9 + $0x70] sm:$0xff]
    %v1060 = vld [vmem:[%s9 + $0x78] sm:$0xff]
    %v1061 = vld [vmem:[%s16] sm:$0xf]
    %v1062 = vld [vmem:[%s16 + $0x4] sm:$0xf]
    %v1063 = vld [vmem:[%s16 + $0x8] sm:$0xf]
    %v1064 = vld [vmem:[%s16 + $0xc] sm:$0xf]
    %v1065 = vld [vmem:[%s16 + $0x10] sm:$0xf]
    %v1066 = vld [vmem:[%s16 + $0x14] sm:$0xf]
    %v1067 = vld [vmem:[%s16 + $0x18] sm:$0xf]
    %v1068 = vld [vmem:[%s16 + $0x1c] sm:$0xf]
    %v1069 = vld [vmem:[%s16 + $0x20] sm:$0xf]
    %v1070 = vld [vmem:[%s16 + $0x24] sm:$0xf]
    %v1071 = vld [vmem:[%s16 + $0x28] sm:$0xf]
    %v1072 = vld [vmem:[%s16 + $0x2c] sm:$0xf]
    %v1073 = vld [vmem:[%s16 + $0x30] sm:$0xf]
    %v1074 = vld [vmem:[%s16 + $0x34] sm:$0xf]
    %v1075 = vld [vmem:[%s16 + $0x38] sm:$0xf]
    %v1076 = vld [vmem:[%s16 + $0x3c] sm:$0xf]
    %v1077 = vld [vmem:[%s16 + $0x40] sm:$0xf]
    %v1078 = vld [vmem:[%s16 + $0x44] sm:$0xf]
    %v1079 = vld [vmem:[%s16 + $0x48] sm:$0xf]
    %v1080 = vld [vmem:[%s16 + $0x4c] sm:$0xf]
    %v1081 = vld [vmem:[%s16 + $0x50] sm:$0xf]
    %v1082 = vld [vmem:[%s16 + $0x54] sm:$0xf]
    %v1083 = vld [vmem:[%s16 + $0x58] sm:$0xf]
    %v1084 = vld [vmem:[%s16 + $0x5c] sm:$0xf]
    %v1085 = vld [vmem:[%s16 + $0x60] sm:$0xf]
    %v1086 = vld [vmem:[%s16 + $0x64] sm:$0xf]
    %v1087 = vld [vmem:[%s16 + $0x68] sm:$0xf]
    %v1088 = vld [vmem:[%s16 + $0x6c] sm:$0xf]
    %v1089 = vld [vmem:[%s16 + $0x70] sm:$0xf]
    %v1090 = vld [vmem:[%s16 + $0x74] sm:$0xf]
    %v1091 = vld [vmem:[%s16 + $0x78] sm:$0xf]
    %v1092 = vld [vmem:[%s16 + $0x7c] sm:$0xf]
    %v1093 = vld [vmem:[%s16 + $0x80] sm:$0xf]
    %v1094 = vld [vmem:[%s16 + $0x84] sm:$0xf]
    %v1095 = vld [vmem:[%s16 + $0x88] sm:$0xf]
    %v1096 = vld [vmem:[%s16 + $0x8c] sm:$0xf]
    %v1097 = vld [vmem:[%s16 + $0x90] sm:$0xf]
    %v1098 = vld [vmem:[%s16 + $0x94] sm:$0xf]
    %v1099 = vld [vmem:[%s16 + $0x98] sm:$0xf]
    %v1100 = vld [vmem:[%s16 + $0x9c] sm:$0xf]
    %v1101 = vld [vmem:[%s16 + $0xa0] sm:$0xf]
    %v1102 = vld [vmem:[%s16 + $0xa4] sm:$0xf]
    %v1103 = vld [vmem:[%s16 + $0xa8] sm:$0xf]
    %v1104 = vld [vmem:[%s16 + $0xac] sm:$0xf]
    %v1105 = vld [vmem:[%s16 + $0xb0] sm:$0xf]
    %v1106 = vld [vmem:[%s16 + $0xb4] sm:$0xf]
    %v1107 = vld [vmem:[%s16 + $0xb8] sm:$0xf]
    %v1108 = vld [vmem:[%s16 + $0xbc] sm:$0xf]
    %v1109 = vld [vmem:[%s16 + $0xc0] sm:$0xf]
    %v1110 = vld [vmem:[%s16 + $0xc4] sm:$0xf]
    %v1111 = vld [vmem:[%s16 + $0xc8] sm:$0xf]
    %v1112 = vld [vmem:[%s16 + $0xcc] sm:$0xf]
    %v1113 = vld [vmem:[%s16 + $0xd0] sm:$0xf]
    %v1114 = vld [vmem:[%s16 + $0xd4] sm:$0xf]
    %v1115 = vld [vmem:[%s16 + $0xd8] sm:$0xf]
    %v1116 = vld [vmem:[%s16 + $0xdc] sm:$0xf]
    %v1117 = vld [vmem:[%s16 + $0xe0] sm:$0xf]
    %v1118 = vld [vmem:[%s16 + $0xe4] sm:$0xf]
    %v1119 = vld [vmem:[%s16 + $0xe8] sm:$0xf]
    %v1120 = vld [vmem:[%s16 + $0xec] sm:$0xf]
    %v1121 = vld [vmem:[%s16 + $0xf0] sm:$0xf]
    %v1122 = vld [vmem:[%s16 + $0xf4] sm:$0xf]
    %v1123 = vld [vmem:[%s16 + $0xf8] sm:$0xf]
    %v1124 = vld [vmem:[%s16 + $0xfc] sm:$0xf]
    %v1125 = vld [vmem:[%s16 + $0x100] sm:$0xf]
    %v1126 = vld [vmem:[%s16 + $0x104] sm:$0xf]
    %v1127 = vld [vmem:[%s16 + $0x108] sm:$0xf]
    %v1128 = vld [vmem:[%s16 + $0x10c] sm:$0xf]
    %v1129 = vld [vmem:[%s16 + $0x110] sm:$0xf]
    %v1130 = vld [vmem:[%s16 + $0x114] sm:$0xf]
    %v1131 = vld [vmem:[%s16 + $0x118] sm:$0xf]
    %v1132 = vld [vmem:[%s16 + $0x11c] sm:$0xf]
    %v1133 = vld [vmem:[%s16 + $0x120] sm:$0xf]
    %v1134 = vld [vmem:[%s16 + $0x124] sm:$0xf]
    %v1135 = vld [vmem:[%s16 + $0x128] sm:$0xf]
    %v1136 = vld [vmem:[%s16 + $0x12c] sm:$0xf]
    %v1137 = vld [vmem:[%s16 + $0x130] sm:$0xf]
    %v1138 = vld [vmem:[%s16 + $0x134] sm:$0xf]
    %v1139 = vld [vmem:[%s16 + $0x138] sm:$0xf]
    %v1140 = vld [vmem:[%s16 + $0x13c] sm:$0xf]
    %v1141 = vld [vmem:[%s16 + $0x140] sm:$0xf]
    %v1142 = vld [vmem:[%s16 + $0x144] sm:$0xf]
    %v1143 = vld [vmem:[%s16 + $0x148] sm:$0xf]
    %v1144 = vld [vmem:[%s16 + $0x14c] sm:$0xf]
    %v1145 = vld [vmem:[%s16 + $0x150] sm:$0xf]
    %v1146 = vld [vmem:[%s16 + $0x154] sm:$0xf]
    %v1147 = vld [vmem:[%s16 + $0x158] sm:$0xf]
    %v1148 = vld [vmem:[%s16 + $0x15c] sm:$0xf]
    %v1149 = vld [vmem:[%s16 + $0x160] sm:$0xf]
    %v1150 = vld [vmem:[%s16 + $0x164] sm:$0xf]
    %v1151 = vld [vmem:[%s16 + $0x168] sm:$0xf]
    %v1152 = vld [vmem:[%s16 + $0x16c] sm:$0xf]
    %v1153 = vld [vmem:[%s16 + $0x170] sm:$0xf]
    %v1154 = vld [vmem:[%s16 + $0x174] sm:$0xf]
    %v1155 = vld [vmem:[%s16 + $0x178] sm:$0xf]
    %v1156 = vld [vmem:[%s16 + $0x17c] sm:$0xf]
    %v1157 = vld [vmem:[%s16 + $0x180] sm:$0xf]
    %v1158 = vld [vmem:[%s16 + $0x184] sm:$0xf]
    %v1159 = vld [vmem:[%s16 + $0x188] sm:$0xf]
    %v1160 = vld [vmem:[%s16 + $0x18c] sm:$0xf]
    %v1161 = vld [vmem:[%s16 + $0x190] sm:$0xf]
    %v1162 = vld [vmem:[%s16 + $0x194] sm:$0xf]
    %v1163 = vld [vmem:[%s16 + $0x198] sm:$0xf]
    %v1164 = vld [vmem:[%s16 + $0x19c] sm:$0xf]
    %v1165 = vld [vmem:[%s16 + $0x1a0] sm:$0xf]
    %v1166 = vld [vmem:[%s16 + $0x1a4] sm:$0xf]
    %v1167 = vld [vmem:[%s16 + $0x1a8] sm:$0xf]
    %v1168 = vld [vmem:[%s16 + $0x1ac] sm:$0xf]
    %v1169 = vld [vmem:[%s16 + $0x1b0] sm:$0xf]
    %v1170 = vld [vmem:[%s16 + $0x1b4] sm:$0xf]
    %v1171 = vld [vmem:[%s16 + $0x1b8] sm:$0xf]
    %v1172 = vld [vmem:[%s16 + $0x1bc] sm:$0xf]
    %v1173 = vld [vmem:[%s16 + $0x1c0] sm:$0xf]
    %v1174 = vld [vmem:[%s16 + $0x1c4] sm:$0xf]
    %v1175 = vld [vmem:[%s16 + $0x1c8] sm:$0xf]
    %v1176 = vld [vmem:[%s16 + $0x1cc] sm:$0xf]
    %v1177 = vld [vmem:[%s16 + $0x1d0] sm:$0xf]
    %v1178 = vld [vmem:[%s16 + $0x1d4] sm:$0xf]
    %v1179 = vld [vmem:[%s16 + $0x1d8] sm:$0xf]
    %v1180 = vld [vmem:[%s16 + $0x1dc] sm:$0xf]
    %v1181 = vld [vmem:[%s16 + $0x1e0] sm:$0xf]
    %v1182 = vld [vmem:[%s16 + $0x1e4] sm:$0xf]
    %v1183 = vld [vmem:[%s16 + $0x1e8] sm:$0xf]
    %v1184 = vld [vmem:[%s16 + $0x1ec] sm:$0xf]
    %v1185 = vld [vmem:[%s16 + $0x1f0] sm:$0xf]
    %v1186 = vld [vmem:[%s16 + $0x1f4] sm:$0xf]
    %v1187 = vld [vmem:[%s16 + $0x1f8] sm:$0xf]
    %v1188 = vld [vmem:[%s16 + $0x1fc] sm:$0xf]
    %s1189 = scalar_lea.vmem [#allocation7], 2
    %v1190 = vld [vmem:[%s1189] sm:$0x1]
    %v1192 = vlaneseq
    %v1193 = vshrl.u32 %v1192, 7
    %v1194 = vsub.s32 0, %v1193
    %v1195 = vrot.slane %v1190, %v1194
    %v1213 = vunpack.c.l.b16 %v1045
    %v1214 = vunpack.c.h.b16 %v1045
    %v1215 = vunpack.c.l.b16 %v1046
    %v1216 = vunpack.c.h.b16 %v1046
    %v1217 = vunpack.c.l.b16 %v1047
    %v1218 = vunpack.c.h.b16 %v1047
    %v1219 = vunpack.c.l.b16 %v1048
    %v1220 = vunpack.c.h.b16 %v1048
    %v1221 = vunpack.c.l.b16 %v1049
    %v1222 = vunpack.c.h.b16 %v1049
    %v1223 = vunpack.c.l.b16 %v1050
    %v1224 = vunpack.c.h.b16 %v1050
    %v1225 = vunpack.c.l.b16 %v1051
    %v1226 = vunpack.c.h.b16 %v1051
    %v1227 = vunpack.c.l.b16 %v1052
    %v1228 = vunpack.c.h.b16 %v1052
    %v1229 = vunpack.c.l.b16 %v1053
    %v1230 = vunpack.c.h.b16 %v1053
    %v1231 = vunpack.c.l.b16 %v1054
    %v1232 = vunpack.c.h.b16 %v1054
    %v1233 = vunpack.c.l.b16 %v1055
    %v1234 = vunpack.c.h.b16 %v1055
    %v1235 = vunpack.c.l.b16 %v1056
    %v1236 = vunpack.c.h.b16 %v1056
    %v1237 = vunpack.c.l.b16 %v1057
    %v1238 = vunpack.c.h.b16 %v1057
    %v1239 = vunpack.c.l.b16 %v1058
    %v1240 = vunpack.c.h.b16 %v1058
    %v1241 = vunpack.c.l.b16 %v1059
    %v1242 = vunpack.c.h.b16 %v1059
    %v1243 = vunpack.c.l.b16 %v1060
    %v1244 = vunpack.c.h.b16 %v1060
    %v1245 = vpack.c.b16 %v1221, %v1213
    %v1246 = vpack.c.b16 %v1222, %v1214
    %v1247 = vpack.c.b16 %v1223, %v1215
    %v1248 = vpack.c.b16 %v1224, %v1216
    %v1249 = vpack.c.b16 %v1225, %v1217
    %v1250 = vpack.c.b16 %v1226, %v1218
    %v1251 = vpack.c.b16 %v1227, %v1219
    %v1252 = vpack.c.b16 %v1228, %v1220
    %v1253 = vpack.c.b16 %v1237, %v1229
    %v1254 = vpack.c.b16 %v1238, %v1230
    %v1255 = vpack.c.b16 %v1239, %v1231
    %v1256 = vpack.c.b16 %v1240, %v1232
    %v1257 = vpack.c.b16 %v1241, %v1233
    %v1258 = vpack.c.b16 %v1242, %v1234
    %v1259 = vpack.c.b16 %v1243, %v1235
    %v1260 = vpack.c.b16 %v1244, %v1236
    %v1405 = vunpack.c.l.b16 %v1061
    %v1406 = vunpack.c.l.b16 %v1062
    %v1407 = vunpack.c.l.b16 %v1063
    %v1408 = vunpack.c.l.b16 %v1064
    %v1409 = vunpack.c.l.b16 %v1065
    %v1410 = vunpack.c.l.b16 %v1066
    %v1411 = vunpack.c.l.b16 %v1067
    %v1412 = vunpack.c.l.b16 %v1068
    %v1413 = vunpack.c.l.b16 %v1069
    %v1414 = vunpack.c.l.b16 %v1070
    %v1415 = vunpack.c.l.b16 %v1071
    %v1416 = vunpack.c.l.b16 %v1072
    %v1417 = vunpack.c.l.b16 %v1073
    %v1418 = vunpack.c.l.b16 %v1074
    %v1419 = vunpack.c.l.b16 %v1075
    %v1420 = vunpack.c.l.b16 %v1076
    %v1421 = vunpack.c.l.b16 %v1077
    %v1422 = vunpack.c.l.b16 %v1078
    %v1423 = vunpack.c.l.b16 %v1079
    %v1424 = vunpack.c.l.b16 %v1080
    %v1425 = vunpack.c.l.b16 %v1081
    %v1426 = vunpack.c.l.b16 %v1082
    %v1427 = vunpack.c.l.b16 %v1083
    %v1428 = vunpack.c.l.b16 %v1084
    %v1429 = vunpack.c.l.b16 %v1085
    %v1430 = vunpack.c.l.b16 %v1086
    %v1431 = vunpack.c.l.b16 %v1087
    %v1432 = vunpack.c.l.b16 %v1088
    %v1433 = vunpack.c.l.b16 %v1089
    %v1434 = vunpack.c.l.b16 %v1090
    %v1435 = vunpack.c.l.b16 %v1091
    %v1436 = vunpack.c.l.b16 %v1092
    %v1437 = vunpack.c.l.b16 %v1093
    %v1438 = vunpack.c.l.b16 %v1094
    %v1439 = vunpack.c.l.b16 %v1095
    %v1440 = vunpack.c.l.b16 %v1096
    %v1441 = vunpack.c.l.b16 %v1097
    %v1442 = vunpack.c.l.b16 %v1098
    %v1443 = vunpack.c.l.b16 %v1099
    %v1444 = vunpack.c.l.b16 %v1100
    %v1445 = vunpack.c.l.b16 %v1101
    %v1446 = vunpack.c.l.b16 %v1102
    %v1447 = vunpack.c.l.b16 %v1103
    %v1448 = vunpack.c.l.b16 %v1104
    %v1449 = vunpack.c.l.b16 %v1105
    %v1450 = vunpack.c.l.b16 %v1106
    %v1451 = vunpack.c.l.b16 %v1107
    %v1452 = vunpack.c.l.b16 %v1108
    %v1453 = vunpack.c.l.b16 %v1109
    %v1454 = vunpack.c.l.b16 %v1110
    %v1455 = vunpack.c.l.b16 %v1111
    %v1456 = vunpack.c.l.b16 %v1112
    %v1457 = vunpack.c.l.b16 %v1113
    %v1458 = vunpack.c.l.b16 %v1114
    %v1459 = vunpack.c.l.b16 %v1115
    %v1460 = vunpack.c.l.b16 %v1116
    %v1461 = vunpack.c.l.b16 %v1117
    %v1462 = vunpack.c.l.b16 %v1118
    %v1463 = vunpack.c.l.b16 %v1119
    %v1464 = vunpack.c.l.b16 %v1120
    %v1465 = vunpack.c.l.b16 %v1121
    %v1466 = vunpack.c.l.b16 %v1122
    %v1467 = vunpack.c.l.b16 %v1123
    %v1468 = vunpack.c.l.b16 %v1124
    %v1469 = vunpack.c.l.b16 %v1125
    %v1470 = vunpack.c.l.b16 %v1126
    %v1471 = vunpack.c.l.b16 %v1127
    %v1472 = vunpack.c.l.b16 %v1128
    %v1473 = vunpack.c.l.b16 %v1129
    %v1474 = vunpack.c.l.b16 %v1130
    %v1475 = vunpack.c.l.b16 %v1131
    %v1476 = vunpack.c.l.b16 %v1132
    %v1477 = vunpack.c.l.b16 %v1133
    %v1478 = vunpack.c.l.b16 %v1134
    %v1479 = vunpack.c.l.b16 %v1135
    %v1480 = vunpack.c.l.b16 %v1136
    %v1481 = vunpack.c.l.b16 %v1137
    %v1482 = vunpack.c.l.b16 %v1138
    %v1483 = vunpack.c.l.b16 %v1139
    %v1484 = vunpack.c.l.b16 %v1140
    %v1485 = vunpack.c.l.b16 %v1141
    %v1486 = vunpack.c.l.b16 %v1142
    %v1487 = vunpack.c.l.b16 %v1143
    %v1488 = vunpack.c.l.b16 %v1144
    %v1489 = vunpack.c.l.b16 %v1145
    %v1490 = vunpack.c.l.b16 %v1146
    %v1491 = vunpack.c.l.b16 %v1147
    %v1492 = vunpack.c.l.b16 %v1148
    %v1493 = vunpack.c.l.b16 %v1149
    %v1494 = vunpack.c.l.b16 %v1150
    %v1495 = vunpack.c.l.b16 %v1151
    %v1496 = vunpack.c.l.b16 %v1152
    %v1497 = vunpack.c.l.b16 %v1153
    %v1498 = vunpack.c.l.b16 %v1154
    %v1499 = vunpack.c.l.b16 %v1155
    %v1500 = vunpack.c.l.b16 %v1156
    %v1501 = vunpack.c.l.b16 %v1157
    %v1502 = vunpack.c.l.b16 %v1158
    %v1503 = vunpack.c.l.b16 %v1159
    %v1504 = vunpack.c.l.b16 %v1160
    %v1505 = vunpack.c.l.b16 %v1161
    %v1506 = vunpack.c.l.b16 %v1162
    %v1507 = vunpack.c.l.b16 %v1163
    %v1508 = vunpack.c.l.b16 %v1164
    %v1509 = vunpack.c.l.b16 %v1165
    %v1510 = vunpack.c.l.b16 %v1166
    %v1511 = vunpack.c.l.b16 %v1167
    %v1512 = vunpack.c.l.b16 %v1168
    %v1513 = vunpack.c.l.b16 %v1169
    %v1514 = vunpack.c.l.b16 %v1170
    %v1515 = vunpack.c.l.b16 %v1171
    %v1516 = vunpack.c.l.b16 %v1172
    %v1517 = vunpack.c.l.b16 %v1173
    %v1518 = vunpack.c.l.b16 %v1174
    %v1519 = vunpack.c.l.b16 %v1175
    %v1520 = vunpack.c.l.b16 %v1176
    %v1521 = vunpack.c.l.b16 %v1177
    %v1522 = vunpack.c.l.b16 %v1178
    %v1523 = vunpack.c.l.b16 %v1179
    %v1524 = vunpack.c.l.b16 %v1180
    %v1525 = vunpack.c.l.b16 %v1181
    %v1526 = vunpack.c.l.b16 %v1182
    %v1527 = vunpack.c.l.b16 %v1183
    %v1528 = vunpack.c.l.b16 %v1184
    %v1529 = vunpack.c.l.b16 %v1185
    %v1530 = vunpack.c.l.b16 %v1186
    %v1531 = vunpack.c.l.b16 %v1187
    %v1532 = vunpack.c.l.b16 %v1188
    %v1533 = vpack.c.b16 %v1406, %v1405
    %v1534 = vpack.c.b16 %v1408, %v1407
    %v1535 = vpack.c.b16 %v1410, %v1409
    %v1536 = vpack.c.b16 %v1412, %v1411
    %v1537 = vpack.c.b16 %v1414, %v1413
    %v1538 = vpack.c.b16 %v1416, %v1415
    %v1539 = vpack.c.b16 %v1418, %v1417
    %v1540 = vpack.c.b16 %v1420, %v1419
    %v1541 = vpack.c.b16 %v1422, %v1421
    %v1542 = vpack.c.b16 %v1424, %v1423
    %v1543 = vpack.c.b16 %v1426, %v1425
    %v1544 = vpack.c.b16 %v1428, %v1427
    %v1545 = vpack.c.b16 %v1430, %v1429
    %v1546 = vpack.c.b16 %v1432, %v1431
    %v1547 = vpack.c.b16 %v1434, %v1433
    %v1548 = vpack.c.b16 %v1436, %v1435
    %v1549 = vpack.c.b16 %v1438, %v1437
    %v1550 = vpack.c.b16 %v1440, %v1439
    %v1551 = vpack.c.b16 %v1442, %v1441
    %v1552 = vpack.c.b16 %v1444, %v1443
    %v1553 = vpack.c.b16 %v1446, %v1445
    %v1554 = vpack.c.b16 %v1448, %v1447
    %v1555 = vpack.c.b16 %v1450, %v1449
    %v1556 = vpack.c.b16 %v1452, %v1451
    %v1557 = vpack.c.b16 %v1454, %v1453
    %v1558 = vpack.c.b16 %v1456, %v1455
    %v1559 = vpack.c.b16 %v1458, %v1457
    %v1560 = vpack.c.b16 %v1460, %v1459
    %v1561 = vpack.c.b16 %v1462, %v1461
    %v1562 = vpack.c.b16 %v1464, %v1463
    %v1563 = vpack.c.b16 %v1466, %v1465
    %v1564 = vpack.c.b16 %v1468, %v1467
    %v1565 = vpack.c.b16 %v1470, %v1469
    %v1566 = vpack.c.b16 %v1472, %v1471
    %v1567 = vpack.c.b16 %v1474, %v1473
    %v1568 = vpack.c.b16 %v1476, %v1475
    %v1569 = vpack.c.b16 %v1478, %v1477
    %v1570 = vpack.c.b16 %v1480, %v1479
    %v1571 = vpack.c.b16 %v1482, %v1481
    %v1572 = vpack.c.b16 %v1484, %v1483
    %v1573 = vpack.c.b16 %v1486, %v1485
    %v1574 = vpack.c.b16 %v1488, %v1487
    %v1575 = vpack.c.b16 %v1490, %v1489
    %v1576 = vpack.c.b16 %v1492, %v1491
    %v1577 = vpack.c.b16 %v1494, %v1493
    %v1578 = vpack.c.b16 %v1496, %v1495
    %v1579 = vpack.c.b16 %v1498, %v1497
    %v1580 = vpack.c.b16 %v1500, %v1499
    %v1581 = vpack.c.b16 %v1502, %v1501
    %v1582 = vpack.c.b16 %v1504, %v1503
    %v1583 = vpack.c.b16 %v1506, %v1505
    %v1584 = vpack.c.b16 %v1508, %v1507
    %v1585 = vpack.c.b16 %v1510, %v1509
    %v1586 = vpack.c.b16 %v1512, %v1511
    %v1587 = vpack.c.b16 %v1514, %v1513
    %v1588 = vpack.c.b16 %v1516, %v1515
    %v1589 = vpack.c.b16 %v1518, %v1517
    %v1590 = vpack.c.b16 %v1520, %v1519
    %v1591 = vpack.c.b16 %v1522, %v1521
    %v1592 = vpack.c.b16 %v1524, %v1523
    %v1593 = vpack.c.b16 %v1526, %v1525
    %v1594 = vpack.c.b16 %v1528, %v1527
    %v1595 = vpack.c.b16 %v1530, %v1529
    %v1596 = vpack.c.b16 %v1532, %v1531
    %1661 = vmatprep.subr.bf16.mxu0 0
    %1662 = vmatpush1.bf16.msra.mxu0 %v1533
    %1663 = vmatprep.subr.bf16.mxu0 0
    %1664 = vmatpush1.bf16.msra.mxu0 %v1534
    %1665 = vmatprep.subr.bf16.mxu0 0
    %1666 = vmatpush1.bf16.msra.mxu0 %v1535
    %1667 = vmatprep.subr.bf16.mxu0 0
    %1668 = vmatpush1.bf16.msra.mxu0 %v1536
    %1669 = vmatprep.subr.bf16.mxu0 0
    %1670 = vmatpush1.bf16.msra.mxu0 %v1537
    %1671 = vmatprep.subr.bf16.mxu0 0
    %1672 = vmatpush1.bf16.msra.mxu0 %v1538
    %1673 = vmatprep.subr.bf16.mxu0 0
    %1674 = vmatpush1.bf16.msra.mxu0 %v1539
    %1675 = vmatprep.subr.bf16.mxu0 0
    %1676 = vmatpush1.bf16.msra.mxu0 %v1540
    %1677 = vmatprep.subr.bf16.mxu0 0
    %1678 = vmatpush1.bf16.msra.mxu0 %v1541
    %1679 = vmatprep.subr.bf16.mxu0 0
    %1680 = vmatpush1.bf16.msra.mxu0 %v1542
    %1681 = vmatprep.subr.bf16.mxu0 0
    %1682 = vmatpush1.bf16.msra.mxu0 %v1543
    %1683 = vmatprep.subr.bf16.mxu0 0
    %1684 = vmatpush1.bf16.msra.mxu0 %v1544
    %1685 = vmatprep.subr.bf16.mxu0 0
    %1686 = vmatpush1.bf16.msra.mxu0 %v1545
    %1687 = vmatprep.subr.bf16.mxu0 0
    %1688 = vmatpush1.bf16.msra.mxu0 %v1546
    %1689 = vmatprep.subr.bf16.mxu0 0
    %1690 = vmatpush1.bf16.msra.mxu0 %v1547
    %1691 = vmatprep.subr.bf16.mxu0 0
    %1692 = vmatpush1.bf16.msra.mxu0 %v1548
    %1693 = vmatprep.mubr.bf16.mxu0 %v1246
    %1694 = vmatmul.mubr.bf16.gmra.mrb[0].mxu0 %v1245
    %v1695 = vpop.f32.mrb[0].mxu0
    %v1696 = vadd.f32 %v1195, %v1695
    %v1697 = vpop.f32.mrb[0].mxu0
    %v1698 = vpop.f32.mrb[0].mxu0
    %v1699 = vadd.f32 %v1195, %v1698
    %v1700 = vpop.f32.mrb[0].mxu0
    %1701 = vmatprep.mubr.bf16.mxu0 %v1254
    %1702 = vmatmul.mubr.bf16.gmra.mrb[0].mxu0 %v1253
    %v1703 = vpop.f32.mrb[0].mxu0
    %v1704 = vadd.f32 %v1195, %v1703
    %v1705 = vpop.f32.mrb[0].mxu0
    %v1706 = vpop.f32.mrb[0].mxu0
    %v1707 = vadd.f32 %v1195, %v1706
    %v1708 = vpop.f32.mrb[0].mxu0
    %1709 = vdwg.mxu0
    %1710 = vmatprep.subr.bf16.mxu0 0
    %1711 = vmatpush1.bf16.msra.mxu0 %v1549
    %1712 = vmatprep.subr.bf16.mxu0 0
    %1713 = vmatpush1.bf16.msra.mxu0 %v1550
    %1714 = vmatprep.subr.bf16.mxu0 0
    %1715 = vmatpush1.bf16.msra.mxu0 %v1551
    %1716 = vmatprep.subr.bf16.mxu0 0
    %1717 = vmatpush1.bf16.msra.mxu0 %v1552
    %1718 = vmatprep.subr.bf16.mxu0 0
    %1719 = vmatpush1.bf16.msra.mxu0 %v1553
    %1720 = vmatprep.subr.bf16.mxu0 0
    %1721 = vmatpush1.bf16.msra.mxu0 %v1554
    %1722 = vmatprep.subr.bf16.mxu0 0
    %1723 = vmatpush1.bf16.msra.mxu0 %v1555
    %1724 = vmatprep.subr.bf16.mxu0 0
    %1725 = vmatpush1.bf16.msra.mxu0 %v1556
    %1726 = vmatprep.subr.bf16.mxu0 0
    %1727 = vmatpush1.bf16.msra.mxu0 %v1557
    %1728 = vmatprep.subr.bf16.mxu0 0
    %1729 = vmatpush1.bf16.msra.mxu0 %v1558
    %1730 = vmatprep.subr.bf16.mxu0 0
    %1731 = vmatpush1.bf16.msra.mxu0 %v1559
    %1732 = vmatprep.subr.bf16.mxu0 0
    %1733 = vmatpush1.bf16.msra.mxu0 %v1560
    %1734 = vmatprep.subr.bf16.mxu0 0
    %1735 = vmatpush1.bf16.msra.mxu0 %v1561
    %1736 = vmatprep.subr.bf16.mxu0 0
    %1737 = vmatpush1.bf16.msra.mxu0 %v1562
    %1738 = vmatprep.subr.bf16.mxu0 0
    %1739 = vmatpush1.bf16.msra.mxu0 %v1563
    %1740 = vmatprep.subr.bf16.mxu0 0
    %1741 = vmatpush1.bf16.msra.mxu0 %v1564
    %1742 = vmatprep.mubr.bf16.mxu0 %v1248
    %1743 = vmatmul.mubr.bf16.gmra.mrb[0].mxu0 %v1247
    %v1744 = vpop.f32.mrb[0].mxu0
    %v1745 = vadd.f32 %v1696, %v1744
    %v1746 = vpop.f32.mrb[0].mxu0
    %v1747 = vpop.f32.mrb[0].mxu0
    %v1748 = vadd.f32 %v1699, %v1747
    %v1749 = vpop.f32.mrb[0].mxu0
    %1750 = vmatprep.mubr.bf16.mxu0 %v1256
    %1751 = vmatmul.mubr.bf16.gmra.mrb[0].mxu0 %v1255
    %v1752 = vpop.f32.mrb[0].mxu0
    %v1753 = vadd.f32 %v1704, %v1752
    %v1754 = vpop.f32.mrb[0].mxu0
    %v1755 = vpop.f32.mrb[0].mxu0
    %v1756 = vadd.f32 %v1707, %v1755
    %v1757 = vpop.f32.mrb[0].mxu0
    %1758 = vdwg.mxu0
    %1759 = vmatprep.subr.bf16.mxu0 0
    %1760 = vmatpush1.bf16.msra.mxu0 %v1565
    %1761 = vmatprep.subr.bf16.mxu0 0
    %1762 = vmatpush1.bf16.msra.mxu0 %v1566
    %1763 = vmatprep.subr.bf16.mxu0 0
    %1764 = vmatpush1.bf16.msra.mxu0 %v1567
    %1765 = vmatprep.subr.bf16.mxu0 0
    %1766 = vmatpush1.bf16.msra.mxu0 %v1568
    %1767 = vmatprep.subr.bf16.mxu0 0
    %1768 = vmatpush1.bf16.msra.mxu0 %v1569
    %1769 = vmatprep.subr.bf16.mxu0 0
    %1770 = vmatpush1.bf16.msra.mxu0 %v1570
    %1771 = vmatprep.subr.bf16.mxu0 0
    %1772 = vmatpush1.bf16.msra.mxu0 %v1571
    %1773 = vmatprep.subr.bf16.mxu0 0
    %1774 = vmatpush1.bf16.msra.mxu0 %v1572
    %1775 = vmatprep.subr.bf16.mxu0 0
    %1776 = vmatpush1.bf16.msra.mxu0 %v1573
    %1777 = vmatprep.subr.bf16.mxu0 0
    %1778 = vmatpush1.bf16.msra.mxu0 %v1574
    %1779 = vmatprep.subr.bf16.mxu0 0
    %1780 = vmatpush1.bf16.msra.mxu0 %v1575
    %1781 = vmatprep.subr.bf16.mxu0 0
    %1782 = vmatpush1.bf16.msra.mxu0 %v1576
    %1783 = vmatprep.subr.bf16.mxu0 0
    %1784 = vmatpush1.bf16.msra.mxu0 %v1577
    %1785 = vmatprep.subr.bf16.mxu0 0
    %1786 = vmatpush1.bf16.msra.mxu0 %v1578
    %1787 = vmatprep.subr.bf16.mxu0 0
    %1788 = vmatpush1.bf16.msra.mxu0 %v1579
    %1789 = vmatprep.subr.bf16.mxu0 0
    %1790 = vmatpush1.bf16.msra.mxu0 %v1580
    %1791 = vmatprep.mubr.bf16.mxu0 %v1250
    %1792 = vmatmul.mubr.bf16.gmra.mrb[0].mxu0 %v1249
    %v1793 = vpop.f32.mrb[0].mxu0
    %v1794 = vadd.f32 %v1745, %v1793
    %v1795 = vpop.f32.mrb[0].mxu0
    %v1796 = vpop.f32.mrb[0].mxu0
    %v1797 = vadd.f32 %v1748, %v1796
    %v1798 = vpop.f32.mrb[0].mxu0
    %1799 = vmatprep.mubr.bf16.mxu0 %v1258
    %1800 = vmatmul.mubr.bf16.gmra.mrb[0].mxu0 %v1257
    %v1801 = vpop.f32.mrb[0].mxu0
    %v1802 = vadd.f32 %v1753, %v1801
    %v1803 = vpop.f32.mrb[0].mxu0
    %v1804 = vpop.f32.mrb[0].mxu0
    %v1805 = vadd.f32 %v1756, %v1804
    %v1806 = vpop.f32.mrb[0].mxu0
    %1807 = vdwg.mxu0
    %1808 = vmatprep.subr.bf16.mxu0 0
    %1809 = vmatpush1.bf16.msra.mxu0 %v1581
    %1810 = vmatprep.subr.bf16.mxu0 0
    %1811 = vmatpush1.bf16.msra.mxu0 %v1582
    %1812 = vmatprep.subr.bf16.mxu0 0
    %1813 = vmatpush1.bf16.msra.mxu0 %v1583
    %1814 = vmatprep.subr.bf16.mxu0 0
    %1815 = vmatpush1.bf16.msra.mxu0 %v1584
    %1816 = vmatprep.subr.bf16.mxu0 0
    %1817 = vmatpush1.bf16.msra.mxu0 %v1585
    %1818 = vmatprep.subr.bf16.mxu0 0
    %1819 = vmatpush1.bf16.msra.mxu0 %v1586
    %1820 = vmatprep.subr.bf16.mxu0 0
    %1821 = vmatpush1.bf16.msra.mxu0 %v1587
    %1822 = vmatprep.subr.bf16.mxu0 0
    %1823 = vmatpush1.bf16.msra.mxu0 %v1588
    %1824 = vmatprep.subr.bf16.mxu0 0
    %1825 = vmatpush1.bf16.msra.mxu0 %v1589
    %1826 = vmatprep.subr.bf16.mxu0 0
    %1827 = vmatpush1.bf16.msra.mxu0 %v1590
    %1828 = vmatprep.subr.bf16.mxu0 0
    %1829 = vmatpush1.bf16.msra.mxu0 %v1591
    %1830 = vmatprep.subr.bf16.mxu0 0
    %1831 = vmatpush1.bf16.msra.mxu0 %v1592
    %1832 = vmatprep.subr.bf16.mxu0 0
    %1833 = vmatpush1.bf16.msra.mxu0 %v1593
    %1834 = vmatprep.subr.bf16.mxu0 0
    %1835 = vmatpush1.bf16.msra.mxu0 %v1594
    %1836 = vmatprep.subr.bf16.mxu0 0
    %1837 = vmatpush1.bf16.msra.mxu0 %v1595
    %1838 = vmatprep.subr.bf16.mxu0 0
    %1839 = vmatpush1.bf16.msra.mxu0 %v1596
    %1840 = vmatprep.mubr.bf16.mxu0 %v1252
    %1841 = vmatmul.mubr.bf16.gmra.mrb[0].mxu0 %v1251
    %v1842 = vpop.f32.mrb[0].mxu0
    %v1843 = vadd.f32 %v1794, %v1842
    %v1844 = vpop.f32.mrb[0].mxu0
    %v1845 = vpop.f32.mrb[0].mxu0
    %v1846 = vadd.f32 %v1797, %v1845
    %v1847 = vpop.f32.mrb[0].mxu0
    %1848 = vmatprep.mubr.bf16.mxu0 %v1260
    %1849 = vmatmul.mubr.bf16.gmra.mrb[0].mxu0 %v1259
    %v1850 = vpop.f32.mrb[0].mxu0
    %v1851 = vadd.f32 %v1802, %v1850
    %v1852 = vpop.f32.mrb[0].mxu0
    %v1853 = vpop.f32.mrb[0].mxu0
    %v1854 = vadd.f32 %v1805, %v1853
    %v1855 = vpop.f32.mrb[0].mxu0
    %1856 = vdwg.mxu0
    %s1857 = scalar_lea.vmem %s22, 64
    %1858 = vst [vmem:[%s1857] sm:$0xff] %v1843
    %1859 = vst [vmem:[%s1857 + $0x8] sm:$0xff] %v1846
    %1860 = vst [vmem:[%s1857 + $0x10] sm:$0xff] %v1851
    %1861 = vst [vmem:[%s1857 + $0x18] sm:$0xff] %v1854
    %v1862 = vld [vmem:[%s10] sm:$0xff]
    %v1863 = vld [vmem:[%s10 + $0x8] sm:$0xf]
    %v1864 = vld [vmem:[%s10 + $0xc] sm:$0xff]
    %v1865 = vld [vmem:[%s10 + $0x14] sm:$0xf]
    %v1866 = vld [vmem:[%s10 + $0x18] sm:$0xff]
    %v1867 = vld [vmem:[%s10 + $0x20] sm:$0xf]
    %v1868 = vld [vmem:[%s10 + $0x24] sm:$0xff]
    %v1869 = vld [vmem:[%s10 + $0x2c] sm:$0xf]
    %v1870 = vld [vmem:[%s17] sm:$0xf]
    %v1871 = vld [vmem:[%s17 + $0x4] sm:$0xf]
    %v1872 = vld [vmem:[%s17 + $0x8] sm:$0xf]
    %v1873 = vld [vmem:[%s17 + $0xc] sm:$0xf]
    %v1874 = vld [vmem:[%s17 + $0x10] sm:$0xf]
    %v1875 = vld [vmem:[%s17 + $0x14] sm:$0xf]
    %v1876 = vld [vmem:[%s17 + $0x18] sm:$0xf]
    %v1877 = vld [vmem:[%s17 + $0x1c] sm:$0xf]
    %v1878 = vld [vmem:[%s17 + $0x20] sm:$0xf]
    %v1879 = vld [vmem:[%s17 + $0x24] sm:$0xf]
    %v1880 = vld [vmem:[%s17 + $0x28] sm:$0xf]
    %v1881 = vld [vmem:[%s17 + $0x2c] sm:$0xf]
    %v1882 = vld [vmem:[%s17 + $0x30] sm:$0xf]
    %v1883 = vld [vmem:[%s17 + $0x34] sm:$0xf]
    %v1884 = vld [vmem:[%s17 + $0x38] sm:$0xf]
    %v1885 = vld [vmem:[%s17 + $0x3c] sm:$0xf]
    %v1886 = vld [vmem:[%s17 + $0x40] sm:$0xf]
    %v1887 = vld [vmem:[%s17 + $0x44] sm:$0xf]
    %v1888 = vld [vmem:[%s17 + $0x48] sm:$0xf]
    %v1889 = vld [vmem:[%s17 + $0x4c] sm:$0xf]
    %v1890 = vld [vmem:[%s17 + $0x50] sm:$0xf]
    %v1891 = vld [vmem:[%s17 + $0x54] sm:$0xf]
    %v1892 = vld [vmem:[%s17 + $0x58] sm:$0xf]
    %v1893 = vld [vmem:[%s17 + $0x5c] sm:$0xf]
    %v1894 = vld [vmem:[%s17 + $0x60] sm:$0xf]
    %v1895 = vld [vmem:[%s17 + $0x64] sm:$0xf]
    %v1896 = vld [vmem:[%s17 + $0x68] sm:$0xf]
    %v1897 = vld [vmem:[%s17 + $0x6c] sm:$0xf]
    %v1898 = vld [vmem:[%s17 + $0x70] sm:$0xf]
    %v1899 = vld [vmem:[%s17 + $0x74] sm:$0xf]
    %v1900 = vld [vmem:[%s17 + $0x78] sm:$0xf]
    %v1901 = vld [vmem:[%s17 + $0x7c] sm:$0xf]
    %v1902 = vld [vmem:[%s17 + $0x80] sm:$0xf]
    %v1903 = vld [vmem:[%s17 + $0x84] sm:$0xf]
    %v1904 = vld [vmem:[%s17 + $0x88] sm:$0xf]
    %v1905 = vld [vmem:[%s17 + $0x8c] sm:$0xf]
    %v1906 = vld [vmem:[%s17 + $0x90] sm:$0xf]
    %v1907 = vld [vmem:[%s17 + $0x94] sm:$0xf]
    %v1908 = vld [vmem:[%s17 + $0x98] sm:$0xf]
    %v1909 = vld [vmem:[%s17 + $0x9c] sm:$0xf]
    %v1910 = vld [vmem:[%s17 + $0xa0] sm:$0xf]
    %v1911 = vld [vmem:[%s17 + $0xa4] sm:$0xf]
    %v1912 = vld [vmem:[%s17 + $0xa8] sm:$0xf]
    %v1913 = vld [vmem:[%s17 + $0xac] sm:$0xf]
    %v1914 = vld [vmem:[%s17 + $0xb0] sm:$0xf]
    %v1915 = vld [vmem:[%s17 + $0xb4] sm:$0xf]
    %v1916 = vld [vmem:[%s17 + $0xb8] sm:$0xf]
    %v1917 = vld [vmem:[%s17 + $0xbc] sm:$0xf]
    %s1918 = scalar_lea.vmem [#allocation7], 3
    %v1919 = vld [vmem:[%s1918] sm:$0x1]
    %v1921 = vlaneseq
    %v1922 = vshrl.u32 %v1921, 7
    %v1923 = vsub.s32 0, %v1922
    %v1924 = vrot.slane %v1919, %v1923
    %v1934 = vunpack.c.l.b16 %v1862
    %v1935 = vunpack.c.h.b16 %v1862
    %v1936 = vunpack.c.l.b16 %v1863
    %v1937 = vunpack.c.l.b16 %v1864
    %v1938 = vunpack.c.h.b16 %v1864
    %v1939 = vunpack.c.l.b16 %v1865
    %v1940 = vunpack.c.l.b16 %v1866
    %v1941 = vunpack.c.h.b16 %v1866
    %v1942 = vunpack.c.l.b16 %v1867
    %v1943 = vunpack.c.l.b16 %v1868
    %v1944 = vunpack.c.h.b16 %v1868
    %v1945 = vunpack.c.l.b16 %v1869
    %v1946 = vpack.c.b16 %v1937, %v1934
    %v1947 = vpack.c.b16 %v1938, %v1935
    %v1948 = vpack.c.b16 %v1939, %v1936
    %v1949 = vpack.c.b16 %v1943, %v1940
    %v1950 = vpack.c.b16 %v1944, %v1941
    %v1951 = vpack.c.b16 %v1945, %v1942
    %v2006 = vunpack.c.l.b16 %v1870
    %v2007 = vunpack.c.l.b16 %v1871
    %v2008 = vunpack.c.l.b16 %v1872
    %v2009 = vunpack.c.l.b16 %v1873
    %v2010 = vunpack.c.l.b16 %v1874
    %v2011 = vunpack.c.l.b16 %v1875
    %v2012 = vunpack.c.l.b16 %v1876
    %v2013 = vunpack.c.l.b16 %v1877
    %v2014 = vunpack.c.l.b16 %v1878
    %v2015 = vunpack.c.l.b16 %v1879
    %v2016 = vunpack.c.l.b16 %v1880
    %v2017 = vunpack.c.l.b16 %v1881
    %v2018 = vunpack.c.l.b16 %v1882
    %v2019 = vunpack.c.l.b16 %v1883
    %v2020 = vunpack.c.l.b16 %v1884
    %v2021 = vunpack.c.l.b16 %v1885
    %v2022 = vunpack.c.l.b16 %v1886
    %v2023 = vunpack.c.l.b16 %v1887
    %v2024 = vunpack.c.l.b16 %v1888
    %v2025 = vunpack.c.l.b16 %v1889
    %v2026 = vunpack.c.l.b16 %v1890
    %v2027 = vunpack.c.l.b16 %v1891
    %v2028 = vunpack.c.l.b16 %v1892
    %v2029 = vunpack.c.l.b16 %v1893
    %v2030 = vunpack.c.l.b16 %v1894
    %v2031 = vunpack.c.l.b16 %v1895
    %v2032 = vunpack.c.l.b16 %v1896
    %v2033 = vunpack.c.l.b16 %v1897
    %v2034 = vunpack.c.l.b16 %v1898
    %v2035 = vunpack.c.l.b16 %v1899
    %v2036 = vunpack.c.l.b16 %v1900
    %v2037 = vunpack.c.l.b16 %v1901
    %v2038 = vunpack.c.l.b16 %v1902
    %v2039 = vunpack.c.l.b16 %v1903
    %v2040 = vunpack.c.l.b16 %v1904
    %v2041 = vunpack.c.l.b16 %v1905
    %v2042 = vunpack.c.l.b16 %v1906
    %v2043 = vunpack.c.l.b16 %v1907
    %v2044 = vunpack.c.l.b16 %v1908
    %v2045 = vunpack.c.l.b16 %v1909
    %v2046 = vunpack.c.l.b16 %v1910
    %v2047 = vunpack.c.l.b16 %v1911
    %v2048 = vunpack.c.l.b16 %v1912
    %v2049 = vunpack.c.l.b16 %v1913
    %v2050 = vunpack.c.l.b16 %v1914
    %v2051 = vunpack.c.l.b16 %v1915
    %v2052 = vunpack.c.l.b16 %v1916
    %v2053 = vunpack.c.l.b16 %v1917
    %v2054 = vpack.c.b16 %v2007, %v2006
    %v2055 = vpack.c.b16 %v2009, %v2008
    %v2056 = vpack.c.b16 %v2011, %v2010
    %v2057 = vpack.c.b16 %v2013, %v2012
    %v2058 = vpack.c.b16 %v2015, %v2014
    %v2059 = vpack.c.b16 %v2017, %v2016
    %v2060 = vpack.c.b16 %v2019, %v2018
    %v2061 = vpack.c.b16 %v2021, %v2020
    %v2062 = vpack.c.b16 %v2023, %v2022
    %v2063 = vpack.c.b16 %v2025, %v2024
    %v2064 = vpack.c.b16 %v2027, %v2026
    %v2065 = vpack.c.b16 %v2029, %v2028
    %v2066 = vpack.c.b16 %v2031, %v2030
    %v2067 = vpack.c.b16 %v2033, %v2032
    %v2068 = vpack.c.b16 %v2035, %v2034
    %v2069 = vpack.c.b16 %v2037, %v2036
    %v2070 = vpack.c.b16 %v2039, %v2038
    %v2071 = vpack.c.b16 %v2041, %v2040
    %v2072 = vpack.c.b16 %v2043, %v2042
    %v2073 = vpack.c.b16 %v2045, %v2044
    %v2074 = vpack.c.b16 %v2047, %v2046
    %v2075 = vpack.c.b16 %v2049, %v2048
    %v2076 = vpack.c.b16 %v2051, %v2050
    %v2077 = vpack.c.b16 %v2053, %v2052
    %2102 = vmatprep.subr.bf16.mxu0 0
    %2103 = vmatpush1.bf16.msra.mxu0 %v2054
    %2104 = vmatprep.subr.bf16.mxu0 0
    %2105 = vmatpush1.bf16.msra.mxu0 %v2055
    %2106 = vmatprep.subr.bf16.mxu0 0
    %2107 = vmatpush1.bf16.msra.mxu0 %v2056
    %2108 = vmatprep.subr.bf16.mxu0 0
    %2109 = vmatpush1.bf16.msra.mxu0 %v2057
    %2110 = vmatprep.subr.bf16.mxu0 0
    %2111 = vmatpush1.bf16.msra.mxu0 %v2058
    %2112 = vmatprep.subr.bf16.mxu0 0
    %2113 = vmatpush1.bf16.msra.mxu0 %v2059
    %2114 = vmatprep.subr.bf16.mxu0 0
    %2115 = vmatpush1.bf16.msra.mxu0 %v2060
    %2116 = vmatprep.subr.bf16.mxu0 0
    %2117 = vmatpush1.bf16.msra.mxu0 %v2061
    %2118 = vmatprep.subr.bf16.mxu0 0
    %2119 = vmatpush1.bf16.msra.mxu0 %v2062
    %2120 = vmatprep.subr.bf16.mxu0 0
    %2121 = vmatpush1.bf16.msra.mxu0 %v2063
    %2122 = vmatprep.subr.bf16.mxu0 0
    %2123 = vmatpush1.bf16.msra.mxu0 %v2064
    %2124 = vmatprep.subr.bf16.mxu0 0
    %2125 = vmatpush1.bf16.msra.mxu0 %v2065
    %2126 = vmatprep.subr.bf16.mxu0 0
    %2127 = vmatpush1.bf16.msra.mxu0 %v2066
    %2128 = vmatprep.subr.bf16.mxu0 0
    %2129 = vmatpush1.bf16.msra.mxu0 %v2067
    %2130 = vmatprep.subr.bf16.mxu0 0
    %2131 = vmatpush1.bf16.msra.mxu0 %v2068
    %2132 = vmatprep.subr.bf16.mxu0 0
    %2133 = vmatpush1.bf16.msra.mxu0 %v2069
    %2134 = vmatprep.mubr.bf16.mxu0 %v1947
    %2135 = vmatmul.mubr.bf16.gmra.mrb[0].mxu0 %v1946
    %v2136 = vpop.f32.mrb[0].mxu0
    %v2137 = vadd.f32 %v1924, %v2136
    %v2138 = vpop.f32.mrb[0].mxu0
    %v2139 = vpop.f32.mrb[0].mxu0
    %v2140 = vadd.f32 %v1924, %v2139
    %v2141 = vpop.f32.mrb[0].mxu0
    %2142 = vmatprep.mubr.bf16.mxu0 %v1950
    %2143 = vmatmul.mubr.bf16.gmra.mrb[0].mxu0 %v1949
    %v2144 = vpop.f32.mrb[0].mxu0
    %v2145 = vadd.f32 %v1924, %v2144
    %v2146 = vpop.f32.mrb[0].mxu0
    %v2147 = vpop.f32.mrb[0].mxu0
    %v2148 = vadd.f32 %v1924, %v2147
    %v2149 = vpop.f32.mrb[0].mxu0
    %2150 = vdwg.mxu0
    %2151 = vmatprep.subr.bf16.mxu0 0
    %2152 = vmatpush1.bf16.msra.mxu0 %v2070
    %2153 = vmatprep.subr.bf16.mxu0 0
    %2154 = vmatpush1.bf16.msra.mxu0 %v2071
    %2155 = vmatprep.subr.bf16.mxu0 0
    %2156 = vmatpush1.bf16.msra.mxu0 %v2072
    %2157 = vmatprep.subr.bf16.mxu0 0
    %2158 = vmatpush1.bf16.msra.mxu0 %v2073
    %2159 = vmatprep.subr.bf16.mxu0 0
    %2160 = vmatpush1.bf16.msra.mxu0 %v2074
    %2161 = vmatprep.subr.bf16.mxu0 0
    %2162 = vmatpush1.bf16.msra.mxu0 %v2075
    %2163 = vmatprep.subr.bf16.mxu0 0
    %2164 = vmatpush1.bf16.msra.mxu0 %v2076
    %2165 = vmatprep.subr.bf16.mxu0 0
    %2166 = vmatpush1.bf16.msra.mxu0 %v2077
    %2167 = vmatprep.subr.bf16.mxu0 0
    %2168 = vmatpush1.bf16.msra.mxu0 0
    %2169 = vmatprep.subr.bf16.mxu0 0
    %2170 = vmatpush1.bf16.msra.mxu0 0
    %2171 = vmatprep.subr.bf16.mxu0 0
    %2172 = vmatpush1.bf16.msra.mxu0 0
    %2173 = vmatprep.subr.bf16.mxu0 0
    %2174 = vmatpush1.bf16.msra.mxu0 0
    %2175 = vmatprep.subr.bf16.mxu0 0
    %2176 = vmatpush1.bf16.msra.mxu0 0
    %2177 = vmatprep.subr.bf16.mxu0 0
    %2178 = vmatpush1.bf16.msra.mxu0 0
    %2179 = vmatprep.subr.bf16.mxu0 0
    %2180 = vmatpush1.bf16.msra.mxu0 0
    %2181 = vmatprep.subr.bf16.mxu0 0
    %2182 = vmatpush1.bf16.msra.mxu0 0
    %2183 = vmatprep.mubr.bf16.mxu0 0
    %2184 = vmatmul.mubr.bf16.gmra.mrb[0].mxu0 %v1948
    %v2185 = vpop.f32.mrb[0].mxu0
    %v2186 = vadd.f32 %v2137, %v2185
    %v2187 = vpop.f32.mrb[0].mxu0
    %v2188 = vpop.f32.mrb[0].mxu0
    %v2189 = vadd.f32 %v2140, %v2188
    %v2190 = vpop.f32.mrb[0].mxu0
    %2191 = vmatprep.mubr.bf16.mxu0 0
    %2192 = vmatmul.mubr.bf16.gmra.mrb[0].mxu0 %v1951
    %v2193 = vpop.f32.mrb[0].mxu0
    %v2194 = vadd.f32 %v2145, %v2193
    %v2195 = vpop.f32.mrb[0].mxu0
    %v2196 = vpop.f32.mrb[0].mxu0
    %v2197 = vadd.f32 %v2148, %v2196
    %v2198 = vpop.f32.mrb[0].mxu0
    %2199 = vdwg.mxu0
    %s2200 = scalar_lea.vmem %s22, 96
    %2201 = vst [vmem:[%s2200] sm:$0xff] %v2186
    %2202 = vst [vmem:[%s2200 + $0x8] sm:$0xff] %v2189
    %2203 = vst [vmem:[%s2200 + $0x10] sm:$0xff] %v2194
    %2204 = vst [vmem:[%s2200 + $0x18] sm:$0xff] %v2197
    %v2205 = vld [vmem:[%s11] sm:$0xf]
    %v2206 = vld [vmem:[%s11 + $0x4] sm:$0xf]
    %v2207 = vld [vmem:[%s11 + $0x8] sm:$0xf]
    %v2208 = vld [vmem:[%s11 + $0xc] sm:$0xf]
    %v2209 = vld [vmem:[%s18] sm:$0xf]
    %v2210 = vld [vmem:[%s18 + $0x4] sm:$0xf]
    %v2211 = vld [vmem:[%s18 + $0x8] sm:$0xf]
    %v2212 = vld [vmem:[%s18 + $0xc] sm:$0xf]
    %v2213 = vld [vmem:[%s18 + $0x10] sm:$0xf]
    %v2214 = vld [vmem:[%s18 + $0x14] sm:$0xf]
    %v2215 = vld [vmem:[%s18 + $0x18] sm:$0xf]
    %v2216 = vld [vmem:[%s18 + $0x1c] sm:$0xf]
    %s2217 = scalar_lea.vmem [#allocation7], 4
    %v2218 = vld [vmem:[%s2217] sm:$0x1]
    %v2220 = vlaneseq
    %v2221 = vshrl.u32 %v2220, 7
    %v2222 = vsub.s32 0, %v2221
    %v2223 = vrot.slane %v2218, %v2222
    %v2229 = vunpack.c.l.b16 %v2205
    %v2230 = vunpack.c.l.b16 %v2206
    %v2231 = vunpack.c.l.b16 %v2207
    %v2232 = vunpack.c.l.b16 %v2208
    %v2233 = vpack.c.b16 %v2230, %v2229
    %v2234 = vpack.c.b16 %v2232, %v2231
    %v2243 = vunpack.c.l.b16 %v2209
    %v2244 = vunpack.c.l.b16 %v2210
    %v2245 = vunpack.c.l.b16 %v2211
    %v2246 = vunpack.c.l.b16 %v2212
    %v2247 = vunpack.c.l.b16 %v2213
    %v2248 = vunpack.c.l.b16 %v2214
    %v2249 = vunpack.c.l.b16 %v2215
    %v2250 = vunpack.c.l.b16 %v2216
    %v2251 = vpack.c.b16 %v2244, %v2243
    %v2252 = vpack.c.b16 %v2246, %v2245
    %v2253 = vpack.c.b16 %v2248, %v2247
    %v2254 = vpack.c.b16 %v2250, %v2249
    %v2260 = vsel %vm168, %v2233, 0
    %v2263 = vsel %vm168, %v2234, 0
    %2265 = vmatprep.subr.bf16.mxu0 0
    %2266 = vmatpush1.bf16.msra.mxu0 %v2251
    %2267 = vmatprep.subr.bf16.mxu0 0
    %2268 = vmatpush1.bf16.msra.mxu0 %v2252
    %2269 = vmatprep.subr.bf16.mxu0 0
    %2270 = vmatpush1.bf16.msra.mxu0 %v2253
    %2271 = vmatprep.subr.bf16.mxu0 0
    %2272 = vmatpush1.bf16.msra.mxu0 %v2254
    %2273 = vmatprep.subr.bf16.mxu0 0
    %2274 = vmatpush1.bf16.msra.mxu0 0
    %2275 = vmatprep.subr.bf16.mxu0 0
    %2276 = vmatpush1.bf16.msra.mxu0 0
    %2277 = vmatprep.subr.bf16.mxu0 0
    %2278 = vmatpush1.bf16.msra.mxu0 0
    %2279 = vmatprep.subr.bf16.mxu0 0
    %2280 = vmatpush1.bf16.msra.mxu0 0
    %2281 = vmatprep.subr.bf16.mxu0 0
    %2282 = vmatpush1.bf16.msra.mxu0 0
    %2283 = vmatprep.subr.bf16.mxu0 0
    %2284 = vmatpush1.bf16.msra.mxu0 0
    %2285 = vmatprep.subr.bf16.mxu0 0
    %2286 = vmatpush1.bf16.msra.mxu0 0
    %2287 = vmatprep.subr.bf16.mxu0 0
    %2288 = vmatpush1.bf16.msra.mxu0 0
    %2289 = vmatprep.subr.bf16.mxu0 0
    %2290 = vmatpush1.bf16.msra.mxu0 0
    %2291 = vmatprep.subr.bf16.mxu0 0
    %2292 = vmatpush1.bf16.msra.mxu0 0
    %2293 = vmatprep.subr.bf16.mxu0 0
    %2294 = vmatpush1.bf16.msra.mxu0 0
    %2295 = vmatprep.subr.bf16.mxu0 0
    %2296 = vmatpush1.bf16.msra.mxu0 0
    %2297 = vmatprep.mubr.bf16.mxu0 0
    %2298 = vmatmul.mubr.bf16.gmra.mrb[0].mxu0 %v2260
    %v2299 = vpop.f32.mrb[0].mxu0
    %v2300 = vadd.f32 %v2223, %v2299
    %v2301 = vpop.f32.mrb[0].mxu0
    %v2302 = vpop.f32.mrb[0].mxu0
    %v2303 = vadd.f32 %v2223, %v2302
    %v2304 = vpop.f32.mrb[0].mxu0
    %2305 = vmatprep.mubr.bf16.mxu0 0
    %2306 = vmatmul.mubr.bf16.gmra.mrb[0].mxu0 %v2263
    %v2307 = vpop.f32.mrb[0].mxu0
    %v2308 = vadd.f32 %v2223, %v2307
    %v2309 = vpop.f32.mrb[0].mxu0
    %v2310 = vpop.f32.mrb[0].mxu0
    %v2311 = vadd.f32 %v2223, %v2310
    %v2312 = vpop.f32.mrb[0].mxu0
    %2313 = vdwg.mxu0
    %s2314 = scalar_lea.vmem %s22, 128
    %2315 = vst [vmem:[%s2314] sm:$0xff] %v2300
    %2316 = vst [vmem:[%s2314 + $0x8] sm:$0xff] %v2303
    %2317 = vst [vmem:[%s2314 + $0x10] sm:$0xff] %v2308
    %2318 = vst [vmem:[%s2314 + $0x18] sm:$0xff] %v2311
    %v2319 = vld [vmem:[%s12] sm:$0xf]
    %v2320 = vld [vmem:[%s12 + $0x4] sm:$0xf]
    %v2321 = vld [vmem:[%s12 + $0x8] sm:$0xf]
    %v2322 = vld [vmem:[%s12 + $0xc] sm:$0xf]
    %v2323 = vld [vmem:[%s19] sm:$0xf]
    %v2324 = vld [vmem:[%s19 + $0x4] sm:$0xf]
    %v2325 = vld [vmem:[%s19 + $0x8] sm:$0xf]
    %v2326 = vld [vmem:[%s19 + $0xc] sm:$0xf]
    %v2327 = vld [vmem:[%s19 + $0x10] sm:$0xf]
    %v2328 = vld [vmem:[%s19 + $0x14] sm:$0xf]
    %v2329 = vld [vmem:[%s19 + $0x18] sm:$0xf]
    %v2330 = vld [vmem:[%s19 + $0x1c] sm:$0xf]
    %s2331 = scalar_lea.vmem [#allocation7], 5
    %v2332 = vld [vmem:[%s2331] sm:$0x1]
    %v2334 = vlaneseq
    %v2335 = vshrl.u32 %v2334, 7
    %v2336 = vsub.s32 0, %v2335
    %v2337 = vrot.slane %v2332, %v2336
    %v2343 = vunpack.c.l.b16 %v2319
    %v2344 = vunpack.c.l.b16 %v2320
    %v2345 = vunpack.c.l.b16 %v2321
    %v2346 = vunpack.c.l.b16 %v2322
    %v2347 = vpack.c.b16 %v2344, %v2343
    %v2348 = vpack.c.b16 %v2346, %v2345
    %v2357 = vunpack.c.l.b16 %v2323
    %v2358 = vunpack.c.l.b16 %v2324
    %v2359 = vunpack.c.l.b16 %v2325
    %v2360 = vunpack.c.l.b16 %v2326
    %v2361 = vunpack.c.l.b16 %v2327
    %v2362 = vunpack.c.l.b16 %v2328
    %v2363 = vunpack.c.l.b16 %v2329
    %v2364 = vunpack.c.l.b16 %v2330
    %v2365 = vpack.c.b16 %v2358, %v2357
    %v2366 = vpack.c.b16 %v2360, %v2359
    %v2367 = vpack.c.b16 %v2362, %v2361
    %v2368 = vpack.c.b16 %v2364, %v2363
    %v2374 = vsel %vm168, %v2347, 0
    %v2377 = vsel %vm168, %v2348, 0
    %2379 = vmatprep.subr.bf16.mxu0 0
    %2380 = vmatpush1.bf16.msra.mxu0 %v2365
    %2381 = vmatprep.subr.bf16.mxu0 0
    %2382 = vmatpush1.bf16.msra.mxu0 %v2366
    %2383 = vmatprep.subr.bf16.mxu0 0
    %2384 = vmatpush1.bf16.msra.mxu0 %v2367
    %2385 = vmatprep.subr.bf16.mxu0 0
    %2386 = vmatpush1.bf16.msra.mxu0 %v2368
    %2387 = vmatprep.subr.bf16.mxu0 0
    %2388 = vmatpush1.bf16.msra.mxu0 0
    %2389 = vmatprep.subr.bf16.mxu0 0
    %2390 = vmatpush1.bf16.msra.mxu0 0
    %2391 = vmatprep.subr.bf16.mxu0 0
    %2392 = vmatpush1.bf16.msra.mxu0 0
    %2393 = vmatprep.subr.bf16.mxu0 0
    %2394 = vmatpush1.bf16.msra.mxu0 0
    %2395 = vmatprep.subr.bf16.mxu0 0
    %2396 = vmatpush1.bf16.msra.mxu0 0
    %2397 = vmatprep.subr.bf16.mxu0 0
    %2398 = vmatpush1.bf16.msra.mxu0 0
    %2399 = vmatprep.subr.bf16.mxu0 0
    %2400 = vmatpush1.bf16.msra.mxu0 0
    %2401 = vmatprep.subr.bf16.mxu0 0
    %2402 = vmatpush1.bf16.msra.mxu0 0
    %2403 = vmatprep.subr.bf16.mxu0 0
    %2404 = vmatpush1.bf16.msra.mxu0 0
    %2405 = vmatprep.subr.bf16.mxu0 0
    %2406 = vmatpush1.bf16.msra.mxu0 0
    %2407 = vmatprep.subr.bf16.mxu0 0
    %2408 = vmatpush1.bf16.msra.mxu0 0
    %2409 = vmatprep.subr.bf16.mxu0 0
    %2410 = vmatpush1.bf16.msra.mxu0 0
    %2411 = vmatprep.mubr.bf16.mxu0 0
    %2412 = vmatmul.mubr.bf16.gmra.mrb[0].mxu0 %v2374
    %v2413 = vpop.f32.mrb[0].mxu0
    %v2414 = vadd.f32 %v2337, %v2413
    %v2415 = vpop.f32.mrb[0].mxu0
    %v2416 = vpop.f32.mrb[0].mxu0
    %v2417 = vadd.f32 %v2337, %v2416
    %v2418 = vpop.f32.mrb[0].mxu0
    %2419 = vmatprep.mubr.bf16.mxu0 0
    %2420 = vmatmul.mubr.bf16.gmra.mrb[0].mxu0 %v2377
    %v2421 = vpop.f32.mrb[0].mxu0
    %v2422 = vadd.f32 %v2337, %v2421
    %v2423 = vpop.f32.mrb[0].mxu0
    %v2424 = vpop.f32.mrb[0].mxu0
    %v2425 = vadd.f32 %v2337, %v2424
    %v2426 = vpop.f32.mrb[0].mxu0
    %2427 = vdwg.mxu0
    %s2428 = scalar_lea.vmem %s22, 160
    %2429 = vst [vmem:[%s2428] sm:$0xff] %v2414
    %2430 = vst [vmem:[%s2428 + $0x8] sm:$0xff] %v2417
    %2431 = vst [vmem:[%s2428 + $0x10] sm:$0xff] %v2422
    %2432 = vst [vmem:[%s2428 + $0x18] sm:$0xff] %v2425
    %v2433 = vld [vmem:[%s13] sm:$0xf]
    %v2434 = vld [vmem:[%s13 + $0x4] sm:$0xf]
    %v2435 = vld [vmem:[%s13 + $0x8] sm:$0xf]
    %v2436 = vld [vmem:[%s13 + $0xc] sm:$0xf]
    %v2437 = vld [vmem:[%s20] sm:$0xf]
    %v2438 = vld [vmem:[%s20 + $0x4] sm:$0xf]
    %v2439 = vld [vmem:[%s20 + $0x8] sm:$0xf]
    %v2440 = vld [vmem:[%s20 + $0xc] sm:$0xf]
    %v2441 = vld [vmem:[%s20 + $0x10] sm:$0xf]
    %v2442 = vld [vmem:[%s20 + $0x14] sm:$0xf]
    %v2443 = vld [vmem:[%s20 + $0x18] sm:$0xf]
    %v2444 = vld [vmem:[%s20 + $0x1c] sm:$0xf]
    %s2445 = scalar_lea.vmem [#allocation7], 6
    %v2446 = vld [vmem:[%s2445] sm:$0x1]
    %v2448 = vlaneseq
    %v2449 = vshrl.u32 %v2448, 7
    %v2450 = vsub.s32 0, %v2449
    %v2451 = vrot.slane %v2446, %v2450
    %v2457 = vunpack.c.l.b16 %v2433
    %v2458 = vunpack.c.l.b16 %v2434
    %v2459 = vunpack.c.l.b16 %v2435
    %v2460 = vunpack.c.l.b16 %v2436
    %v2461 = vpack.c.b16 %v2458, %v2457
    %v2462 = vpack.c.b16 %v2460, %v2459
    %v2471 = vunpack.c.l.b16 %v2437
    %v2472 = vunpack.c.l.b16 %v2438
    %v2473 = vunpack.c.l.b16 %v2439
    %v2474 = vunpack.c.l.b16 %v2440
    %v2475 = vunpack.c.l.b16 %v2441
    %v2476 = vunpack.c.l.b16 %v2442
    %v2477 = vunpack.c.l.b16 %v2443
    %v2478 = vunpack.c.l.b16 %v2444
    %v2479 = vpack.c.b16 %v2472, %v2471
    %v2480 = vpack.c.b16 %v2474, %v2473
    %v2481 = vpack.c.b16 %v2476, %v2475
    %v2482 = vpack.c.b16 %v2478, %v2477
    %v2488 = vsel %vm168, %v2461, 0
    %v2491 = vsel %vm168, %v2462, 0
    %2493 = vmatprep.subr.bf16.mxu0 0
    %2494 = vmatpush1.bf16.msra.mxu0 %v2479
    %2495 = vmatprep.subr.bf16.mxu0 0
    %2496 = vmatpush1.bf16.msra.mxu0 %v2480
    %2497 = vmatprep.subr.bf16.mxu0 0
    %2498 = vmatpush1.bf16.msra.mxu0 %v2481
    %2499 = vmatprep.subr.bf16.mxu0 0
    %2500 = vmatpush1.bf16.msra.mxu0 %v2482
    %2501 = vmatprep.subr.bf16.mxu0 0
    %2502 = vmatpush1.bf16.msra.mxu0 0
    %2503 = vmatprep.subr.bf16.mxu0 0
    %2504 = vmatpush1.bf16.msra.mxu0 0
    %2505 = vmatprep.subr.bf16.mxu0 0
    %2506 = vmatpush1.bf16.msra.mxu0 0
    %2507 = vmatprep.subr.bf16.mxu0 0
    %2508 = vmatpush1.bf16.msra.mxu0 0
    %2509 = vmatprep.subr.bf16.mxu0 0
    %2510 = vmatpush1.bf16.msra.mxu0 0
    %2511 = vmatprep.subr.bf16.mxu0 0
    %2512 = vmatpush1.bf16.msra.mxu0 0
    %2513 = vmatprep.subr.bf16.mxu0 0
    %2514 = vmatpush1.bf16.msra.mxu0 0
    %2515 = vmatprep.subr.bf16.mxu0 0
    %2516 = vmatpush1.bf16.msra.mxu0 0
    %2517 = vmatprep.subr.bf16.mxu0 0
    %2518 = vmatpush1.bf16.msra.mxu0 0
    %2519 = vmatprep.subr.bf16.mxu0 0
    %2520 = vmatpush1.bf16.msra.mxu0 0
    %2521 = vmatprep.subr.bf16.mxu0 0
    %2522 = vmatpush1.bf16.msra.mxu0 0
    %2523 = vmatprep.subr.bf16.mxu0 0
    %2524 = vmatpush1.bf16.msra.mxu0 0
    %2525 = vmatprep.mubr.bf16.mxu0 0
    %2526 = vmatmul.mubr.bf16.gmra.mrb[0].mxu0 %v2488
    %v2527 = vpop.f32.mrb[0].mxu0
    %v2528 = vadd.f32 %v2451, %v2527
    %v2529 = vpop.f32.mrb[0].mxu0
    %v2530 = vpop.f32.mrb[0].mxu0
    %v2531 = vadd.f32 %v2451, %v2530
    %v2532 = vpop.f32.mrb[0].mxu0
    %2533 = vmatprep.mubr.bf16.mxu0 0
    %2534 = vmatmul.mubr.bf16.gmra.mrb[0].mxu0 %v2491
    %v2535 = vpop.f32.mrb[0].mxu0
    %v2536 = vadd.f32 %v2451, %v2535
    %v2537 = vpop.f32.mrb[0].mxu0
    %v2538 = vpop.f32.mrb[0].mxu0
    %v2539 = vadd.f32 %v2451, %v2538
    %v2540 = vpop.f32.mrb[0].mxu0
    %2541 = vdwg.mxu0
    %s2542 = scalar_lea.vmem %s22, 192
    %2543 = vst [vmem:[%s2542] sm:$0xff] %v2528
    %2544 = vst [vmem:[%s2542 + $0x8] sm:$0xff] %v2531
    %2545 = vst [vmem:[%s2542 + $0x10] sm:$0xff] %v2536
    %2546 = vst [vmem:[%s2542 + $0x18] sm:$0xff] %v2539
    %v2547 = vld [vmem:[%s2] sm:$0xff]
    %v2548 = vld [vmem:[%s2 + $0x8] sm:$0xff]
    %v2549 = vld [vmem:[%s2 + $0x10] sm:$0xff]
    %v2550 = vld [vmem:[%s2 + $0x18] sm:$0xff]
    %v2551 = vld [vmem:[%s1] sm:$0xff]
    %v2552 = vld [vmem:[%s1 + $0x8] sm:$0xff]
    %v2553 = vld [vmem:[%s1 + $0x10] sm:$0xff]
    %v2554 = vld [vmem:[%s1 + $0x18] sm:$0xff]
    %v2555 = vld [vmem:[%s3] sm:$0xff]
    %v2556 = vld [vmem:[%s3 + $0x8] sm:$0xff]
    %v2557 = vld [vmem:[%s3 + $0x10] sm:$0xff]
    %v2558 = vld [vmem:[%s3 + $0x18] sm:$0xff]
    %vm2559 = vcmask 261120
    %v2561 = vsel %vm2559, %v2551, 0
    %v2564 = vsel %vm2559, %v2552, 0
    %v2567 = vsel %vm2559, %v2553, 0
    %v2570 = vsel %vm2559, %v2554, 0
    %2572 = vmatprep.subr.mxu0 0.0
    %2573 = vmatpush1.msra.mxu0 %v2555
    %2574 = vmatprep.subr.mxu0 0.0
    %2575 = vmatpush1.msra.mxu0 %v2556
    %2576 = vmatprep.subr.mxu0 0.0
    %2577 = vmatpush1.msra.mxu0 %v2557
    %2578 = vmatprep.subr.mxu0 0.0
    %2579 = vmatpush1.msra.mxu0 %v2558
    %2580 = vmatprep.subr.mxu0 0.0
    %2581 = vmatpush1.msra.mxu0 0.0
    %2582 = vmatprep.subr.mxu0 0.0
    %2583 = vmatpush1.msra.mxu0 0.0
    %2584 = vmatprep.subr.mxu0 0.0
    %2585 = vmatpush1.msra.mxu0 0.0
    %2586 = vmatprep.subr.mxu0 0.0
    %2587 = vmatpush1.msra.mxu0 0.0
    %2588 = vmatprep.subr.mxu0 0.0
    %2589 = vmatpush1.msra.mxu0 0.0
    %2590 = vmatprep.subr.mxu0 0.0
    %2591 = vmatpush1.msra.mxu0 0.0
    %2592 = vmatprep.subr.mxu0 0.0
    %2593 = vmatpush1.msra.mxu0 0.0
    %2594 = vmatprep.subr.mxu0 0.0
    %2595 = vmatpush1.msra.mxu0 0.0
    %2596 = vmatprep.subr.mxu0 0.0
    %2597 = vmatpush1.msra.mxu0 0.0
    %2598 = vmatprep.subr.mxu0 0.0
    %2599 = vmatpush1.msra.mxu0 0.0
    %2600 = vmatprep.subr.mxu0 0.0
    %2601 = vmatpush1.msra.mxu0 0.0
    %2602 = vmatprep.subr.mxu0 0.0
    %2603 = vmatpush1.msra.mxu0 0.0
    %2604 = vmatprep.subr.mxu0 0.0
    %2605 = vmatpush1.msra.mxu0 0.0
    %2606 = vmatprep.subr.mxu0 0.0
    %2607 = vmatpush1.msra.mxu0 0.0
    %2608 = vmatprep.subr.mxu0 0.0
    %2609 = vmatpush1.msra.mxu0 0.0
    %2610 = vmatprep.subr.mxu0 0.0
    %2611 = vmatpush1.msra.mxu0 0.0
    %2612 = vmatprep.subr.mxu0 0.0
    %2613 = vmatpush1.msra.mxu0 0.0
    %2614 = vmatprep.subr.mxu0 0.0
    %2615 = vmatpush1.msra.mxu0 0.0
    %2616 = vmatprep.subr.mxu0 0.0
    %2617 = vmatpush1.msra.mxu0 0.0
    %2618 = vmatprep.subr.mxu0 0.0
    %2619 = vmatpush1.msra.mxu0 0.0
    %2620 = vmatprep.subr.mxu0 0.0
    %2621 = vmatpush1.msra.mxu0 0.0
    %2622 = vmatprep.subr.mxu0 0.0
    %2623 = vmatpush1.msra.mxu0 0.0
    %2624 = vmatprep.subr.mxu0 0.0
    %2625 = vmatpush1.msra.mxu0 0.0
    %2626 = vmatprep.subr.mxu0 0.0
    %2627 = vmatpush1.msra.mxu0 0.0
    %2628 = vmatprep.subr.mxu0 0.0
    %2629 = vmatpush1.msra.mxu0 0.0
    %2630 = vmatprep.subr.mxu0 0.0
    %2631 = vmatpush1.msra.mxu0 0.0
    %2632 = vmatprep.subr.mxu0 0.0
    %2633 = vmatpush1.msra.mxu0 0.0
    %2634 = vmatprep.subr.mxu0 0.0
    %2635 = vmatpush1.msra.mxu0 0.0
    %2636 = vmatprep.mubr.f32.mxu0 0.0
    %2637 = vmatmul.mubr.f32.gmra.mrb[0].mxu0 %v2561
    %v2638 = vpop.f32.mrb[0].mxu0
    %v2639 = vadd.f32 0.0, %v2638
    %v2640 = vpop.f32.mrb[0].mxu0
    %2641 = vmatprep.mubr.f32.mxu0 0.0
    %2642 = vmatmul.mubr.f32.gmra.mrb[0].mxu0 %v2564
    %v2643 = vpop.f32.mrb[0].mxu0
    %v2644 = vadd.f32 0.0, %v2643
    %v2645 = vpop.f32.mrb[0].mxu0
    %2646 = vmatprep.mubr.f32.mxu0 0.0
    %2647 = vmatmul.mubr.f32.gmra.mrb[0].mxu0 %v2567
    %v2648 = vpop.f32.mrb[0].mxu0
    %v2649 = vadd.f32 0.0, %v2648
    %v2650 = vpop.f32.mrb[0].mxu0
    %2651 = vmatprep.mubr.f32.mxu0 0.0
    %2652 = vmatmul.mubr.f32.gmra.mrb[0].mxu0 %v2570
    %v2653 = vpop.f32.mrb[0].mxu0
    %v2654 = vadd.f32 0.0, %v2653
    %v2655 = vpop.f32.mrb[0].mxu0
    %2656 = vdwg.mxu0
    %v2657 = vld [vmem:[%s4] sm:$0x1]
    %v2659 = vlaneseq
    %v2660 = vshrl.u32 %v2659, 7
    %v2661 = vsub.s32 0, %v2660
    %v2662 = vrot.slane %v2657, %v2661
    %v2665 = vsel %vm2559, %v2547, 0
    %v2668 = vsel %vm2559, %v2548, 0
    %v2671 = vsel %vm2559, %v2549, 0
    %v2674 = vsel %vm2559, %v2550, 0
    %2676 = vmatprep.subr.mxu0 0.0
    %2677 = vmatpush1.msra.mxu0 %v2639
    %2678 = vmatprep.subr.mxu0 0.0
    %2679 = vmatpush1.msra.mxu0 %v2644
    %2680 = vmatprep.subr.mxu0 0.0
    %2681 = vmatpush1.msra.mxu0 %v2649
    %2682 = vmatprep.subr.mxu0 0.0
    %2683 = vmatpush1.msra.mxu0 %v2654
    %2684 = vmatprep.subr.mxu0 0.0
    %2685 = vmatpush1.msra.mxu0 0.0
    %2686 = vmatprep.subr.mxu0 0.0
    %2687 = vmatpush1.msra.mxu0 0.0
    %2688 = vmatprep.subr.mxu0 0.0
    %2689 = vmatpush1.msra.mxu0 0.0
    %2690 = vmatprep.subr.mxu0 0.0
    %2691 = vmatpush1.msra.mxu0 0.0
    %2692 = vmatprep.subr.mxu0 0.0
    %2693 = vmatpush1.msra.mxu0 0.0
    %2694 = vmatprep.subr.mxu0 0.0
    %2695 = vmatpush1.msra.mxu0 0.0
    %2696 = vmatprep.subr.mxu0 0.0
    %2697 = vmatpush1.msra.mxu0 0.0
    %2698 = vmatprep.subr.mxu0 0.0
    %2699 = vmatpush1.msra.mxu0 0.0
    %2700 = vmatprep.subr.mxu0 0.0
    %2701 = vmatpush1.msra.mxu0 0.0
    %2702 = vmatprep.subr.mxu0 0.0
    %2703 = vmatpush1.msra.mxu0 0.0
    %2704 = vmatprep.subr.mxu0 0.0
    %2705 = vmatpush1.msra.mxu0 0.0
    %2706 = vmatprep.subr.mxu0 0.0
    %2707 = vmatpush1.msra.mxu0 0.0
    %2708 = vmatprep.subr.mxu0 0.0
    %2709 = vmatpush1.msra.mxu0 0.0
    %2710 = vmatprep.subr.mxu0 0.0
    %2711 = vmatpush1.msra.mxu0 0.0
    %2712 = vmatprep.subr.mxu0 0.0
    %2713 = vmatpush1.msra.mxu0 0.0
    %2714 = vmatprep.subr.mxu0 0.0
    %2715 = vmatpush1.msra.mxu0 0.0
    %2716 = vmatprep.subr.mxu0 0.0
    %2717 = vmatpush1.msra.mxu0 0.0
    %2718 = vmatprep.subr.mxu0 0.0
    %2719 = vmatpush1.msra.mxu0 0.0
    %2720 = vmatprep.subr.mxu0 0.0
    %2721 = vmatpush1.msra.mxu0 0.0
    %2722 = vmatprep.subr.mxu0 0.0
    %2723 = vmatpush1.msra.mxu0 0.0
    %2724 = vmatprep.subr.mxu0 0.0
    %2725 = vmatpush1.msra.mxu0 0.0
    %2726 = vmatprep.subr.mxu0 0.0
    %2727 = vmatpush1.msra.mxu0 0.0
    %2728 = vmatprep.subr.mxu0 0.0
    %2729 = vmatpush1.msra.mxu0 0.0
    %2730 = vmatprep.subr.mxu0 0.0
    %2731 = vmatpush1.msra.mxu0 0.0
    %2732 = vmatprep.subr.mxu0 0.0
    %2733 = vmatpush1.msra.mxu0 0.0
    %2734 = vmatprep.subr.mxu0 0.0
    %2735 = vmatpush1.msra.mxu0 0.0
    %2736 = vmatprep.subr.mxu0 0.0
    %2737 = vmatpush1.msra.mxu0 0.0
    %2738 = vmatprep.subr.mxu0 0.0
    %2739 = vmatpush1.msra.mxu0 0.0
    %2740 = vmatprep.mubr.f32.mxu0 0.0
    %2741 = vmatmul.mubr.f32.gmra.mrb[0].mxu0 %v2665
    %v2742 = vpop.f32.mrb[0].mxu0
    %v2743 = vadd.f32 %v2662, %v2742
    %v2744 = vpop.f32.mrb[0].mxu0
    %2745 = vmatprep.mubr.f32.mxu0 0.0
    %2746 = vmatmul.mubr.f32.gmra.mrb[0].mxu0 %v2668
    %v2747 = vpop.f32.mrb[0].mxu0
    %v2748 = vadd.f32 %v2662, %v2747
    %v2749 = vpop.f32.mrb[0].mxu0
    %2750 = vmatprep.mubr.f32.mxu0 0.0
    %2751 = vmatmul.mubr.f32.gmra.mrb[0].mxu0 %v2671
    %v2752 = vpop.f32.mrb[0].mxu0
    %v2753 = vadd.f32 %v2662, %v2752
    %v2754 = vpop.f32.mrb[0].mxu0
    %2755 = vmatprep.mubr.f32.mxu0 0.0
    %2756 = vmatmul.mubr.f32.gmra.mrb[0].mxu0 %v2674
    %v2757 = vpop.f32.mrb[0].mxu0
    %v2758 = vadd.f32 %v2662, %v2757
    %v2759 = vpop.f32.mrb[0].mxu0
    %2760 = vdwg.mxu0
    %v2761 = vmax.f32 %v2743, 0.0
    %v2762 = vmax.f32 %v2748, 0.0
    %v2763 = vmax.f32 %v2753, 0.0
    %v2764 = vmax.f32 %v2758, 0.0
    %v2765 = vld [vmem:[%s5] sm:$0xff]
    %v2766 = vld [vmem:[%s5 + $0x8] sm:$0xff]
    %v2767 = vld [vmem:[%s5 + $0x10] sm:$0xff]
    %v2768 = vld [vmem:[%s5 + $0x18] sm:$0xff]
    %v2770 = vsel %vm2559, %v2761, 0
    %v2773 = vsel %vm2559, %v2762, 0
    %v2776 = vsel %vm2559, %v2763, 0
    %v2779 = vsel %vm2559, %v2764, 0
    %2781 = vmatprep.subr.mxu0 0.0
    %2782 = vmatpush1.msra.mxu0 %v2765
    %2783 = vmatprep.subr.mxu0 0.0
    %2784 = vmatpush1.msra.mxu0 %v2766
    %2785 = vmatprep.subr.mxu0 0.0
    %2786 = vmatpush1.msra.mxu0 %v2767
    %2787 = vmatprep.subr.mxu0 0.0
    %2788 = vmatpush1.msra.mxu0 %v2768
    %2789 = vmatprep.subr.mxu0 0.0
    %2790 = vmatpush1.msra.mxu0 0.0
    %2791 = vmatprep.subr.mxu0 0.0
    %2792 = vmatpush1.msra.mxu0 0.0
    %2793 = vmatprep.subr.mxu0 0.0
    %2794 = vmatpush1.msra.mxu0 0.0
    %2795 = vmatprep.subr.mxu0 0.0
    %2796 = vmatpush1.msra.mxu0 0.0
    %2797 = vmatprep.subr.mxu0 0.0
    %2798 = vmatpush1.msra.mxu0 0.0
    %2799 = vmatprep.subr.mxu0 0.0
    %2800 = vmatpush1.msra.mxu0 0.0
    %2801 = vmatprep.subr.mxu0 0.0
    %2802 = vmatpush1.msra.mxu0 0.0
    %2803 = vmatprep.subr.mxu0 0.0
    %2804 = vmatpush1.msra.mxu0 0.0
    %2805 = vmatprep.subr.mxu0 0.0
    %2806 = vmatpush1.msra.mxu0 0.0
    %2807 = vmatprep.subr.mxu0 0.0
    %2808 = vmatpush1.msra.mxu0 0.0
    %2809 = vmatprep.subr.mxu0 0.0
    %2810 = vmatpush1.msra.mxu0 0.0
    %2811 = vmatprep.subr.mxu0 0.0
    %2812 = vmatpush1.msra.mxu0 0.0
    %2813 = vmatprep.subr.mxu0 0.0
    %2814 = vmatpush1.msra.mxu0 0.0
    %2815 = vmatprep.subr.mxu0 0.0
    %2816 = vmatpush1.msra.mxu0 0.0
    %2817 = vmatprep.subr.mxu0 0.0
    %2818 = vmatpush1.msra.mxu0 0.0
    %2819 = vmatprep.subr.mxu0 0.0
    %2820 = vmatpush1.msra.mxu0 0.0
    %2821 = vmatprep.subr.mxu0 0.0
    %2822 = vmatpush1.msra.mxu0 0.0
    %2823 = vmatprep.subr.mxu0 0.0
    %2824 = vmatpush1.msra.mxu0 0.0
    %2825 = vmatprep.subr.mxu0 0.0
    %2826 = vmatpush1.msra.mxu0 0.0
    %2827 = vmatprep.subr.mxu0 0.0
    %2828 = vmatpush1.msra.mxu0 0.0
    %2829 = vmatprep.subr.mxu0 0.0
    %2830 = vmatpush1.msra.mxu0 0.0
    %2831 = vmatprep.subr.mxu0 0.0
    %2832 = vmatpush1.msra.mxu0 0.0
    %2833 = vmatprep.subr.mxu0 0.0
    %2834 = vmatpush1.msra.mxu0 0.0
    %2835 = vmatprep.subr.mxu0 0.0
    %2836 = vmatpush1.msra.mxu0 0.0
    %2837 = vmatprep.subr.mxu0 0.0
    %2838 = vmatpush1.msra.mxu0 0.0
    %2839 = vmatprep.subr.mxu0 0.0
    %2840 = vmatpush1.msra.mxu0 0.0
    %2841 = vmatprep.subr.mxu0 0.0
    %2842 = vmatpush1.msra.mxu0 0.0
    %2843 = vmatprep.subr.mxu0 0.0
    %2844 = vmatpush1.msra.mxu0 0.0
    %2845 = vmatprep.mubr.f32.mxu0 0.0
    %2846 = vmatmul.mubr.f32.gmra.mrb[0].mxu0 %v2770
    %v2847 = vpop.f32.mrb[0].mxu0
    %v2848 = vadd.f32 0.0, %v2847
    %v2849 = vpop.f32.mrb[0].mxu0
    %2850 = vmatprep.mubr.f32.mxu0 0.0
    %2851 = vmatmul.mubr.f32.gmra.mrb[0].mxu0 %v2773
    %v2852 = vpop.f32.mrb[0].mxu0
    %v2853 = vadd.f32 0.0, %v2852
    %v2854 = vpop.f32.mrb[0].mxu0
    %2855 = vmatprep.mubr.f32.mxu0 0.0
    %2856 = vmatmul.mubr.f32.gmra.mrb[0].mxu0 %v2776
    %v2857 = vpop.f32.mrb[0].mxu0
    %v2858 = vadd.f32 0.0, %v2857
    %v2859 = vpop.f32.mrb[0].mxu0
    %2860 = vmatprep.mubr.f32.mxu0 0.0
    %2861 = vmatmul.mubr.f32.gmra.mrb[0].mxu0 %v2779
    %v2862 = vpop.f32.mrb[0].mxu0
    %v2863 = vadd.f32 0.0, %v2862
    %v2864 = vpop.f32.mrb[0].mxu0
    %2865 = vdwg.mxu0
    %v2866 = vld [vmem:[#allocation6] sm:$0x1]
    %v2868 = vlaneseq
    %v2869 = vshrl.u32 %v2868, 7
    %v2870 = vsub.s32 0, %v2869
    %v2871 = vrot.slane %v2866, %v2870
    %2873 = vmatprep.subr.mxu0 0.0
    %2874 = vmatpush1.msra.mxu0 %v2848
    %2875 = vmatprep.subr.mxu0 0.0
    %2876 = vmatpush1.msra.mxu0 %v2853
    %2877 = vmatprep.subr.mxu0 0.0
    %2878 = vmatpush1.msra.mxu0 %v2858
    %2879 = vmatprep.subr.mxu0 0.0
    %2880 = vmatpush1.msra.mxu0 %v2863
    %2881 = vmatprep.subr.mxu0 0.0
    %2882 = vmatpush1.msra.mxu0 0.0
    %2883 = vmatprep.subr.mxu0 0.0
    %2884 = vmatpush1.msra.mxu0 0.0
    %2885 = vmatprep.subr.mxu0 0.0
    %2886 = vmatpush1.msra.mxu0 0.0
    %2887 = vmatprep.subr.mxu0 0.0
    %2888 = vmatpush1.msra.mxu0 0.0
    %2889 = vmatprep.subr.mxu0 0.0
    %2890 = vmatpush1.msra.mxu0 0.0
    %2891 = vmatprep.subr.mxu0 0.0
    %2892 = vmatpush1.msra.mxu0 0.0
    %2893 = vmatprep.subr.mxu0 0.0
    %2894 = vmatpush1.msra.mxu0 0.0
    %2895 = vmatprep.subr.mxu0 0.0
    %2896 = vmatpush1.msra.mxu0 0.0
    %2897 = vmatprep.subr.mxu0 0.0
    %2898 = vmatpush1.msra.mxu0 0.0
    %2899 = vmatprep.subr.mxu0 0.0
    %2900 = vmatpush1.msra.mxu0 0.0
    %2901 = vmatprep.subr.mxu0 0.0
    %2902 = vmatpush1.msra.mxu0 0.0
    %2903 = vmatprep.subr.mxu0 0.0
    %2904 = vmatpush1.msra.mxu0 0.0
    %2905 = vmatprep.subr.mxu0 0.0
    %2906 = vmatpush1.msra.mxu0 0.0
    %2907 = vmatprep.subr.mxu0 0.0
    %2908 = vmatpush1.msra.mxu0 0.0
    %2909 = vmatprep.subr.mxu0 0.0
    %2910 = vmatpush1.msra.mxu0 0.0
    %2911 = vmatprep.subr.mxu0 0.0
    %2912 = vmatpush1.msra.mxu0 0.0
    %2913 = vmatprep.subr.mxu0 0.0
    %2914 = vmatpush1.msra.mxu0 0.0
    %2915 = vmatprep.subr.mxu0 0.0
    %2916 = vmatpush1.msra.mxu0 0.0
    %2917 = vmatprep.subr.mxu0 0.0
    %2918 = vmatpush1.msra.mxu0 0.0
    %2919 = vmatprep.subr.mxu0 0.0
    %2920 = vmatpush1.msra.mxu0 0.0
    %2921 = vmatprep.subr.mxu0 0.0
    %2922 = vmatpush1.msra.mxu0 0.0
    %2923 = vmatprep.subr.mxu0 0.0
    %2924 = vmatpush1.msra.mxu0 0.0
    %2925 = vmatprep.subr.mxu0 0.0
    %2926 = vmatpush1.msra.mxu0 0.0
    %2927 = vmatprep.subr.mxu0 0.0
    %2928 = vmatpush1.msra.mxu0 0.0
    %2929 = vmatprep.subr.mxu0 0.0
    %2930 = vmatpush1.msra.mxu0 0.0
    %2931 = vmatprep.subr.mxu0 0.0
    %2932 = vmatpush1.msra.mxu0 0.0
    %2933 = vmatprep.subr.mxu0 0.0
    %2934 = vmatpush1.msra.mxu0 0.0
    %2935 = vmatprep.subr.mxu0 0.0
    %2936 = vmatpush1.msra.mxu0 0.0
    %2937 = vmatprep.mubr.f32.mxu0 0.0
    %2938 = vmatmul.mubr.f32.gmra.mrb[0].mxu0 %v2665
    %v2939 = vpop.f32.mrb[0].mxu0
    %v2940 = vadd.f32 %v2871, %v2939
    %v2941 = vpop.f32.mrb[0].mxu0
    %2942 = vmatprep.mubr.f32.mxu0 0.0
    %2943 = vmatmul.mubr.f32.gmra.mrb[0].mxu0 %v2668
    %v2944 = vpop.f32.mrb[0].mxu0
    %v2945 = vadd.f32 %v2871, %v2944
    %v2946 = vpop.f32.mrb[0].mxu0
    %2947 = vmatprep.mubr.f32.mxu0 0.0
    %2948 = vmatmul.mubr.f32.gmra.mrb[0].mxu0 %v2671
    %v2949 = vpop.f32.mrb[0].mxu0
    %v2950 = vadd.f32 %v2871, %v2949
    %v2951 = vpop.f32.mrb[0].mxu0
    %2952 = vmatprep.mubr.f32.mxu0 0.0
    %2953 = vmatmul.mubr.f32.gmra.mrb[0].mxu0 %v2674
    %v2954 = vpop.f32.mrb[0].mxu0
    %v2955 = vadd.f32 %v2871, %v2954
    %v2956 = vpop.f32.mrb[0].mxu0
    %2957 = vdwg.mxu0
    %2958 = vst.msk [vmem:[#allocation9] sm:$0xff] %vm2559, %v2940
    %2959 = vst.msk [vmem:[#allocation9 + $0x8] sm:$0xff] %vm2559, %v2945
    %2960 = vst.msk [vmem:[#allocation9 + $0x10] sm:$0xff] %vm2559, %v2950
    %2961 = vst.msk [vmem:[#allocation9 + $0x18] sm:$0xff] %vm2559, %v2955
    %v2962 = vsel %vm2559, %v2940, 0.0
    %v2963 = vsel %vm2559, %v2945, 0.0
    %v2964 = vsel %vm2559, %v2950, 0.0
    %v2965 = vsel %vm2559, %v2955, 0.0
    %v2966 = vmul.f32 %v210, %v210
    %v2967 = vmul.f32 %v213, %v213
    %v2968 = vmul.f32 %v218, %v218
    %v2969 = vmul.f32 %v221, %v221
    %2970 = vadd.xlane.f32.xlu0 %v2966
    %v2971 = vpop.xlane.xlu0 %2970
    %2972 = vadd.xlane.f32.xlu0 %v2967
    %v2973 = vpop.xlane.xlu0 %2972
    %2974 = vadd.xlane.f32.xlu0 %v2968
    %v2975 = vpop.xlane.xlu0 %2974
    %2976 = vadd.xlane.f32.xlu0 %v2969
    %v2977 = vpop.xlane.xlu0 %2976
    %s2978 = sld [smem:[#allocation2]]
    %v2979 = vmax.f32 %v2971, 1e-24
    %v2980 = vmax.f32 %v2973, 1e-24
    %v2981 = vmax.f32 %v2975, 1e-24
    %v2982 = vmax.f32 %v2977, 1e-24
    %v2983 = vrsqrt.pop %v2979
    %v2984 = vrsqrt.pop %v2980
    %v2985 = vrsqrt.pop %v2981
    %v2986 = vrsqrt.pop %v2982
    %v2987 = vstv %s2978
    %v2988 = vmul.f32 %v2987, %v2983
    %v2989 = vmul.f32 %v2987, %v2984
    %v2990 = vmul.f32 %v2987, %v2985
    %v2991 = vmul.f32 %v2987, %v2986
    %v2992 = vmul.f32 %v210, %v2988
    %v2993 = vmul.f32 %v213, %v2989
    %v2994 = vmul.f32 %v218, %v2990
    %v2995 = vmul.f32 %v221, %v2991
    %2996 = vst [vmem:[%s24] sm:$0xff] %v2992
    %2997 = vst [vmem:[%s24 + $0x8] sm:$0xff] %v2993
    %2998 = vst [vmem:[%s24 + $0x10] sm:$0xff] %v2994
    %2999 = vst [vmem:[%s24 + $0x18] sm:$0xff] %v2995
    %v3000 = vmul.f32 %v1026, %v1026
    %v3001 = vmul.f32 %v1029, %v1029
    %v3002 = vmul.f32 %v1034, %v1034
    %v3003 = vmul.f32 %v1037, %v1037
    %3004 = vadd.xlane.f32.xlu0 %v3000
    %v3005 = vpop.xlane.xlu0 %3004
    %3006 = vadd.xlane.f32.xlu0 %v3001
    %v3007 = vpop.xlane.xlu0 %3006
    %3008 = vadd.xlane.f32.xlu0 %v3002
    %v3009 = vpop.xlane.xlu0 %3008
    %3010 = vadd.xlane.f32.xlu0 %v3003
    %v3011 = vpop.xlane.xlu0 %3010
    %s3012 = sld [smem:[#allocation2 + $0x1]]
    %v3013 = vmax.f32 %v3005, 1e-24
    %v3014 = vmax.f32 %v3007, 1e-24
    %v3015 = vmax.f32 %v3009, 1e-24
    %v3016 = vmax.f32 %v3011, 1e-24
    %v3017 = vrsqrt.pop %v3013
    %v3018 = vrsqrt.pop %v3014
    %v3019 = vrsqrt.pop %v3015
    %v3020 = vrsqrt.pop %v3016
    %v3021 = vstv %s3012
    %v3022 = vmul.f32 %v3021, %v3017
    %v3023 = vmul.f32 %v3021, %v3018
    %v3024 = vmul.f32 %v3021, %v3019
    %v3025 = vmul.f32 %v3021, %v3020
    %v3026 = vmul.f32 %v1026, %v3022
    %v3027 = vmul.f32 %v1029, %v3023
    %v3028 = vmul.f32 %v1034, %v3024
    %v3029 = vmul.f32 %v1037, %v3025
    %s3030 = scalar_lea.vmem %s24, 32
    %3031 = vst [vmem:[%s3030] sm:$0xff] %v3026
    %3032 = vst [vmem:[%s3030 + $0x8] sm:$0xff] %v3027
    %3033 = vst [vmem:[%s3030 + $0x10] sm:$0xff] %v3028
    %3034 = vst [vmem:[%s3030 + $0x18] sm:$0xff] %v3029
    %v3035 = vmul.f32 %v1843, %v1843
    %v3036 = vmul.f32 %v1846, %v1846
    %v3037 = vmul.f32 %v1851, %v1851
    %v3038 = vmul.f32 %v1854, %v1854
    %3039 = vadd.xlane.f32.xlu0 %v3035
    %v3040 = vpop.xlane.xlu0 %3039
    %3041 = vadd.xlane.f32.xlu0 %v3036
    %v3042 = vpop.xlane.xlu0 %3041
    %3043 = vadd.xlane.f32.xlu0 %v3037
    %v3044 = vpop.xlane.xlu0 %3043
    %3045 = vadd.xlane.f32.xlu0 %v3038
    %v3046 = vpop.xlane.xlu0 %3045
    %s3047 = sld [smem:[#allocation2 + $0x2]]
    %v3048 = vmax.f32 %v3040, 1e-24
    %v3049 = vmax.f32 %v3042, 1e-24
    %v3050 = vmax.f32 %v3044, 1e-24
    %v3051 = vmax.f32 %v3046, 1e-24
    %v3052 = vrsqrt.pop %v3048
    %v3053 = vrsqrt.pop %v3049
    %v3054 = vrsqrt.pop %v3050
    %v3055 = vrsqrt.pop %v3051
    %v3056 = vstv %s3047
    %v3057 = vmul.f32 %v3056, %v3052
    %v3058 = vmul.f32 %v3056, %v3053
    %v3059 = vmul.f32 %v3056, %v3054
    %v3060 = vmul.f32 %v3056, %v3055
    %v3061 = vmul.f32 %v1843, %v3057
    %v3062 = vmul.f32 %v1846, %v3058
    %v3063 = vmul.f32 %v1851, %v3059
    %v3064 = vmul.f32 %v1854, %v3060
    %s3065 = scalar_lea.vmem %s24, 64
    %3066 = vst [vmem:[%s3065] sm:$0xff] %v3061
    %3067 = vst [vmem:[%s3065 + $0x8] sm:$0xff] %v3062
    %3068 = vst [vmem:[%s3065 + $0x10] sm:$0xff] %v3063
    %3069 = vst [vmem:[%s3065 + $0x18] sm:$0xff] %v3064
    %v3070 = vmul.f32 %v2962, %v2962
    %v3071 = vmul.f32 %v2963, %v2963
    %v3072 = vmul.f32 %v2964, %v2964
    %v3073 = vmul.f32 %v2965, %v2965
    %3074 = vadd.xlane.f32.xlu0 %v3070
    %v3075 = vpop.xlane.xlu0 %3074
    %3076 = vadd.xlane.f32.xlu0 %v3071
    %v3077 = vpop.xlane.xlu0 %3076
    %3078 = vadd.xlane.f32.xlu0 %v3072
    %v3079 = vpop.xlane.xlu0 %3078
    %3080 = vadd.xlane.f32.xlu0 %v3073
    %v3081 = vpop.xlane.xlu0 %3080
    %s3082 = sld [smem:[#allocation2 + $0x3]]
    %v3083 = vmax.f32 %v3075, 1e-24
    %v3084 = vmax.f32 %v3077, 1e-24
    %v3085 = vmax.f32 %v3079, 1e-24
    %v3086 = vmax.f32 %v3081, 1e-24
    %v3087 = vrsqrt.pop %v3083
    %v3088 = vrsqrt.pop %v3084
    %v3089 = vrsqrt.pop %v3085
    %v3090 = vrsqrt.pop %v3086
    %v3091 = vstv %s3082
    %v3092 = vmul.f32 %v3091, %v3087
    %v3093 = vmul.f32 %v3091, %v3088
    %v3094 = vmul.f32 %v3091, %v3089
    %v3095 = vmul.f32 %v3091, %v3090
    %v3096 = vmul.f32 %v2962, %v3092
    %v3097 = vmul.f32 %v2963, %v3093
    %v3098 = vmul.f32 %v2964, %v3094
    %v3099 = vmul.f32 %v2965, %v3095
    %s3100 = scalar_lea.vmem %s24, 96
    %3101 = vst [vmem:[%s3100] sm:$0xff] %v3096
    %3102 = vst [vmem:[%s3100 + $0x8] sm:$0xff] %v3097
    %3103 = vst [vmem:[%s3100 + $0x10] sm:$0xff] %v3098
    %3104 = vst [vmem:[%s3100 + $0x18] sm:$0xff] %v3099
    %v3105 = vmul.f32 %v2186, %v2186
    %v3106 = vmul.f32 %v2189, %v2189
    %v3107 = vmul.f32 %v2194, %v2194
    %v3108 = vmul.f32 %v2197, %v2197
    %3109 = vadd.xlane.f32.xlu0 %v3105
    %v3110 = vpop.xlane.xlu0 %3109
    %3111 = vadd.xlane.f32.xlu0 %v3106
    %v3112 = vpop.xlane.xlu0 %3111
    %3113 = vadd.xlane.f32.xlu0 %v3107
    %v3114 = vpop.xlane.xlu0 %3113
    %3115 = vadd.xlane.f32.xlu0 %v3108
    %v3116 = vpop.xlane.xlu0 %3115
    %s3117 = sld [smem:[#allocation2 + $0x4]]
    %v3118 = vmax.f32 %v3110, 1e-24
    %v3119 = vmax.f32 %v3112, 1e-24
    %v3120 = vmax.f32 %v3114, 1e-24
    %v3121 = vmax.f32 %v3116, 1e-24
    %v3122 = vrsqrt.pop %v3118
    %v3123 = vrsqrt.pop %v3119
    %v3124 = vrsqrt.pop %v3120
    %v3125 = vrsqrt.pop %v3121
    %v3126 = vstv %s3117
    %v3127 = vmul.f32 %v3126, %v3122
    %v3128 = vmul.f32 %v3126, %v3123
    %v3129 = vmul.f32 %v3126, %v3124
    %v3130 = vmul.f32 %v3126, %v3125
    %v3131 = vmul.f32 %v2186, %v3127
    %v3132 = vmul.f32 %v2189, %v3128
    %v3133 = vmul.f32 %v2194, %v3129
    %v3134 = vmul.f32 %v2197, %v3130
    %s3135 = scalar_lea.vmem %s24, 128
    %3136 = vst [vmem:[%s3135] sm:$0xff] %v3131
    %3137 = vst [vmem:[%s3135 + $0x8] sm:$0xff] %v3132
    %3138 = vst [vmem:[%s3135 + $0x10] sm:$0xff] %v3133
    %3139 = vst [vmem:[%s3135 + $0x18] sm:$0xff] %v3134
    %v3140 = vmul.f32 %v2300, %v2300
    %v3141 = vmul.f32 %v2303, %v2303
    %v3142 = vmul.f32 %v2308, %v2308
    %v3143 = vmul.f32 %v2311, %v2311
    %3144 = vadd.xlane.f32.xlu0 %v3140
    %v3145 = vpop.xlane.xlu0 %3144
    %3146 = vadd.xlane.f32.xlu0 %v3141
    %v3147 = vpop.xlane.xlu0 %3146
    %3148 = vadd.xlane.f32.xlu0 %v3142
    %v3149 = vpop.xlane.xlu0 %3148
    %3150 = vadd.xlane.f32.xlu0 %v3143
    %v3151 = vpop.xlane.xlu0 %3150
    %s3152 = sld [smem:[#allocation2 + $0x5]]
    %v3153 = vmax.f32 %v3145, 1e-24
    %v3154 = vmax.f32 %v3147, 1e-24
    %v3155 = vmax.f32 %v3149, 1e-24
    %v3156 = vmax.f32 %v3151, 1e-24
    %v3157 = vrsqrt.pop %v3153
    %v3158 = vrsqrt.pop %v3154
    %v3159 = vrsqrt.pop %v3155
    %v3160 = vrsqrt.pop %v3156
    %v3161 = vstv %s3152
    %v3162 = vmul.f32 %v3161, %v3157
    %v3163 = vmul.f32 %v3161, %v3158
    %v3164 = vmul.f32 %v3161, %v3159
    %v3165 = vmul.f32 %v3161, %v3160
    %v3166 = vmul.f32 %v2300, %v3162
    %v3167 = vmul.f32 %v2303, %v3163
    %v3168 = vmul.f32 %v2308, %v3164
    %v3169 = vmul.f32 %v2311, %v3165
    %s3170 = scalar_lea.vmem %s24, 160
    %3171 = vst [vmem:[%s3170] sm:$0xff] %v3166
    %3172 = vst [vmem:[%s3170 + $0x8] sm:$0xff] %v3167
    %3173 = vst [vmem:[%s3170 + $0x10] sm:$0xff] %v3168
    %3174 = vst [vmem:[%s3170 + $0x18] sm:$0xff] %v3169
    %v3175 = vmul.f32 %v2414, %v2414
    %v3176 = vmul.f32 %v2417, %v2417
    %v3177 = vmul.f32 %v2422, %v2422
    %v3178 = vmul.f32 %v2425, %v2425
    %3179 = vadd.xlane.f32.xlu0 %v3175
    %v3180 = vpop.xlane.xlu0 %3179
    %3181 = vadd.xlane.f32.xlu0 %v3176
    %v3182 = vpop.xlane.xlu0 %3181
    %3183 = vadd.xlane.f32.xlu0 %v3177
    %v3184 = vpop.xlane.xlu0 %3183
    %3185 = vadd.xlane.f32.xlu0 %v3178
    %v3186 = vpop.xlane.xlu0 %3185
    %s3187 = sld [smem:[#allocation2 + $0x6]]
    %v3188 = vmax.f32 %v3180, 1e-24
    %v3189 = vmax.f32 %v3182, 1e-24
    %v3190 = vmax.f32 %v3184, 1e-24
    %v3191 = vmax.f32 %v3186, 1e-24
    %v3192 = vrsqrt.pop %v3188
    %v3193 = vrsqrt.pop %v3189
    %v3194 = vrsqrt.pop %v3190
    %v3195 = vrsqrt.pop %v3191
    %v3196 = vstv %s3187
    %v3197 = vmul.f32 %v3196, %v3192
    %v3198 = vmul.f32 %v3196, %v3193
    %v3199 = vmul.f32 %v3196, %v3194
    %v3200 = vmul.f32 %v3196, %v3195
    %v3201 = vmul.f32 %v2414, %v3197
    %v3202 = vmul.f32 %v2417, %v3198
    %v3203 = vmul.f32 %v2422, %v3199
    %v3204 = vmul.f32 %v2425, %v3200
    %s3205 = scalar_lea.vmem %s24, 192
    %3206 = vst [vmem:[%s3205] sm:$0xff] %v3201
    %3207 = vst [vmem:[%s3205 + $0x8] sm:$0xff] %v3202
    %3208 = vst [vmem:[%s3205 + $0x10] sm:$0xff] %v3203
    %3209 = vst [vmem:[%s3205 + $0x18] sm:$0xff] %v3204
    %v3210 = vmul.f32 %v2528, %v2528
    %v3211 = vmul.f32 %v2531, %v2531
    %v3212 = vmul.f32 %v2536, %v2536
    %v3213 = vmul.f32 %v2539, %v2539
    %3214 = vadd.xlane.f32.xlu0 %v3210
    %v3215 = vpop.xlane.xlu0 %3214
    %3216 = vadd.xlane.f32.xlu0 %v3211
    %v3217 = vpop.xlane.xlu0 %3216
    %3218 = vadd.xlane.f32.xlu0 %v3212
    %v3219 = vpop.xlane.xlu0 %3218
    %3220 = vadd.xlane.f32.xlu0 %v3213
    %v3221 = vpop.xlane.xlu0 %3220
    %s3222 = sld [smem:[#allocation2 + $0x7]]
    %v3223 = vmax.f32 %v3215, 1e-24
    %v3224 = vmax.f32 %v3217, 1e-24
    %v3225 = vmax.f32 %v3219, 1e-24
    %v3226 = vmax.f32 %v3221, 1e-24
    %v3227 = vrsqrt.pop %v3223
    %v3228 = vrsqrt.pop %v3224
    %v3229 = vrsqrt.pop %v3225
    %v3230 = vrsqrt.pop %v3226
    %v3231 = vstv %s3222
    %v3232 = vmul.f32 %v3231, %v3227
    %v3233 = vmul.f32 %v3231, %v3228
    %v3234 = vmul.f32 %v3231, %v3229
    %v3235 = vmul.f32 %v3231, %v3230
    %v3236 = vmul.f32 %v2528, %v3232
    %v3237 = vmul.f32 %v2531, %v3233
    %v3238 = vmul.f32 %v2536, %v3234
    %v3239 = vmul.f32 %v2539, %v3235
    %s3240 = scalar_lea.vmem %s24, 224
    %3241 = vst [vmem:[%s3240] sm:$0xff] %v3236
    %3242 = vst [vmem:[%s3240 + $0x8] sm:$0xff] %v3237
    %3243 = vst [vmem:[%s3240 + $0x10] sm:$0xff] %v3238
    %3244 = vst [vmem:[%s3240 + $0x18] sm:$0xff] %v3239
    // Predicated region
    $region102: #{all_multimodal_encoder_forward.1} parent=1 // pred_check
      _
    $region103: #{all_multimodal_encoder_forward.1} parent=1 // pred_check_branch
      %3246 = sbr.rel (0) target = $region105
    $region104: #{all_multimodal_encoder_forward.1} parent=1 // pred_region
      _
    $region105: #{all_multimodal_encoder_forward.1} parent=1 // pred_fallthru
      _
    // Predicated region
    $region106: #{all_multimodal_encoder_forward.1} parent=1 // pred_check
      _
    $region107: #{all_multimodal_encoder_forward.1} parent=1 // pred_check_branch
      %3248 = sbr.rel (0) target = $region109
    $region108: #{all_multimodal_encoder_forward.1} parent=1 // pred_region
      %s3250 = ssub.s32 512, 512
      %3251 = vsyncadd [#allocation4], %s3250
      %s3252 = sshll.u32 [#allocation9], 4
      %s3253 = int_to_ptr.vmem [resolvable:$true] %s3252
      %3258 = dma.vmem_to_hbm [thread:$0]  %s3253, 512, %s23, [#allocation4], 128, 128, 8
    $region109: #{all_multimodal_encoder_forward.1} parent=1 // pred_fallthru
      _
    // Predicated region
    $region110: #{all_multimodal_encoder_forward.1} parent=1 // pred_check
      _
    $region111: #{all_multimodal_encoder_forward.1} parent=1 // pred_check_branch
      %3260 = sbr.rel (0) target = $region113
    $region112: #{all_multimodal_encoder_forward.1} parent=1 // pred_region
      _
    $region113: #{all_multimodal_encoder_forward.1} parent=1 // pred_fallthru
      _
    // Predicated region
    $region114: #{all_multimodal_encoder_forward.1} parent=1 // pred_check
      _
    $region115: #{all_multimodal_encoder_forward.1} parent=1 // pred_check_branch
      %3262 = sbr.rel (0) target = $region117
    $region116: #{all_multimodal_encoder_forward.1} parent=1 // pred_region
      _
    $region117: #{all_multimodal_encoder_forward.1} parent=1 // pred_fallthru
      _
    // Predicated region
    $region118: #{all_multimodal_encoder_forward.1} parent=1 // pred_check
      _
    $region119: #{all_multimodal_encoder_forward.1} parent=1 // pred_check_branch
      %3264 = sbr.rel (0) target = $region121
    $region120: #{all_multimodal_encoder_forward.1} parent=1 // pred_region
      %3265 = dma.done [#allocation4], 512
    $region121: #{all_multimodal_encoder_forward.1} parent=1 // pred_fallthru
      _
    // Predicated region
    $region122: #{all_multimodal_encoder_forward.1} parent=1 // pred_check
      _
    $region123: #{all_multimodal_encoder_forward.1} parent=1 // pred_check_branch
      %3267 = sbr.rel (0) target = $region125
    $region124: #{all_multimodal_encoder_forward.1} parent=1 // pred_region
      _
    $region125: #{all_multimodal_encoder_forward.1} parent=1 // pred_fallthru
      _
    %3268 = vsyncpa [#allocation3], 1
    %3269 = vsyncpa [#allocation8], 1
    %3270 = vsyncpa [#allocation4], 1
    %3271 = vsyncpa [#allocation5], 1

</llo_original>
